<compile_context>
chip_gen: v5e
topology: v5e:2x2
jax: 0.10.0
libtpu: 0.0.40
codegen_flags: <defaults>
</compile_context>

<pallas_src>
import functools
import math

import jax
import jax.numpy as jnp
from jax.experimental import pallas as pl
from jax.experimental.pallas import tpu as pltpu

LN_EPS = 1e-5

# Row layout of the packed per-layer dim-sized vectors  (depth, N_VEC_D, dim).
A_LNW, A_LNB, A_BO = 0, 1, 2                    # self-attention (on kv)
F1_LNW, F1_LNB, F1_B2 = 3, 4, 5                 # ff_1 (on kv)
C_LNQW, C_LNQB, C_LNKW, C_LNKB, C_BO = 6, 7, 8, 9, 10   # cross-attention
F_LNW, F_LNB, F_B2 = 11, 12, 13                 # ff (on q)
N_VEC_D = 14
# Row layout of the packed per-layer mlp-sized vectors  (depth, N_VEC_M, mlp).
F1_B1, F_B1 = 0, 1
N_VEC_M = 2


# ----------------------------- in-kernel helpers -----------------------------

def _layernorm(x, w, b):
    mu = jnp.mean(x, axis=-1, keepdims=True)
    var = jnp.mean((x - mu) ** 2, axis=-1, keepdims=True)
    return (x - mu) * jax.lax.rsqrt(var + LN_EPS) * w + b


def _erf(x):
    # Abramowitz & Stegun 7.1.26 rational approximation (|err| < 1.5e-7).
    # Avoids relying on a lax.erf lowering inside Mosaic; uses only exp/mul/add.
    a = jnp.abs(x)
    t = 1.0 / (1.0 + 0.3275911 * a)
    poly = t * (0.254829592 + t * (-0.284496736 + t * (1.421413741
               + t * (-1.453152027 + t * 1.061405429))))
    e = 1.0 - poly * jnp.exp(-(a * a))
    return jnp.where(x < 0.0, -e, e)


def _gelu(x):
    # erf-based GELU (matches torch.nn.GELU default up to ~1e-7 from _erf).
    return 0.5 * x * (1.0 + _erf(x * (1.0 / math.sqrt(2.0))))


def _softmax_lastdim(s):
    m = jnp.max(s, axis=-1, keepdims=True)
    e = jnp.exp(s - m)
    denom = jnp.sum(e, axis=-1, keepdims=True)
    return e * pl.reciprocal(denom, approx=True)   # EUP slot, frees VALU


def _attn_core(q2, k2, v2, w_o, b_o, *, bt, m, n, heads, dim_head):
    """Attention core on already-projected streams.

    q2: (bt*m, H*dh) f32, k2/v2: (bt*n, H*dh) f32 (scale already folded into Q).
    w_o: (H*dh, D) bf16, b_o: (1, D) f32.  Returns (bt*m, D) f32.
    Scores / softmax / PV are inherently per-(batch, head); the head loop is a
    static unroll over lane slices of the fused projections.
    """
    hd = heads * dim_head
    q3 = q2.reshape(bt, m, hd).astype(jnp.bfloat16)
    k3 = k2.reshape(bt, n, hd).astype(jnp.bfloat16)
    v3 = v2.reshape(bt, n, hd).astype(jnp.bfloat16)
    outs = []
    for h in range(heads):
        sl = slice(h * dim_head, (h + 1) * dim_head)
        s = jnp.einsum("bmk,bnk->bmn", q3[..., sl], k3[..., sl],
                       preferred_element_type=jnp.float32)
        p = _softmax_lastdim(s)
        outs.append(jnp.einsum("bmn,bnk->bmk", p.astype(jnp.bfloat16), v3[..., sl],
                               preferred_element_type=jnp.float32))
    # concat over heads + single output projection  ==  concat + Wo in PyTorch.
    o = jnp.concatenate(outs, axis=-1).reshape(bt * m, hd)
    y = jnp.dot(o.astype(w_o.dtype), w_o, preferred_element_type=jnp.float32)
    return y + b_o


def _ffn(x, lnw, lnb, w1, b1, w2, b2):
    xn = _layernorm(x, lnw, lnb).astype(w1.dtype)
    h = jnp.dot(xn, w1, preferred_element_type=jnp.float32) + b1
    h = _gelu(h).astype(w2.dtype)
    return jnp.dot(h, w2, preferred_element_type=jnp.float32) + b2


# --------------------------------- kernel ------------------------------------

def _cross_transformer_kernel(
        # activations / positional embedding / packed per-layer vectors
        q_ref, kv_ref, pos_ref, vd_ref, vm_ref,
        # per-layer matmul weights (bf16, streamed per depth step)
        a_wqkv, a_wo, f1_w1, f1_w2,
        c_wq, c_wkv, c_wo, f_w1, f_w2,
        # output
        o_ref,
        # VMEM scratch (persists across the depth grid axis)
        q_sc, kv_sc,
        *, heads, dim_head):
    layer = pl.program_id(1)
    bt, m, d = q_sc.shape
    _, n, _ = kv_sc.shape
    hd = heads * dim_head

    # First layer for this batch tile: bring activations into VMEM scratch.
    @pl.when(layer == 0)
    def _init():
        q_sc[...] = q_ref[...].astype(jnp.float32)
        kv_sc[...] = (kv_ref[...] + pos_ref[...]).astype(jnp.float32)  # + pos_embedding

    vd = vd_ref[0]                       # (N_VEC_D, dim)  f32
    vm = vm_ref[0]                       # (N_VEC_M, mlp)  f32
    row = lambda t, i: t[i:i + 1, :]

    # Fold (batch_tile * seq) into the row dim of all LN / projection / FFN matmuls.
    q = q_sc[...].reshape(bt * m, d)
    kv = kv_sc[...].reshape(bt * n, d)

    # kv = Attention(LN(kv)) + kv  -- fused QKV projection (one matmul).
    kvn = _layernorm(kv, row(vd, A_LNW), row(vd, A_LNB)).astype(a_wqkv.dtype)
    qkv = jnp.dot(kvn, a_wqkv[0], preferred_element_type=jnp.float32)
    kv = kv + _attn_core(qkv[:, 0:hd], qkv[:, hd:2 * hd], qkv[:, 2 * hd:3 * hd],
                         a_wo[0], row(vd, A_BO),
                         bt=bt, m=n, n=n, heads=heads, dim_head=dim_head)

    # kv = FeedForward(LN(kv)) + kv   (ff_1 in the PyTorch module)
    kv = kv + _ffn(kv, row(vd, F1_LNW), row(vd, F1_LNB),
                   f1_w1[0], row(vm, F1_B1), f1_w2[0], row(vd, F1_B2))

    # q = CrossAttention(LN(q), LN(kv)) + q  -- fused Q and fused KV projections.
    qn = _layernorm(q, row(vd, C_LNQW), row(vd, C_LNQB)).astype(c_wq.dtype)
    kvn2 = _layernorm(kv, row(vd, C_LNKW), row(vd, C_LNKB)).astype(c_wkv.dtype)
    cq = jnp.dot(qn, c_wq[0], preferred_element_type=jnp.float32)
    ckv = jnp.dot(kvn2, c_wkv[0], preferred_element_type=jnp.float32)
    q = q + _attn_core(cq, ckv[:, 0:hd], ckv[:, hd:2 * hd],
                       c_wo[0], row(vd, C_BO),
                       bt=bt, m=m, n=n, heads=heads, dim_head=dim_head)

    # q = FeedForward(LN(q)) + q   (ff in the PyTorch module)
    q = q + _ffn(q, row(vd, F_LNW), row(vd, F_LNB),
                 f_w1[0], row(vm, F_B1), f_w2[0], row(vd, F_B2))

    q_sc[...] = q.reshape(bt, m, d)
    kv_sc[...] = kv.reshape(bt, n, d)

    # Last layer: write q back (single HBM store per batch tile).
    @pl.when(layer == pl.num_programs(1) - 1)
    def _store():
        o_ref[...] = q.reshape(bt, m, d).astype(o_ref.dtype)


# ------------------------------ pallas_call glue ------------------------------

def cross_transformer_forward(q_1, kv, params, heads, dim_head, *,
                              batch_tile=None,
                              vmem_limit_bytes=64 * 1024 * 1024):
    B, M, D = q_1.shape
    _, N, _ = kv.shape
    depth = params["vec_d"].shape[0]
    bt = B if batch_tile is None else batch_tile
    assert B % bt == 0, "batch must divide evenly into batch tiles"

    kern = functools.partial(_cross_transformer_kernel,
                             heads=heads, dim_head=dim_head)

    def act_spec(rows):
        return pl.BlockSpec((bt, rows, D), lambda b, l: (b, 0, 0))

    def layer_spec(arr):
        nd = arr.ndim - 1
        return pl.BlockSpec((1,) + arr.shape[1:],
                            lambda b, l, _nd=nd: (l,) + (0,) * _nd)

    weight_names = ("a_wqkv", "a_wo", "f1_w1", "f1_w2",
                    "c_wq", "c_wkv", "c_wo", "f_w1", "f_w2")
    weights = [params[k] for k in weight_names]

    in_specs = [act_spec(M), act_spec(N),
                pl.BlockSpec((1, N, D), lambda b, l: (0, 0, 0)),   # pos_embedding
                layer_spec(params["vec_d"]), layer_spec(params["vec_m"])]
    in_specs += [layer_spec(w) for w in weights]

    return pl.pallas_call(
        kern,
        out_shape=jax.ShapeDtypeStruct((B, M, D), q_1.dtype),
        grid_spec=pltpu.PrefetchScalarGridSpec(
            num_scalar_prefetch=0,
            grid=(B // bt, depth),                 # batch tiles outer, depth inner
            in_specs=in_specs,
            out_specs=act_spec(M),
            scratch_shapes=[pltpu.VMEM((bt, M, D), jnp.float32),
                            pltpu.VMEM((bt, N, D), jnp.float32)]),
        compiler_params=pltpu.CompilerParams(
            dimension_semantics=("parallel", "arbitrary"),
            vmem_limit_bytes=vmem_limit_bytes),
    )(q_1, kv, params["pos"], params["vec_d"], params["vec_m"], *weights)


# ------------------------------ parameter setup -------------------------------

def init_params(key, words, dim, depth, heads, dim_head, mlp_dim,
                *, weight_dtype=jnp.bfloat16):
    inner = heads * dim_head
    scale = dim_head ** -0.5
    ks = iter(jax.random.split(key, 32))

    def rand(shape):
        return jax.random.normal(next(ks), shape, jnp.float32) * 0.02

    # dim_head**-0.5 folded into the Q-projection weights (review: drop the
    # per-layer score-tensor multiply; algebraically identical).
    a_wq, a_wk, a_wv = rand((depth, dim, inner)) * scale, rand((depth, dim, inner)), rand((depth, dim, inner))
    c_wq, c_wk, c_wv = rand((depth, dim, inner)) * scale, rand((depth, dim, inner)), rand((depth, dim, inner))

    # Packed small per-layer vectors: LayerNorm weights = 1, all biases = 0.
    vec_d = jnp.zeros((depth, N_VEC_D, dim), jnp.float32)
    vec_d = vec_d.at[:, [A_LNW, F1_LNW, C_LNQW, C_LNKW, F_LNW], :].set(1.0)
    vec_m = jnp.zeros((depth, N_VEC_M, mlp_dim), jnp.float32)

    return {
        "pos": jax.random.normal(next(ks), (1, words, dim), jnp.float32),
        "vec_d": vec_d,
        "vec_m": vec_m,
        # self-attention over kv: fused (D, 3*H*dh) QKV weight
        "a_wqkv": jnp.concatenate([a_wq, a_wk, a_wv], axis=-1).astype(weight_dtype),
        "a_wo": rand((depth, inner, dim)).astype(weight_dtype),
        # ff_1 over kv
        "f1_w1": rand((depth, dim, mlp_dim)).astype(weight_dtype),
        "f1_w2": rand((depth, mlp_dim, dim)).astype(weight_dtype),
        # cross-attention q <- kv: fused (D, H*dh) Q and (D, 2*H*dh) KV weights
        "c_wq": c_wq.astype(weight_dtype),
        "c_wkv": jnp.concatenate([c_wk, c_wv], axis=-1).astype(weight_dtype),
        "c_wo": rand((depth, inner, dim)).astype(weight_dtype),
        # ff over q
        "f_w1": rand((depth, dim, mlp_dim)).astype(weight_dtype),
        "f_w2": rand((depth, mlp_dim, dim)).astype(weight_dtype),
    }


# ----------------------------------- main --------------------------------------

if __name__ == "__main__":
    B = 2
    WORDS = 8          # kv sequence length (== words so pos_embedding matches)
    M = 8              # q_1 sequence length
    DIM = 32
    DEPTH = 2
    HEADS = 4
    DIM_HEAD = 8
    MLP_DIM = 64

    root = jax.random.PRNGKey(0)
    k_q, k_kv, k_p = jax.random.split(root, 3)
    q_1 = jax.random.normal(k_q, (B, M, DIM), jnp.float32)
    kv = jax.random.normal(k_kv, (B, WORDS, DIM), jnp.float32)
    params = init_params(k_p, WORDS, DIM, DEPTH, HEADS, DIM_HEAD, MLP_DIM)

    fwd = jax.jit(lambda q, kvx, p: cross_transformer_forward(q, kvx, p,
                                                              HEADS, DIM_HEAD))
    out = jax.block_until_ready(fwd(q_1, kv, params))
    assert out.shape == (B, M, DIM) and out.dtype == jnp.float32
    assert bool(jnp.all(jnp.isfinite(out)))
    print("KERNEL_OK")
</pallas_src>

<mosaic_0001>
module attributes {stable_mosaic.version = 11 : i64} {
  func.func @_cross_transformer_kernel(%arg0: i32, %arg1: i32, %arg2: memref<2x8x32xf32, #tpu.memory_space<vmem>>, %arg3: memref<2x8x32xf32, #tpu.memory_space<vmem>>, %arg4: memref<1x8x32xf32, #tpu.memory_space<vmem>>, %arg5: memref<1x14x32xf32, #tpu.memory_space<vmem>>, %arg6: memref<1x2x64xf32, #tpu.memory_space<vmem>>, %arg7: memref<1x32x96xbf16, #tpu.memory_space<vmem>>, %arg8: memref<1x32x32xbf16, #tpu.memory_space<vmem>>, %arg9: memref<1x32x64xbf16, #tpu.memory_space<vmem>>, %arg10: memref<1x64x32xbf16, #tpu.memory_space<vmem>>, %arg11: memref<1x32x32xbf16, #tpu.memory_space<vmem>>, %arg12: memref<1x32x64xbf16, #tpu.memory_space<vmem>>, %arg13: memref<1x32x32xbf16, #tpu.memory_space<vmem>>, %arg14: memref<1x32x64xbf16, #tpu.memory_space<vmem>>, %arg15: memref<1x64x32xbf16, #tpu.memory_space<vmem>>, %arg16: memref<2x8x32xf32, #tpu.memory_space<vmem>>, %arg17: memref<2x8x32xf32, #tpu.memory_space<vmem>>, %arg18: memref<2x8x32xf32, #tpu.memory_space<vmem>>) attributes {dimension_semantics = [#tpu.dimension_semantics<parallel>, #tpu.dimension_semantics<arbitrary>], iteration_bounds = array<i64: 1, 2>, scalar_prefetch = 0 : i64, scratch_operands = 2 : i64, tpu.core_type = #tpu.core_type<tc>, window_params = [{transform_indices = @transform_0, window_bounds = array<i64: 2, 8, 32>}, {transform_indices = @transform_1, window_bounds = array<i64: 2, 8, 32>}, {pipeline_mode = #tpu.pipeline_mode<synchronous>, transform_indices = @transform_2, window_bounds = array<i64: 1, 8, 32>}, {transform_indices = @transform_3, window_bounds = array<i64: 1, 14, 32>}, {transform_indices = @transform_4, window_bounds = array<i64: 1, 2, 64>}, {transform_indices = @transform_5, window_bounds = array<i64: 1, 32, 96>}, {transform_indices = @transform_6, window_bounds = array<i64: 1, 32, 32>}, {transform_indices = @transform_7, window_bounds = array<i64: 1, 32, 64>}, {transform_indices = @transform_8, window_bounds = array<i64: 1, 64, 32>}, {transform_indices = @transform_9, window_bounds = array<i64: 1, 32, 32>}, {transform_indices = @transform_10, window_bounds = array<i64: 1, 32, 64>}, {transform_indices = @transform_11, window_bounds = array<i64: 1, 32, 32>}, {transform_indices = @transform_12, window_bounds = array<i64: 1, 32, 64>}, {transform_indices = @transform_13, window_bounds = array<i64: 1, 64, 32>}, {transform_indices = @transform_14, window_bounds = array<i64: 2, 8, 32>}]} {
    %c0_i32 = arith.constant 0 : i32
    %0 = arith.cmpi eq, %arg1, %c0_i32 : i32
    %1 = arith.extui %0 : i1 to i32
    %c0_i32_0 = arith.constant 0 : i32
    %2 = arith.cmpi ne, %1, %c0_i32_0 : i32
    scf.if %2 {
      %c0_141 = arith.constant 0 : index
      %c0_142 = arith.constant 0 : index
      %c0_143 = arith.constant 0 : index
      %425 = vector.load %arg2[%c0_141, %c0_142, %c0_143] : memref<2x8x32xf32, #tpu.memory_space<vmem>>, vector<2x8x32xf32>
      %c0_144 = arith.constant 0 : index
      %c0_145 = arith.constant 0 : index
      %c0_146 = arith.constant 0 : index
      %426 = vector.load %arg17[%c0_144, %c0_145, %c0_146] : memref<2x8x32xf32, #tpu.memory_space<vmem>>, vector<2x8x32xf32>
      tpu.vector_store %arg17[%c0_144, %c0_145, %c0_146], %425 {strides = array<i32>} : memref<2x8x32xf32, #tpu.memory_space<vmem>>, vector<2x8x32xf32>,
      %c0_147 = arith.constant 0 : index
      %c0_148 = arith.constant 0 : index
      %c0_149 = arith.constant 0 : index
      %427 = vector.load %arg3[%c0_147, %c0_148, %c0_149] : memref<2x8x32xf32, #tpu.memory_space<vmem>>, vector<2x8x32xf32>
      %c0_150 = arith.constant 0 : index
      %c0_151 = arith.constant 0 : index
      %c0_152 = arith.constant 0 : index
      %428 = vector.load %arg4[%c0_150, %c0_151, %c0_152] : memref<1x8x32xf32, #tpu.memory_space<vmem>>, vector<1x8x32xf32>
      %429 = vector.broadcast %428 : vector<1x8x32xf32> to vector<2x8x32xf32>
      %430 = arith.addf %427, %429 : vector<2x8x32xf32>
      %c0_153 = arith.constant 0 : index
      %c0_154 = arith.constant 0 : index
      %c0_155 = arith.constant 0 : index
      %431 = vector.load %arg18[%c0_153, %c0_154, %c0_155] : memref<2x8x32xf32, #tpu.memory_space<vmem>>, vector<2x8x32xf32>
      tpu.vector_store %arg18[%c0_153, %c0_154, %c0_155], %430 {strides = array<i32>} : memref<2x8x32xf32, #tpu.memory_space<vmem>>, vector<2x8x32xf32>,
    } else {
    }
    %c0 = arith.constant 0 : index
    %c0_1 = arith.constant 0 : index
    %c0_2 = arith.constant 0 : index
    %3 = vector.load %arg5[%c0, %c0_1, %c0_2] : memref<1x14x32xf32, #tpu.memory_space<vmem>>, vector<1x14x32xf32>
    %4 = vector.shape_cast %3 : vector<1x14x32xf32> to vector<14x32xf32>
    %c0_3 = arith.constant 0 : index
    %c0_4 = arith.constant 0 : index
    %c0_5 = arith.constant 0 : index
    %5 = vector.load %arg6[%c0_3, %c0_4, %c0_5] : memref<1x2x64xf32, #tpu.memory_space<vmem>>, vector<1x2x64xf32>
    %6 = vector.shape_cast %5 : vector<1x2x64xf32> to vector<2x64xf32>
    %c0_6 = arith.constant 0 : index
    %c0_7 = arith.constant 0 : index
    %c0_8 = arith.constant 0 : index
    %7 = vector.load %arg17[%c0_6, %c0_7, %c0_8] : memref<2x8x32xf32, #tpu.memory_space<vmem>>, vector<2x8x32xf32>
    %8 = vector.shape_cast %7 : vector<2x8x32xf32> to vector<16x32xf32>
    %c0_9 = arith.constant 0 : index
    %c0_10 = arith.constant 0 : index
    %c0_11 = arith.constant 0 : index
    %9 = vector.load %arg18[%c0_9, %c0_10, %c0_11] : memref<2x8x32xf32, #tpu.memory_space<vmem>>, vector<2x8x32xf32>
    %10 = vector.shape_cast %9 : vector<2x8x32xf32> to vector<16x32xf32>
    %11 = vector.extract_strided_slice %4 {offsets = [0, 0], sizes = [1, 32], strides = [1, 1]} : vector<14x32xf32> to vector<1x32xf32>
    %12 = vector.extract_strided_slice %4 {offsets = [1, 0], sizes = [1, 32], strides = [1, 1]} : vector<14x32xf32> to vector<1x32xf32>
    %cst = arith.constant dense<0.000000e+00> : vector<16xf32>
    %13 = vector.multi_reduction <add>, %10, %cst [1] : vector<16x32xf32> to vector<16xf32>
    %14 = vector.shape_cast %13 : vector<16xf32> to vector<16x1xf32>
    %cst_12 = arith.constant 3.200000e+01 : f32
    %15 = vector.broadcast %cst_12 : f32 to vector<16x1xf32>
    %16 = arith.divf %14, %15 : vector<16x1xf32>
    %17 = vector.broadcast %16 : vector<16x1xf32> to vector<16x32xf32>
    %18 = arith.subf %10, %17 : vector<16x32xf32>
    %19 = arith.mulf %18, %18 : vector<16x32xf32>
    %cst_13 = arith.constant dense<0.000000e+00> : vector<16xf32>
    %20 = vector.multi_reduction <add>, %19, %cst_13 [1] : vector<16x32xf32> to vector<16xf32>
    %21 = vector.shape_cast %20 : vector<16xf32> to vector<16x1xf32>
    %cst_14 = arith.constant 3.200000e+01 : f32
    %22 = vector.broadcast %cst_14 : f32 to vector<16x1xf32>
    %23 = arith.divf %21, %22 : vector<16x1xf32>
    %24 = vector.broadcast %16 : vector<16x1xf32> to vector<16x32xf32>
    %25 = arith.subf %10, %24 : vector<16x32xf32>
    %cst_15 = arith.constant 9.99999974E-6 : f32
    %26 = vector.broadcast %cst_15 : f32 to vector<16x1xf32>
    %27 = arith.addf %23, %26 : vector<16x1xf32>
    %28 = math.rsqrt %27 : vector<16x1xf32>
    %29 = vector.broadcast %28 : vector<16x1xf32> to vector<16x32xf32>
    %30 = arith.mulf %25, %29 : vector<16x32xf32>
    %31 = vector.broadcast %11 : vector<1x32xf32> to vector<16x32xf32>
    %32 = arith.mulf %30, %31 : vector<16x32xf32>
    %33 = vector.broadcast %12 : vector<1x32xf32> to vector<16x32xf32>
    %34 = arith.addf %32, %33 : vector<16x32xf32>
    %35 = arith.truncf %34 : vector<16x32xf32> to vector<16x32xbf16>
    %c0_16 = arith.constant 0 : index
    %c0_17 = arith.constant 0 : index
    %c0_18 = arith.constant 0 : index
    %36 = vector.load %arg7[%c0_16, %c0_17, %c0_18] : memref<1x32x96xbf16, #tpu.memory_space<vmem>>, vector<1x32x96xbf16>
    %37 = vector.shape_cast %36 : vector<1x32x96xbf16> to vector<32x96xbf16>
    %cst_19 = arith.constant dense<0.000000e+00> : vector<16x96xf32>
    %38 = tpu.matmul %35, %37, %cst_19 {dimension_numbers = #tpu.dot_dimension_numbers<[1], [0], [0], [1], [0, 0, 1, 1], [], []>} : vector<16x32xbf16>, vector<32x96xbf16>, vector<16x96xf32> -> vector<16x96xf32>
    %39 = vector.extract_strided_slice %38 {offsets = [0, 0], sizes = [16, 32], strides = [1, 1]} : vector<16x96xf32> to vector<16x32xf32>
    %40 = vector.extract_strided_slice %38 {offsets = [0, 32], sizes = [16, 32], strides = [1, 1]} : vector<16x96xf32> to vector<16x32xf32>
    %41 = vector.extract_strided_slice %38 {offsets = [0, 64], sizes = [16, 32], strides = [1, 1]} : vector<16x96xf32> to vector<16x32xf32>
    %c0_20 = arith.constant 0 : index
    %c0_21 = arith.constant 0 : index
    %c0_22 = arith.constant 0 : index
    %42 = vector.load %arg8[%c0_20, %c0_21, %c0_22] : memref<1x32x32xbf16, #tpu.memory_space<vmem>>, vector<1x32x32xbf16>
    %43 = vector.shape_cast %42 : vector<1x32x32xbf16> to vector<32x32xbf16>
    %44 = vector.extract_strided_slice %4 {offsets = [2, 0], sizes = [1, 32], strides = [1, 1]} : vector<14x32xf32> to vector<1x32xf32>
    %45 = vector.shape_cast %39 : vector<16x32xf32> to vector<2x8x32xf32>
    %46 = arith.truncf %45 : vector<2x8x32xf32> to vector<2x8x32xbf16>
    %47 = vector.shape_cast %40 : vector<16x32xf32> to vector<2x8x32xf32>
    %48 = arith.truncf %47 : vector<2x8x32xf32> to vector<2x8x32xbf16>
    %49 = vector.shape_cast %41 : vector<16x32xf32> to vector<2x8x32xf32>
    %50 = arith.truncf %49 : vector<2x8x32xf32> to vector<2x8x32xbf16>
    %51 = vector.extract_strided_slice %46 {offsets = [0, 0, 0], sizes = [2, 8, 8], strides = [1, 1, 1]} : vector<2x8x32xbf16> to vector<2x8x8xbf16>
    %52 = vector.extract_strided_slice %48 {offsets = [0, 0, 0], sizes = [2, 8, 8], strides = [1, 1, 1]} : vector<2x8x32xbf16> to vector<2x8x8xbf16>
    "tpu.trace_start"() <{level = 10 : i32, message = "bmk,bnk->bmn"}> : () -> ()
    %cst_23 = arith.constant dense<0.000000e+00> : vector<2x8x8xf32>
    %53 = tpu.matmul %51, %52, %cst_23 {dimension_numbers = #tpu.dot_dimension_numbers<[2], [2], [1], [1], [0, 0, 0, 1, 1, 1], [0], [0]>} : vector<2x8x8xbf16>, vector<2x8x8xbf16>, vector<2x8x8xf32> -> vector<2x8x8xf32>
    "tpu.trace_stop"() : () -> ()
    %cst_24 = arith.constant dense<0xFF800000> : vector<2x8xf32>
    %54 = vector.multi_reduction <maximumf>, %53, %cst_24 [2] : vector<2x8x8xf32> to vector<2x8xf32>
    %55 = vector.shape_cast %54 : vector<2x8xf32> to vector<2x8x1xf32>
    %56 = vector.broadcast %55 : vector<2x8x1xf32> to vector<2x8x8xf32>
    %57 = arith.subf %53, %56 : vector<2x8x8xf32>
    %58 = math.exp %57 : vector<2x8x8xf32>
    %cst_25 = arith.constant dense<0.000000e+00> : vector<2x8xf32>
    %59 = vector.multi_reduction <add>, %58, %cst_25 [2] : vector<2x8x8xf32> to vector<2x8xf32>
    %60 = vector.shape_cast %59 : vector<2x8xf32> to vector<2x8x1xf32>
    %61 = tpu.reciprocal %60 {approx = true} : vector<2x8x1xf32> -> vector<2x8x1xf32>
    %62 = vector.broadcast %61 : vector<2x8x1xf32> to vector<2x8x8xf32>
    %63 = arith.mulf %58, %62 : vector<2x8x8xf32>
    %64 = arith.truncf %63 : vector<2x8x8xf32> to vector<2x8x8xbf16>
    %65 = vector.extract_strided_slice %50 {offsets = [0, 0, 0], sizes = [2, 8, 8], strides = [1, 1, 1]} : vector<2x8x32xbf16> to vector<2x8x8xbf16>
    "tpu.trace_start"() <{level = 10 : i32, message = "bmn,bnk->bmk"}> : () -> ()
    %cst_26 = arith.constant dense<0.000000e+00> : vector<2x8x8xf32>
    %66 = tpu.matmul %64, %65, %cst_26 {dimension_numbers = #tpu.dot_dimension_numbers<[2], [1], [1], [2], [0, 0, 0, 1, 1, 2], [0], [0]>} : vector<2x8x8xbf16>, vector<2x8x8xbf16>, vector<2x8x8xf32> -> vector<2x8x8xf32>
    "tpu.trace_stop"() : () -> ()
    %67 = vector.extract_strided_slice %46 {offsets = [0, 0, 8], sizes = [2, 8, 8], strides = [1, 1, 1]} : vector<2x8x32xbf16> to vector<2x8x8xbf16>
    %68 = vector.extract_strided_slice %48 {offsets = [0, 0, 8], sizes = [2, 8, 8], strides = [1, 1, 1]} : vector<2x8x32xbf16> to vector<2x8x8xbf16>
    "tpu.trace_start"() <{level = 10 : i32, message = "bmk,bnk->bmn"}> : () -> ()
    %cst_27 = arith.constant dense<0.000000e+00> : vector<2x8x8xf32>
    %69 = tpu.matmul %67, %68, %cst_27 {dimension_numbers = #tpu.dot_dimension_numbers<[2], [2], [1], [1], [0, 0, 0, 1, 1, 1], [0], [0]>} : vector<2x8x8xbf16>, vector<2x8x8xbf16>, vector<2x8x8xf32> -> vector<2x8x8xf32>
    "tpu.trace_stop"() : () -> ()
    %cst_28 = arith.constant dense<0xFF800000> : vector<2x8xf32>
    %70 = vector.multi_reduction <maximumf>, %69, %cst_28 [2] : vector<2x8x8xf32> to vector<2x8xf32>
    %71 = vector.shape_cast %70 : vector<2x8xf32> to vector<2x8x1xf32>
    %72 = vector.broadcast %71 : vector<2x8x1xf32> to vector<2x8x8xf32>
    %73 = arith.subf %69, %72 : vector<2x8x8xf32>
    %74 = math.exp %73 : vector<2x8x8xf32>
    %cst_29 = arith.constant dense<0.000000e+00> : vector<2x8xf32>
    %75 = vector.multi_reduction <add>, %74, %cst_29 [2] : vector<2x8x8xf32> to vector<2x8xf32>
    %76 = vector.shape_cast %75 : vector<2x8xf32> to vector<2x8x1xf32>
    %77 = tpu.reciprocal %76 {approx = true} : vector<2x8x1xf32> -> vector<2x8x1xf32>
    %78 = vector.broadcast %77 : vector<2x8x1xf32> to vector<2x8x8xf32>
    %79 = arith.mulf %74, %78 : vector<2x8x8xf32>
    %80 = arith.truncf %79 : vector<2x8x8xf32> to vector<2x8x8xbf16>
    %81 = vector.extract_strided_slice %50 {offsets = [0, 0, 8], sizes = [2, 8, 8], strides = [1, 1, 1]} : vector<2x8x32xbf16> to vector<2x8x8xbf16>
    "tpu.trace_start"() <{level = 10 : i32, message = "bmn,bnk->bmk"}> : () -> ()
    %cst_30 = arith.constant dense<0.000000e+00> : vector<2x8x8xf32>
    %82 = tpu.matmul %80, %81, %cst_30 {dimension_numbers = #tpu.dot_dimension_numbers<[2], [1], [1], [2], [0, 0, 0, 1, 1, 2], [0], [0]>} : vector<2x8x8xbf16>, vector<2x8x8xbf16>, vector<2x8x8xf32> -> vector<2x8x8xf32>
    "tpu.trace_stop"() : () -> ()
    %83 = vector.extract_strided_slice %46 {offsets = [0, 0, 16], sizes = [2, 8, 8], strides = [1, 1, 1]} : vector<2x8x32xbf16> to vector<2x8x8xbf16>
    %84 = vector.extract_strided_slice %48 {offsets = [0, 0, 16], sizes = [2, 8, 8], strides = [1, 1, 1]} : vector<2x8x32xbf16> to vector<2x8x8xbf16>
    "tpu.trace_start"() <{level = 10 : i32, message = "bmk,bnk->bmn"}> : () -> ()
    %cst_31 = arith.constant dense<0.000000e+00> : vector<2x8x8xf32>
    %85 = tpu.matmul %83, %84, %cst_31 {dimension_numbers = #tpu.dot_dimension_numbers<[2], [2], [1], [1], [0, 0, 0, 1, 1, 1], [0], [0]>} : vector<2x8x8xbf16>, vector<2x8x8xbf16>, vector<2x8x8xf32> -> vector<2x8x8xf32>
    "tpu.trace_stop"() : () -> ()
    %cst_32 = arith.constant dense<0xFF800000> : vector<2x8xf32>
    %86 = vector.multi_reduction <maximumf>, %85, %cst_32 [2] : vector<2x8x8xf32> to vector<2x8xf32>
    %87 = vector.shape_cast %86 : vector<2x8xf32> to vector<2x8x1xf32>
    %88 = vector.broadcast %87 : vector<2x8x1xf32> to vector<2x8x8xf32>
    %89 = arith.subf %85, %88 : vector<2x8x8xf32>
    %90 = math.exp %89 : vector<2x8x8xf32>
    %cst_33 = arith.constant dense<0.000000e+00> : vector<2x8xf32>
    %91 = vector.multi_reduction <add>, %90, %cst_33 [2] : vector<2x8x8xf32> to vector<2x8xf32>
    %92 = vector.shape_cast %91 : vector<2x8xf32> to vector<2x8x1xf32>
    %93 = tpu.reciprocal %92 {approx = true} : vector<2x8x1xf32> -> vector<2x8x1xf32>
    %94 = vector.broadcast %93 : vector<2x8x1xf32> to vector<2x8x8xf32>
    %95 = arith.mulf %90, %94 : vector<2x8x8xf32>
    %96 = arith.truncf %95 : vector<2x8x8xf32> to vector<2x8x8xbf16>
    %97 = vector.extract_strided_slice %50 {offsets = [0, 0, 16], sizes = [2, 8, 8], strides = [1, 1, 1]} : vector<2x8x32xbf16> to vector<2x8x8xbf16>
    "tpu.trace_start"() <{level = 10 : i32, message = "bmn,bnk->bmk"}> : () -> ()
    %cst_34 = arith.constant dense<0.000000e+00> : vector<2x8x8xf32>
    %98 = tpu.matmul %96, %97, %cst_34 {dimension_numbers = #tpu.dot_dimension_numbers<[2], [1], [1], [2], [0, 0, 0, 1, 1, 2], [0], [0]>} : vector<2x8x8xbf16>, vector<2x8x8xbf16>, vector<2x8x8xf32> -> vector<2x8x8xf32>
    "tpu.trace_stop"() : () -> ()
    %99 = vector.extract_strided_slice %46 {offsets = [0, 0, 24], sizes = [2, 8, 8], strides = [1, 1, 1]} : vector<2x8x32xbf16> to vector<2x8x8xbf16>
    %100 = vector.extract_strided_slice %48 {offsets = [0, 0, 24], sizes = [2, 8, 8], strides = [1, 1, 1]} : vector<2x8x32xbf16> to vector<2x8x8xbf16>
    "tpu.trace_start"() <{level = 10 : i32, message = "bmk,bnk->bmn"}> : () -> ()
    %cst_35 = arith.constant dense<0.000000e+00> : vector<2x8x8xf32>
    %101 = tpu.matmul %99, %100, %cst_35 {dimension_numbers = #tpu.dot_dimension_numbers<[2], [2], [1], [1], [0, 0, 0, 1, 1, 1], [0], [0]>} : vector<2x8x8xbf16>, vector<2x8x8xbf16>, vector<2x8x8xf32> -> vector<2x8x8xf32>
    "tpu.trace_stop"() : () -> ()
    %cst_36 = arith.constant dense<0xFF800000> : vector<2x8xf32>
    %102 = vector.multi_reduction <maximumf>, %101, %cst_36 [2] : vector<2x8x8xf32> to vector<2x8xf32>
    %103 = vector.shape_cast %102 : vector<2x8xf32> to vector<2x8x1xf32>
    %104 = vector.broadcast %103 : vector<2x8x1xf32> to vector<2x8x8xf32>
    %105 = arith.subf %101, %104 : vector<2x8x8xf32>
    %106 = math.exp %105 : vector<2x8x8xf32>
    %cst_37 = arith.constant dense<0.000000e+00> : vector<2x8xf32>
    %107 = vector.multi_reduction <add>, %106, %cst_37 [2] : vector<2x8x8xf32> to vector<2x8xf32>
    %108 = vector.shape_cast %107 : vector<2x8xf32> to vector<2x8x1xf32>
    %109 = tpu.reciprocal %108 {approx = true} : vector<2x8x1xf32> -> vector<2x8x1xf32>
    %110 = vector.broadcast %109 : vector<2x8x1xf32> to vector<2x8x8xf32>
    %111 = arith.mulf %106, %110 : vector<2x8x8xf32>
    %112 = arith.truncf %111 : vector<2x8x8xf32> to vector<2x8x8xbf16>
    %113 = vector.extract_strided_slice %50 {offsets = [0, 0, 24], sizes = [2, 8, 8], strides = [1, 1, 1]} : vector<2x8x32xbf16> to vector<2x8x8xbf16>
    "tpu.trace_start"() <{level = 10 : i32, message = "bmn,bnk->bmk"}> : () -> ()
    %cst_38 = arith.constant dense<0.000000e+00> : vector<2x8x8xf32>
    %114 = tpu.matmul %112, %113, %cst_38 {dimension_numbers = #tpu.dot_dimension_numbers<[2], [1], [1], [2], [0, 0, 0, 1, 1, 2], [0], [0]>} : vector<2x8x8xbf16>, vector<2x8x8xbf16>, vector<2x8x8xf32> -> vector<2x8x8xf32>
    "tpu.trace_stop"() : () -> ()
    %115 = tpu.concatenate %66, %82, %98, %114 in 2 : vector<2x8x8xf32>, vector<2x8x8xf32>, vector<2x8x8xf32>, vector<2x8x8xf32> -> vector<2x8x32xf32>
    %116 = vector.shape_cast %115 : vector<2x8x32xf32> to vector<16x32xf32>
    %117 = arith.truncf %116 : vector<16x32xf32> to vector<16x32xbf16>
    %cst_39 = arith.constant dense<0.000000e+00> : vector<16x32xf32>
    %118 = tpu.matmul %117, %43, %cst_39 {dimension_numbers = #tpu.dot_dimension_numbers<[1], [0], [0], [1], [0, 0, 1, 1], [], []>} : vector<16x32xbf16>, vector<32x32xbf16>, vector<16x32xf32> -> vector<16x32xf32>
    %119 = vector.broadcast %44 : vector<1x32xf32> to vector<16x32xf32>
    %120 = arith.addf %118, %119 : vector<16x32xf32>
    %121 = arith.addf %10, %120 : vector<16x32xf32>
    %122 = vector.extract_strided_slice %4 {offsets = [3, 0], sizes = [1, 32], strides = [1, 1]} : vector<14x32xf32> to vector<1x32xf32>
    %123 = vector.extract_strided_slice %4 {offsets = [4, 0], sizes = [1, 32], strides = [1, 1]} : vector<14x32xf32> to vector<1x32xf32>
    %c0_40 = arith.constant 0 : index
    %c0_41 = arith.constant 0 : index
    %c0_42 = arith.constant 0 : index
    %124 = vector.load %arg9[%c0_40, %c0_41, %c0_42] : memref<1x32x64xbf16, #tpu.memory_space<vmem>>, vector<1x32x64xbf16>
    %125 = vector.shape_cast %124 : vector<1x32x64xbf16> to vector<32x64xbf16>
    %126 = vector.extract_strided_slice %6 {offsets = [0, 0], sizes = [1, 64], strides = [1, 1]} : vector<2x64xf32> to vector<1x64xf32>
    %c0_43 = arith.constant 0 : index
    %c0_44 = arith.constant 0 : index
    %c0_45 = arith.constant 0 : index
    %127 = vector.load %arg10[%c0_43, %c0_44, %c0_45] : memref<1x64x32xbf16, #tpu.memory_space<vmem>>, vector<1x64x32xbf16>
    %128 = vector.shape_cast %127 : vector<1x64x32xbf16> to vector<64x32xbf16>
    %129 = vector.extract_strided_slice %4 {offsets = [5, 0], sizes = [1, 32], strides = [1, 1]} : vector<14x32xf32> to vector<1x32xf32>
    %cst_46 = arith.constant dense<0.000000e+00> : vector<16xf32>
    %130 = vector.multi_reduction <add>, %121, %cst_46 [1] : vector<16x32xf32> to vector<16xf32>
    %131 = vector.shape_cast %130 : vector<16xf32> to vector<16x1xf32>
    %cst_47 = arith.constant 3.200000e+01 : f32
    %132 = vector.broadcast %cst_47 : f32 to vector<16x1xf32>
    %133 = arith.divf %131, %132 : vector<16x1xf32>
    %134 = vector.broadcast %133 : vector<16x1xf32> to vector<16x32xf32>
    %135 = arith.subf %121, %134 : vector<16x32xf32>
    %136 = arith.mulf %135, %135 : vector<16x32xf32>
    %cst_48 = arith.constant dense<0.000000e+00> : vector<16xf32>
    %137 = vector.multi_reduction <add>, %136, %cst_48 [1] : vector<16x32xf32> to vector<16xf32>
    %138 = vector.shape_cast %137 : vector<16xf32> to vector<16x1xf32>
    %cst_49 = arith.constant 3.200000e+01 : f32
    %139 = vector.broadcast %cst_49 : f32 to vector<16x1xf32>
    %140 = arith.divf %138, %139 : vector<16x1xf32>
    %141 = vector.broadcast %133 : vector<16x1xf32> to vector<16x32xf32>
    %142 = arith.subf %121, %141 : vector<16x32xf32>
    %cst_50 = arith.constant 9.99999974E-6 : f32
    %143 = vector.broadcast %cst_50 : f32 to vector<16x1xf32>
    %144 = arith.addf %140, %143 : vector<16x1xf32>
    %145 = math.rsqrt %144 : vector<16x1xf32>
    %146 = vector.broadcast %145 : vector<16x1xf32> to vector<16x32xf32>
    %147 = arith.mulf %142, %146 : vector<16x32xf32>
    %148 = vector.broadcast %122 : vector<1x32xf32> to vector<16x32xf32>
    %149 = arith.mulf %147, %148 : vector<16x32xf32>
    %150 = vector.broadcast %123 : vector<1x32xf32> to vector<16x32xf32>
    %151 = arith.addf %149, %150 : vector<16x32xf32>
    %152 = arith.truncf %151 : vector<16x32xf32> to vector<16x32xbf16>
    %cst_51 = arith.constant dense<0.000000e+00> : vector<16x64xf32>
    %153 = tpu.matmul %152, %125, %cst_51 {dimension_numbers = #tpu.dot_dimension_numbers<[1], [0], [0], [1], [0, 0, 1, 1], [], []>} : vector<16x32xbf16>, vector<32x64xbf16>, vector<16x64xf32> -> vector<16x64xf32>
    %154 = vector.broadcast %126 : vector<1x64xf32> to vector<16x64xf32>
    %155 = arith.addf %153, %154 : vector<16x64xf32>
    %cst_52 = arith.constant 5.000000e-01 : f32
    %156 = vector.broadcast %cst_52 : f32 to vector<16x64xf32>
    %157 = arith.mulf %156, %155 : vector<16x64xf32>
    %cst_53 = arith.constant 0.707106769 : f32
    %158 = vector.broadcast %cst_53 : f32 to vector<16x64xf32>
    %159 = arith.mulf %155, %158 : vector<16x64xf32>
    %160 = math.absf %159 : vector<16x64xf32>
    %cst_54 = arith.constant 0.327591091 : f32
    %161 = vector.broadcast %cst_54 : f32 to vector<16x64xf32>
    %162 = arith.mulf %161, %160 : vector<16x64xf32>
    %cst_55 = arith.constant 1.000000e+00 : f32
    %163 = vector.broadcast %cst_55 : f32 to vector<16x64xf32>
    %164 = arith.addf %163, %162 : vector<16x64xf32>
    %cst_56 = arith.constant 1.000000e+00 : f32
    %165 = vector.broadcast %cst_56 : f32 to vector<16x64xf32>
    %166 = arith.divf %165, %164 : vector<16x64xf32>
    %cst_57 = arith.constant 1.06140542 : f32
    %167 = vector.broadcast %cst_57 : f32 to vector<16x64xf32>
    %168 = arith.mulf %166, %167 : vector<16x64xf32>
    %cst_58 = arith.constant -1.45315206 : f32
    %169 = vector.broadcast %cst_58 : f32 to vector<16x64xf32>
    %170 = arith.addf %169, %168 : vector<16x64xf32>
    %171 = arith.mulf %166, %170 : vector<16x64xf32>
    %cst_59 = arith.constant 1.42141378 : f32
    %172 = vector.broadcast %cst_59 : f32 to vector<16x64xf32>
    %173 = arith.addf %172, %171 : vector<16x64xf32>
    %174 = arith.mulf %166, %173 : vector<16x64xf32>
    %cst_60 = arith.constant -0.284496725 : f32
    %175 = vector.broadcast %cst_60 : f32 to vector<16x64xf32>
    %176 = arith.addf %175, %174 : vector<16x64xf32>
    %177 = arith.mulf %166, %176 : vector<16x64xf32>
    %cst_61 = arith.constant 0.254829586 : f32
    %178 = vector.broadcast %cst_61 : f32 to vector<16x64xf32>
    %179 = arith.addf %178, %177 : vector<16x64xf32>
    %180 = arith.mulf %166, %179 : vector<16x64xf32>
    %181 = arith.mulf %160, %160 : vector<16x64xf32>
    %cst_62 = arith.constant 0.000000e+00 : f32
    %182 = vector.broadcast %cst_62 : f32 to vector<16x64xf32>
    %183 = arith.subf %182, %181 : vector<16x64xf32>
    %184 = math.exp %183 : vector<16x64xf32>
    %185 = arith.mulf %180, %184 : vector<16x64xf32>
    %cst_63 = arith.constant 1.000000e+00 : f32
    %186 = vector.broadcast %cst_63 : f32 to vector<16x64xf32>
    %187 = arith.subf %186, %185 : vector<16x64xf32>
    %cst_64 = arith.constant 0.000000e+00 : f32
    %188 = vector.broadcast %cst_64 : f32 to vector<16x64xf32>
    %189 = arith.cmpf olt, %159, %188 : vector<16x64xf32>
    %cst_65 = arith.constant 0.000000e+00 : f32
    %190 = vector.broadcast %cst_65 : f32 to vector<16x64xf32>
    %191 = arith.subf %190, %187 : vector<16x64xf32>
    %192 = arith.select %189, %191, %187 : vector<16x64xi1>, vector<16x64xf32>
    %cst_66 = arith.constant 1.000000e+00 : f32
    %193 = vector.broadcast %cst_66 : f32 to vector<16x64xf32>
    %194 = arith.addf %193, %192 : vector<16x64xf32>
    %195 = arith.mulf %157, %194 : vector<16x64xf32>
    %196 = arith.truncf %195 : vector<16x64xf32> to vector<16x64xbf16>
    %cst_67 = arith.constant dense<0.000000e+00> : vector<16x32xf32>
    %197 = tpu.matmul %196, %128, %cst_67 {dimension_numbers = #tpu.dot_dimension_numbers<[1], [0], [0], [1], [0, 0, 1, 1], [], []>} : vector<16x64xbf16>, vector<64x32xbf16>, vector<16x32xf32> -> vector<16x32xf32>
    %198 = vector.broadcast %129 : vector<1x32xf32> to vector<16x32xf32>
    %199 = arith.addf %197, %198 : vector<16x32xf32>
    %200 = arith.addf %121, %199 : vector<16x32xf32>
    %201 = vector.extract_strided_slice %4 {offsets = [6, 0], sizes = [1, 32], strides = [1, 1]} : vector<14x32xf32> to vector<1x32xf32>
    %202 = vector.extract_strided_slice %4 {offsets = [7, 0], sizes = [1, 32], strides = [1, 1]} : vector<14x32xf32> to vector<1x32xf32>
    %cst_68 = arith.constant dense<0.000000e+00> : vector<16xf32>
    %203 = vector.multi_reduction <add>, %8, %cst_68 [1] : vector<16x32xf32> to vector<16xf32>
    %204 = vector.shape_cast %203 : vector<16xf32> to vector<16x1xf32>
    %cst_69 = arith.constant 3.200000e+01 : f32
    %205 = vector.broadcast %cst_69 : f32 to vector<16x1xf32>
    %206 = arith.divf %204, %205 : vector<16x1xf32>
    %207 = vector.broadcast %206 : vector<16x1xf32> to vector<16x32xf32>
    %208 = arith.subf %8, %207 : vector<16x32xf32>
    %209 = arith.mulf %208, %208 : vector<16x32xf32>
    %cst_70 = arith.constant dense<0.000000e+00> : vector<16xf32>
    %210 = vector.multi_reduction <add>, %209, %cst_70 [1] : vector<16x32xf32> to vector<16xf32>
    %211 = vector.shape_cast %210 : vector<16xf32> to vector<16x1xf32>
    %cst_71 = arith.constant 3.200000e+01 : f32
    %212 = vector.broadcast %cst_71 : f32 to vector<16x1xf32>
    %213 = arith.divf %211, %212 : vector<16x1xf32>
    %214 = vector.broadcast %206 : vector<16x1xf32> to vector<16x32xf32>
    %215 = arith.subf %8, %214 : vector<16x32xf32>
    %cst_72 = arith.constant 9.99999974E-6 : f32
    %216 = vector.broadcast %cst_72 : f32 to vector<16x1xf32>
    %217 = arith.addf %213, %216 : vector<16x1xf32>
    %218 = math.rsqrt %217 : vector<16x1xf32>
    %219 = vector.broadcast %218 : vector<16x1xf32> to vector<16x32xf32>
    %220 = arith.mulf %215, %219 : vector<16x32xf32>
    %221 = vector.broadcast %201 : vector<1x32xf32> to vector<16x32xf32>
    %222 = arith.mulf %220, %221 : vector<16x32xf32>
    %223 = vector.broadcast %202 : vector<1x32xf32> to vector<16x32xf32>
    %224 = arith.addf %222, %223 : vector<16x32xf32>
    %225 = arith.truncf %224 : vector<16x32xf32> to vector<16x32xbf16>
    %226 = vector.extract_strided_slice %4 {offsets = [8, 0], sizes = [1, 32], strides = [1, 1]} : vector<14x32xf32> to vector<1x32xf32>
    %227 = vector.extract_strided_slice %4 {offsets = [9, 0], sizes = [1, 32], strides = [1, 1]} : vector<14x32xf32> to vector<1x32xf32>
    %cst_73 = arith.constant dense<0.000000e+00> : vector<16xf32>
    %228 = vector.multi_reduction <add>, %200, %cst_73 [1] : vector<16x32xf32> to vector<16xf32>
    %229 = vector.shape_cast %228 : vector<16xf32> to vector<16x1xf32>
    %cst_74 = arith.constant 3.200000e+01 : f32
    %230 = vector.broadcast %cst_74 : f32 to vector<16x1xf32>
    %231 = arith.divf %229, %230 : vector<16x1xf32>
    %232 = vector.broadcast %231 : vector<16x1xf32> to vector<16x32xf32>
    %233 = arith.subf %200, %232 : vector<16x32xf32>
    %234 = arith.mulf %233, %233 : vector<16x32xf32>
    %cst_75 = arith.constant dense<0.000000e+00> : vector<16xf32>
    %235 = vector.multi_reduction <add>, %234, %cst_75 [1] : vector<16x32xf32> to vector<16xf32>
    %236 = vector.shape_cast %235 : vector<16xf32> to vector<16x1xf32>
    %cst_76 = arith.constant 3.200000e+01 : f32
    %237 = vector.broadcast %cst_76 : f32 to vector<16x1xf32>
    %238 = arith.divf %236, %237 : vector<16x1xf32>
    %239 = vector.broadcast %231 : vector<16x1xf32> to vector<16x32xf32>
    %240 = arith.subf %200, %239 : vector<16x32xf32>
    %cst_77 = arith.constant 9.99999974E-6 : f32
    %241 = vector.broadcast %cst_77 : f32 to vector<16x1xf32>
    %242 = arith.addf %238, %241 : vector<16x1xf32>
    %243 = math.rsqrt %242 : vector<16x1xf32>
    %244 = vector.broadcast %243 : vector<16x1xf32> to vector<16x32xf32>
    %245 = arith.mulf %240, %244 : vector<16x32xf32>
    %246 = vector.broadcast %226 : vector<1x32xf32> to vector<16x32xf32>
    %247 = arith.mulf %245, %246 : vector<16x32xf32>
    %248 = vector.broadcast %227 : vector<1x32xf32> to vector<16x32xf32>
    %249 = arith.addf %247, %248 : vector<16x32xf32>
    %250 = arith.truncf %249 : vector<16x32xf32> to vector<16x32xbf16>
    %c0_78 = arith.constant 0 : index
    %c0_79 = arith.constant 0 : index
    %c0_80 = arith.constant 0 : index
    %251 = vector.load %arg11[%c0_78, %c0_79, %c0_80] : memref<1x32x32xbf16, #tpu.memory_space<vmem>>, vector<1x32x32xbf16>
    %252 = vector.shape_cast %251 : vector<1x32x32xbf16> to vector<32x32xbf16>
    %cst_81 = arith.constant dense<0.000000e+00> : vector<16x32xf32>
    %253 = tpu.matmul %225, %252, %cst_81 {dimension_numbers = #tpu.dot_dimension_numbers<[1], [0], [0], [1], [0, 0, 1, 1], [], []>} : vector<16x32xbf16>, vector<32x32xbf16>, vector<16x32xf32> -> vector<16x32xf32>
    %c0_82 = arith.constant 0 : index
    %c0_83 = arith.constant 0 : index
    %c0_84 = arith.constant 0 : index
    %254 = vector.load %arg12[%c0_82, %c0_83, %c0_84] : memref<1x32x64xbf16, #tpu.memory_space<vmem>>, vector<1x32x64xbf16>
    %255 = vector.shape_cast %254 : vector<1x32x64xbf16> to vector<32x64xbf16>
    %cst_85 = arith.constant dense<0.000000e+00> : vector<16x64xf32>
    %256 = tpu.matmul %250, %255, %cst_85 {dimension_numbers = #tpu.dot_dimension_numbers<[1], [0], [0], [1], [0, 0, 1, 1], [], []>} : vector<16x32xbf16>, vector<32x64xbf16>, vector<16x64xf32> -> vector<16x64xf32>
    %257 = vector.extract_strided_slice %256 {offsets = [0, 0], sizes = [16, 32], strides = [1, 1]} : vector<16x64xf32> to vector<16x32xf32>
    %258 = vector.extract_strided_slice %256 {offsets = [0, 32], sizes = [16, 32], strides = [1, 1]} : vector<16x64xf32> to vector<16x32xf32>
    %c0_86 = arith.constant 0 : index
    %c0_87 = arith.constant 0 : index
    %c0_88 = arith.constant 0 : index
    %259 = vector.load %arg13[%c0_86, %c0_87, %c0_88] : memref<1x32x32xbf16, #tpu.memory_space<vmem>>, vector<1x32x32xbf16>
    %260 = vector.shape_cast %259 : vector<1x32x32xbf16> to vector<32x32xbf16>
    %261 = vector.extract_strided_slice %4 {offsets = [10, 0], sizes = [1, 32], strides = [1, 1]} : vector<14x32xf32> to vector<1x32xf32>
    %262 = vector.shape_cast %253 : vector<16x32xf32> to vector<2x8x32xf32>
    %263 = arith.truncf %262 : vector<2x8x32xf32> to vector<2x8x32xbf16>
    %264 = vector.shape_cast %257 : vector<16x32xf32> to vector<2x8x32xf32>
    %265 = arith.truncf %264 : vector<2x8x32xf32> to vector<2x8x32xbf16>
    %266 = vector.shape_cast %258 : vector<16x32xf32> to vector<2x8x32xf32>
    %267 = arith.truncf %266 : vector<2x8x32xf32> to vector<2x8x32xbf16>
    %268 = vector.extract_strided_slice %263 {offsets = [0, 0, 0], sizes = [2, 8, 8], strides = [1, 1, 1]} : vector<2x8x32xbf16> to vector<2x8x8xbf16>
    %269 = vector.extract_strided_slice %265 {offsets = [0, 0, 0], sizes = [2, 8, 8], strides = [1, 1, 1]} : vector<2x8x32xbf16> to vector<2x8x8xbf16>
    "tpu.trace_start"() <{level = 10 : i32, message = "bmk,bnk->bmn"}> : () -> ()
    %cst_89 = arith.constant dense<0.000000e+00> : vector<2x8x8xf32>
    %270 = tpu.matmul %268, %269, %cst_89 {dimension_numbers = #tpu.dot_dimension_numbers<[2], [2], [1], [1], [0, 0, 0, 1, 1, 1], [0], [0]>} : vector<2x8x8xbf16>, vector<2x8x8xbf16>, vector<2x8x8xf32> -> vector<2x8x8xf32>
    "tpu.trace_stop"() : () -> ()
    %cst_90 = arith.constant dense<0xFF800000> : vector<2x8xf32>
    %271 = vector.multi_reduction <maximumf>, %270, %cst_90 [2] : vector<2x8x8xf32> to vector<2x8xf32>
    %272 = vector.shape_cast %271 : vector<2x8xf32> to vector<2x8x1xf32>
    %273 = vector.broadcast %272 : vector<2x8x1xf32> to vector<2x8x8xf32>
    %274 = arith.subf %270, %273 : vector<2x8x8xf32>
    %275 = math.exp %274 : vector<2x8x8xf32>
    %cst_91 = arith.constant dense<0.000000e+00> : vector<2x8xf32>
    %276 = vector.multi_reduction <add>, %275, %cst_91 [2] : vector<2x8x8xf32> to vector<2x8xf32>
    %277 = vector.shape_cast %276 : vector<2x8xf32> to vector<2x8x1xf32>
    %278 = tpu.reciprocal %277 {approx = true} : vector<2x8x1xf32> -> vector<2x8x1xf32>
    %279 = vector.broadcast %278 : vector<2x8x1xf32> to vector<2x8x8xf32>
    %280 = arith.mulf %275, %279 : vector<2x8x8xf32>
    %281 = arith.truncf %280 : vector<2x8x8xf32> to vector<2x8x8xbf16>
    %282 = vector.extract_strided_slice %267 {offsets = [0, 0, 0], sizes = [2, 8, 8], strides = [1, 1, 1]} : vector<2x8x32xbf16> to vector<2x8x8xbf16>
    "tpu.trace_start"() <{level = 10 : i32, message = "bmn,bnk->bmk"}> : () -> ()
    %cst_92 = arith.constant dense<0.000000e+00> : vector<2x8x8xf32>
    %283 = tpu.matmul %281, %282, %cst_92 {dimension_numbers = #tpu.dot_dimension_numbers<[2], [1], [1], [2], [0, 0, 0, 1, 1, 2], [0], [0]>} : vector<2x8x8xbf16>, vector<2x8x8xbf16>, vector<2x8x8xf32> -> vector<2x8x8xf32>
    "tpu.trace_stop"() : () -> ()
    %284 = vector.extract_strided_slice %263 {offsets = [0, 0, 8], sizes = [2, 8, 8], strides = [1, 1, 1]} : vector<2x8x32xbf16> to vector<2x8x8xbf16>
    %285 = vector.extract_strided_slice %265 {offsets = [0, 0, 8], sizes = [2, 8, 8], strides = [1, 1, 1]} : vector<2x8x32xbf16> to vector<2x8x8xbf16>
    "tpu.trace_start"() <{level = 10 : i32, message = "bmk,bnk->bmn"}> : () -> ()
    %cst_93 = arith.constant dense<0.000000e+00> : vector<2x8x8xf32>
    %286 = tpu.matmul %284, %285, %cst_93 {dimension_numbers = #tpu.dot_dimension_numbers<[2], [2], [1], [1], [0, 0, 0, 1, 1, 1], [0], [0]>} : vector<2x8x8xbf16>, vector<2x8x8xbf16>, vector<2x8x8xf32> -> vector<2x8x8xf32>
    "tpu.trace_stop"() : () -> ()
    %cst_94 = arith.constant dense<0xFF800000> : vector<2x8xf32>
    %287 = vector.multi_reduction <maximumf>, %286, %cst_94 [2] : vector<2x8x8xf32> to vector<2x8xf32>
    %288 = vector.shape_cast %287 : vector<2x8xf32> to vector<2x8x1xf32>
    %289 = vector.broadcast %288 : vector<2x8x1xf32> to vector<2x8x8xf32>
    %290 = arith.subf %286, %289 : vector<2x8x8xf32>
    %291 = math.exp %290 : vector<2x8x8xf32>
    %cst_95 = arith.constant dense<0.000000e+00> : vector<2x8xf32>
    %292 = vector.multi_reduction <add>, %291, %cst_95 [2] : vector<2x8x8xf32> to vector<2x8xf32>
    %293 = vector.shape_cast %292 : vector<2x8xf32> to vector<2x8x1xf32>
    %294 = tpu.reciprocal %293 {approx = true} : vector<2x8x1xf32> -> vector<2x8x1xf32>
    %295 = vector.broadcast %294 : vector<2x8x1xf32> to vector<2x8x8xf32>
    %296 = arith.mulf %291, %295 : vector<2x8x8xf32>
    %297 = arith.truncf %296 : vector<2x8x8xf32> to vector<2x8x8xbf16>
    %298 = vector.extract_strided_slice %267 {offsets = [0, 0, 8], sizes = [2, 8, 8], strides = [1, 1, 1]} : vector<2x8x32xbf16> to vector<2x8x8xbf16>
    "tpu.trace_start"() <{level = 10 : i32, message = "bmn,bnk->bmk"}> : () -> ()
    %cst_96 = arith.constant dense<0.000000e+00> : vector<2x8x8xf32>
    %299 = tpu.matmul %297, %298, %cst_96 {dimension_numbers = #tpu.dot_dimension_numbers<[2], [1], [1], [2], [0, 0, 0, 1, 1, 2], [0], [0]>} : vector<2x8x8xbf16>, vector<2x8x8xbf16>, vector<2x8x8xf32> -> vector<2x8x8xf32>
    "tpu.trace_stop"() : () -> ()
    %300 = vector.extract_strided_slice %263 {offsets = [0, 0, 16], sizes = [2, 8, 8], strides = [1, 1, 1]} : vector<2x8x32xbf16> to vector<2x8x8xbf16>
    %301 = vector.extract_strided_slice %265 {offsets = [0, 0, 16], sizes = [2, 8, 8], strides = [1, 1, 1]} : vector<2x8x32xbf16> to vector<2x8x8xbf16>
    "tpu.trace_start"() <{level = 10 : i32, message = "bmk,bnk->bmn"}> : () -> ()
    %cst_97 = arith.constant dense<0.000000e+00> : vector<2x8x8xf32>
    %302 = tpu.matmul %300, %301, %cst_97 {dimension_numbers = #tpu.dot_dimension_numbers<[2], [2], [1], [1], [0, 0, 0, 1, 1, 1], [0], [0]>} : vector<2x8x8xbf16>, vector<2x8x8xbf16>, vector<2x8x8xf32> -> vector<2x8x8xf32>
    "tpu.trace_stop"() : () -> ()
    %cst_98 = arith.constant dense<0xFF800000> : vector<2x8xf32>
    %303 = vector.multi_reduction <maximumf>, %302, %cst_98 [2] : vector<2x8x8xf32> to vector<2x8xf32>
    %304 = vector.shape_cast %303 : vector<2x8xf32> to vector<2x8x1xf32>
    %305 = vector.broadcast %304 : vector<2x8x1xf32> to vector<2x8x8xf32>
    %306 = arith.subf %302, %305 : vector<2x8x8xf32>
    %307 = math.exp %306 : vector<2x8x8xf32>
    %cst_99 = arith.constant dense<0.000000e+00> : vector<2x8xf32>
    %308 = vector.multi_reduction <add>, %307, %cst_99 [2] : vector<2x8x8xf32> to vector<2x8xf32>
    %309 = vector.shape_cast %308 : vector<2x8xf32> to vector<2x8x1xf32>
    %310 = tpu.reciprocal %309 {approx = true} : vector<2x8x1xf32> -> vector<2x8x1xf32>
    %311 = vector.broadcast %310 : vector<2x8x1xf32> to vector<2x8x8xf32>
    %312 = arith.mulf %307, %311 : vector<2x8x8xf32>
    %313 = arith.truncf %312 : vector<2x8x8xf32> to vector<2x8x8xbf16>
    %314 = vector.extract_strided_slice %267 {offsets = [0, 0, 16], sizes = [2, 8, 8], strides = [1, 1, 1]} : vector<2x8x32xbf16> to vector<2x8x8xbf16>
    "tpu.trace_start"() <{level = 10 : i32, message = "bmn,bnk->bmk"}> : () -> ()
    %cst_100 = arith.constant dense<0.000000e+00> : vector<2x8x8xf32>
    %315 = tpu.matmul %313, %314, %cst_100 {dimension_numbers = #tpu.dot_dimension_numbers<[2], [1], [1], [2], [0, 0, 0, 1, 1, 2], [0], [0]>} : vector<2x8x8xbf16>, vector<2x8x8xbf16>, vector<2x8x8xf32> -> vector<2x8x8xf32>
    "tpu.trace_stop"() : () -> ()
    %316 = vector.extract_strided_slice %263 {offsets = [0, 0, 24], sizes = [2, 8, 8], strides = [1, 1, 1]} : vector<2x8x32xbf16> to vector<2x8x8xbf16>
    %317 = vector.extract_strided_slice %265 {offsets = [0, 0, 24], sizes = [2, 8, 8], strides = [1, 1, 1]} : vector<2x8x32xbf16> to vector<2x8x8xbf16>
    "tpu.trace_start"() <{level = 10 : i32, message = "bmk,bnk->bmn"}> : () -> ()
    %cst_101 = arith.constant dense<0.000000e+00> : vector<2x8x8xf32>
    %318 = tpu.matmul %316, %317, %cst_101 {dimension_numbers = #tpu.dot_dimension_numbers<[2], [2], [1], [1], [0, 0, 0, 1, 1, 1], [0], [0]>} : vector<2x8x8xbf16>, vector<2x8x8xbf16>, vector<2x8x8xf32> -> vector<2x8x8xf32>
    "tpu.trace_stop"() : () -> ()
    %cst_102 = arith.constant dense<0xFF800000> : vector<2x8xf32>
    %319 = vector.multi_reduction <maximumf>, %318, %cst_102 [2] : vector<2x8x8xf32> to vector<2x8xf32>
    %320 = vector.shape_cast %319 : vector<2x8xf32> to vector<2x8x1xf32>
    %321 = vector.broadcast %320 : vector<2x8x1xf32> to vector<2x8x8xf32>
    %322 = arith.subf %318, %321 : vector<2x8x8xf32>
    %323 = math.exp %322 : vector<2x8x8xf32>
    %cst_103 = arith.constant dense<0.000000e+00> : vector<2x8xf32>
    %324 = vector.multi_reduction <add>, %323, %cst_103 [2] : vector<2x8x8xf32> to vector<2x8xf32>
    %325 = vector.shape_cast %324 : vector<2x8xf32> to vector<2x8x1xf32>
    %326 = tpu.reciprocal %325 {approx = true} : vector<2x8x1xf32> -> vector<2x8x1xf32>
    %327 = vector.broadcast %326 : vector<2x8x1xf32> to vector<2x8x8xf32>
    %328 = arith.mulf %323, %327 : vector<2x8x8xf32>
    %329 = arith.truncf %328 : vector<2x8x8xf32> to vector<2x8x8xbf16>
    %330 = vector.extract_strided_slice %267 {offsets = [0, 0, 24], sizes = [2, 8, 8], strides = [1, 1, 1]} : vector<2x8x32xbf16> to vector<2x8x8xbf16>
    "tpu.trace_start"() <{level = 10 : i32, message = "bmn,bnk->bmk"}> : () -> ()
    %cst_104 = arith.constant dense<0.000000e+00> : vector<2x8x8xf32>
    %331 = tpu.matmul %329, %330, %cst_104 {dimension_numbers = #tpu.dot_dimension_numbers<[2], [1], [1], [2], [0, 0, 0, 1, 1, 2], [0], [0]>} : vector<2x8x8xbf16>, vector<2x8x8xbf16>, vector<2x8x8xf32> -> vector<2x8x8xf32>
    "tpu.trace_stop"() : () -> ()
    %332 = tpu.concatenate %283, %299, %315, %331 in 2 : vector<2x8x8xf32>, vector<2x8x8xf32>, vector<2x8x8xf32>, vector<2x8x8xf32> -> vector<2x8x32xf32>
    %333 = vector.shape_cast %332 : vector<2x8x32xf32> to vector<16x32xf32>
    %334 = arith.truncf %333 : vector<16x32xf32> to vector<16x32xbf16>
    %cst_105 = arith.constant dense<0.000000e+00> : vector<16x32xf32>
    %335 = tpu.matmul %334, %260, %cst_105 {dimension_numbers = #tpu.dot_dimension_numbers<[1], [0], [0], [1], [0, 0, 1, 1], [], []>} : vector<16x32xbf16>, vector<32x32xbf16>, vector<16x32xf32> -> vector<16x32xf32>
    %336 = vector.broadcast %261 : vector<1x32xf32> to vector<16x32xf32>
    %337 = arith.addf %335, %336 : vector<16x32xf32>
    %338 = arith.addf %8, %337 : vector<16x32xf32>
    %339 = vector.extract_strided_slice %4 {offsets = [11, 0], sizes = [1, 32], strides = [1, 1]} : vector<14x32xf32> to vector<1x32xf32>
    %340 = vector.extract_strided_slice %4 {offsets = [12, 0], sizes = [1, 32], strides = [1, 1]} : vector<14x32xf32> to vector<1x32xf32>
    %c0_106 = arith.constant 0 : index
    %c0_107 = arith.constant 0 : index
    %c0_108 = arith.constant 0 : index
    %341 = vector.load %arg14[%c0_106, %c0_107, %c0_108] : memref<1x32x64xbf16, #tpu.memory_space<vmem>>, vector<1x32x64xbf16>
    %342 = vector.shape_cast %341 : vector<1x32x64xbf16> to vector<32x64xbf16>
    %343 = vector.extract_strided_slice %6 {offsets = [1, 0], sizes = [1, 64], strides = [1, 1]} : vector<2x64xf32> to vector<1x64xf32>
    %c0_109 = arith.constant 0 : index
    %c0_110 = arith.constant 0 : index
    %c0_111 = arith.constant 0 : index
    %344 = vector.load %arg15[%c0_109, %c0_110, %c0_111] : memref<1x64x32xbf16, #tpu.memory_space<vmem>>, vector<1x64x32xbf16>
    %345 = vector.shape_cast %344 : vector<1x64x32xbf16> to vector<64x32xbf16>
    %346 = vector.extract_strided_slice %4 {offsets = [13, 0], sizes = [1, 32], strides = [1, 1]} : vector<14x32xf32> to vector<1x32xf32>
    %cst_112 = arith.constant dense<0.000000e+00> : vector<16xf32>
    %347 = vector.multi_reduction <add>, %338, %cst_112 [1] : vector<16x32xf32> to vector<16xf32>
    %348 = vector.shape_cast %347 : vector<16xf32> to vector<16x1xf32>
    %cst_113 = arith.constant 3.200000e+01 : f32
    %349 = vector.broadcast %cst_113 : f32 to vector<16x1xf32>
    %350 = arith.divf %348, %349 : vector<16x1xf32>
    %351 = vector.broadcast %350 : vector<16x1xf32> to vector<16x32xf32>
    %352 = arith.subf %338, %351 : vector<16x32xf32>
    %353 = arith.mulf %352, %352 : vector<16x32xf32>
    %cst_114 = arith.constant dense<0.000000e+00> : vector<16xf32>
    %354 = vector.multi_reduction <add>, %353, %cst_114 [1] : vector<16x32xf32> to vector<16xf32>
    %355 = vector.shape_cast %354 : vector<16xf32> to vector<16x1xf32>
    %cst_115 = arith.constant 3.200000e+01 : f32
    %356 = vector.broadcast %cst_115 : f32 to vector<16x1xf32>
    %357 = arith.divf %355, %356 : vector<16x1xf32>
    %358 = vector.broadcast %350 : vector<16x1xf32> to vector<16x32xf32>
    %359 = arith.subf %338, %358 : vector<16x32xf32>
    %cst_116 = arith.constant 9.99999974E-6 : f32
    %360 = vector.broadcast %cst_116 : f32 to vector<16x1xf32>
    %361 = arith.addf %357, %360 : vector<16x1xf32>
    %362 = math.rsqrt %361 : vector<16x1xf32>
    %363 = vector.broadcast %362 : vector<16x1xf32> to vector<16x32xf32>
    %364 = arith.mulf %359, %363 : vector<16x32xf32>
    %365 = vector.broadcast %339 : vector<1x32xf32> to vector<16x32xf32>
    %366 = arith.mulf %364, %365 : vector<16x32xf32>
    %367 = vector.broadcast %340 : vector<1x32xf32> to vector<16x32xf32>
    %368 = arith.addf %366, %367 : vector<16x32xf32>
    %369 = arith.truncf %368 : vector<16x32xf32> to vector<16x32xbf16>
    %cst_117 = arith.constant dense<0.000000e+00> : vector<16x64xf32>
    %370 = tpu.matmul %369, %342, %cst_117 {dimension_numbers = #tpu.dot_dimension_numbers<[1], [0], [0], [1], [0, 0, 1, 1], [], []>} : vector<16x32xbf16>, vector<32x64xbf16>, vector<16x64xf32> -> vector<16x64xf32>
    %371 = vector.broadcast %343 : vector<1x64xf32> to vector<16x64xf32>
    %372 = arith.addf %370, %371 : vector<16x64xf32>
    %cst_118 = arith.constant 5.000000e-01 : f32
    %373 = vector.broadcast %cst_118 : f32 to vector<16x64xf32>
    %374 = arith.mulf %373, %372 : vector<16x64xf32>
    %cst_119 = arith.constant 0.707106769 : f32
    %375 = vector.broadcast %cst_119 : f32 to vector<16x64xf32>
    %376 = arith.mulf %372, %375 : vector<16x64xf32>
    %377 = math.absf %376 : vector<16x64xf32>
    %cst_120 = arith.constant 0.327591091 : f32
    %378 = vector.broadcast %cst_120 : f32 to vector<16x64xf32>
    %379 = arith.mulf %378, %377 : vector<16x64xf32>
    %cst_121 = arith.constant 1.000000e+00 : f32
    %380 = vector.broadcast %cst_121 : f32 to vector<16x64xf32>
    %381 = arith.addf %380, %379 : vector<16x64xf32>
    %cst_122 = arith.constant 1.000000e+00 : f32
    %382 = vector.broadcast %cst_122 : f32 to vector<16x64xf32>
    %383 = arith.divf %382, %381 : vector<16x64xf32>
    %cst_123 = arith.constant 1.06140542 : f32
    %384 = vector.broadcast %cst_123 : f32 to vector<16x64xf32>
    %385 = arith.mulf %383, %384 : vector<16x64xf32>
    %cst_124 = arith.constant -1.45315206 : f32
    %386 = vector.broadcast %cst_124 : f32 to vector<16x64xf32>
    %387 = arith.addf %386, %385 : vector<16x64xf32>
    %388 = arith.mulf %383, %387 : vector<16x64xf32>
    %cst_125 = arith.constant 1.42141378 : f32
    %389 = vector.broadcast %cst_125 : f32 to vector<16x64xf32>
    %390 = arith.addf %389, %388 : vector<16x64xf32>
    %391 = arith.mulf %383, %390 : vector<16x64xf32>
    %cst_126 = arith.constant -0.284496725 : f32
    %392 = vector.broadcast %cst_126 : f32 to vector<16x64xf32>
    %393 = arith.addf %392, %391 : vector<16x64xf32>
    %394 = arith.mulf %383, %393 : vector<16x64xf32>
    %cst_127 = arith.constant 0.254829586 : f32
    %395 = vector.broadcast %cst_127 : f32 to vector<16x64xf32>
    %396 = arith.addf %395, %394 : vector<16x64xf32>
    %397 = arith.mulf %383, %396 : vector<16x64xf32>
    %398 = arith.mulf %377, %377 : vector<16x64xf32>
    %cst_128 = arith.constant 0.000000e+00 : f32
    %399 = vector.broadcast %cst_128 : f32 to vector<16x64xf32>
    %400 = arith.subf %399, %398 : vector<16x64xf32>
    %401 = math.exp %400 : vector<16x64xf32>
    %402 = arith.mulf %397, %401 : vector<16x64xf32>
    %cst_129 = arith.constant 1.000000e+00 : f32
    %403 = vector.broadcast %cst_129 : f32 to vector<16x64xf32>
    %404 = arith.subf %403, %402 : vector<16x64xf32>
    %cst_130 = arith.constant 0.000000e+00 : f32
    %405 = vector.broadcast %cst_130 : f32 to vector<16x64xf32>
    %406 = arith.cmpf olt, %376, %405 : vector<16x64xf32>
    %cst_131 = arith.constant 0.000000e+00 : f32
    %407 = vector.broadcast %cst_131 : f32 to vector<16x64xf32>
    %408 = arith.subf %407, %404 : vector<16x64xf32>
    %409 = arith.select %406, %408, %404 : vector<16x64xi1>, vector<16x64xf32>
    %cst_132 = arith.constant 1.000000e+00 : f32
    %410 = vector.broadcast %cst_132 : f32 to vector<16x64xf32>
    %411 = arith.addf %410, %409 : vector<16x64xf32>
    %412 = arith.mulf %374, %411 : vector<16x64xf32>
    %413 = arith.truncf %412 : vector<16x64xf32> to vector<16x64xbf16>
    %cst_133 = arith.constant dense<0.000000e+00> : vector<16x32xf32>
    %414 = tpu.matmul %413, %345, %cst_133 {dimension_numbers = #tpu.dot_dimension_numbers<[1], [0], [0], [1], [0, 0, 1, 1], [], []>} : vector<16x64xbf16>, vector<64x32xbf16>, vector<16x32xf32> -> vector<16x32xf32>
    %415 = vector.broadcast %346 : vector<1x32xf32> to vector<16x32xf32>
    %416 = arith.addf %414, %415 : vector<16x32xf32>
    %417 = arith.addf %338, %416 : vector<16x32xf32>
    %418 = vector.shape_cast %417 : vector<16x32xf32> to vector<2x8x32xf32>
    %c0_134 = arith.constant 0 : index
    %c0_135 = arith.constant 0 : index
    %c0_136 = arith.constant 0 : index
    %419 = vector.load %arg17[%c0_134, %c0_135, %c0_136] : memref<2x8x32xf32, #tpu.memory_space<vmem>>, vector<2x8x32xf32>
    tpu.vector_store %arg17[%c0_134, %c0_135, %c0_136], %418 {strides = array<i32>} : memref<2x8x32xf32, #tpu.memory_space<vmem>>, vector<2x8x32xf32>,
    %420 = vector.shape_cast %200 : vector<16x32xf32> to vector<2x8x32xf32>
    %c0_137 = arith.constant 0 : index
    %c0_138 = arith.constant 0 : index
    %c0_139 = arith.constant 0 : index
    %421 = vector.load %arg18[%c0_137, %c0_138, %c0_139] : memref<2x8x32xf32, #tpu.memory_space<vmem>>, vector<2x8x32xf32>
    tpu.vector_store %arg18[%c0_137, %c0_138, %c0_139], %420 {strides = array<i32>} : memref<2x8x32xf32, #tpu.memory_space<vmem>>, vector<2x8x32xf32>,
    %c1_i32 = arith.constant 1 : i32
    %422 = arith.cmpi eq, %arg1, %c1_i32 : i32
    %423 = arith.extui %422 : i1 to i32
    %c0_i32_140 = arith.constant 0 : i32
    %424 = arith.cmpi ne, %423, %c0_i32_140 : i32
    scf.if %424 {
      %425 = vector.shape_cast %417 : vector<16x32xf32> to vector<2x8x32xf32>
      %c0_141 = arith.constant 0 : index
      %c0_142 = arith.constant 0 : index
      %c0_143 = arith.constant 0 : index
      %426 = vector.load %arg16[%c0_141, %c0_142, %c0_143] : memref<2x8x32xf32, #tpu.memory_space<vmem>>, vector<2x8x32xf32>
      tpu.vector_store %arg16[%c0_141, %c0_142, %c0_143], %425 {strides = array<i32>} : memref<2x8x32xf32, #tpu.memory_space<vmem>>, vector<2x8x32xf32>,
    } else {
    }
    return
  }
  func.func @transform_0(%arg0: i32, %arg1: i32) -> (i32, i32, i32) {
    %c0_i32 = arith.constant 0 : i32
    %c0_i32_0 = arith.constant 0 : i32
    %c0_i32_1 = arith.constant 0 : i32
    return %arg0, %c0_i32, %c0_i32_0 : i32, i32, i32
  }
  func.func @transform_1(%arg0: i32, %arg1: i32) -> (i32, i32, i32) {
    %c0_i32 = arith.constant 0 : i32
    %c0_i32_0 = arith.constant 0 : i32
    %c0_i32_1 = arith.constant 0 : i32
    return %arg0, %c0_i32, %c0_i32_0 : i32, i32, i32
  }
  func.func @transform_2(%arg0: i32, %arg1: i32) -> (i32, i32, i32) {
    %c0_i32 = arith.constant 0 : i32
    %c0_i32_0 = arith.constant 0 : i32
    %c0_i32_1 = arith.constant 0 : i32
    %c0_i32_2 = arith.constant 0 : i32
    return %c0_i32, %c0_i32_0, %c0_i32_1 : i32, i32, i32
  }
  func.func @transform_3(%arg0: i32, %arg1: i32) -> (i32, i32, i32) {
    %c0_i32 = arith.constant 0 : i32
    %c0_i32_0 = arith.constant 0 : i32
    %c0_i32_1 = arith.constant 0 : i32
    return %arg1, %c0_i32, %c0_i32_0 : i32, i32, i32
  }
  func.func @transform_4(%arg0: i32, %arg1: i32) -> (i32, i32, i32) {
    %c0_i32 = arith.constant 0 : i32
    %c0_i32_0 = arith.constant 0 : i32
    %c0_i32_1 = arith.constant 0 : i32
    return %arg1, %c0_i32, %c0_i32_0 : i32, i32, i32
  }
  func.func @transform_5(%arg0: i32, %arg1: i32) -> (i32, i32, i32) {
    %c0_i32 = arith.constant 0 : i32
    %c0_i32_0 = arith.constant 0 : i32
    %c0_i32_1 = arith.constant 0 : i32
    return %arg1, %c0_i32, %c0_i32_0 : i32, i32, i32
  }
  func.func @transform_6(%arg0: i32, %arg1: i32) -> (i32, i32, i32) {
    %c0_i32 = arith.constant 0 : i32
    %c0_i32_0 = arith.constant 0 : i32
    %c0_i32_1 = arith.constant 0 : i32
    return %arg1, %c0_i32, %c0_i32_0 : i32, i32, i32
  }
  func.func @transform_7(%arg0: i32, %arg1: i32) -> (i32, i32, i32) {
    %c0_i32 = arith.constant 0 : i32
    %c0_i32_0 = arith.constant 0 : i32
    %c0_i32_1 = arith.constant 0 : i32
    return %arg1, %c0_i32, %c0_i32_0 : i32, i32, i32
  }
  func.func @transform_8(%arg0: i32, %arg1: i32) -> (i32, i32, i32) {
    %c0_i32 = arith.constant 0 : i32
    %c0_i32_0 = arith.constant 0 : i32
    %c0_i32_1 = arith.constant 0 : i32
    return %arg1, %c0_i32, %c0_i32_0 : i32, i32, i32
  }
  func.func @transform_9(%arg0: i32, %arg1: i32) -> (i32, i32, i32) {
    %c0_i32 = arith.constant 0 : i32
    %c0_i32_0 = arith.constant 0 : i32
    %c0_i32_1 = arith.constant 0 : i32
    return %arg1, %c0_i32, %c0_i32_0 : i32, i32, i32
  }
  func.func @transform_10(%arg0: i32, %arg1: i32) -> (i32, i32, i32) {
    %c0_i32 = arith.constant 0 : i32
    %c0_i32_0 = arith.constant 0 : i32
    %c0_i32_1 = arith.constant 0 : i32
    return %arg1, %c0_i32, %c0_i32_0 : i32, i32, i32
  }
  func.func @transform_11(%arg0: i32, %arg1: i32) -> (i32, i32, i32) {
    %c0_i32 = arith.constant 0 : i32
    %c0_i32_0 = arith.constant 0 : i32
    %c0_i32_1 = arith.constant 0 : i32
    return %arg1, %c0_i32, %c0_i32_0 : i32, i32, i32
  }
  func.func @transform_12(%arg0: i32, %arg1: i32) -> (i32, i32, i32) {
    %c0_i32 = arith.constant 0 : i32
    %c0_i32_0 = arith.constant 0 : i32
    %c0_i32_1 = arith.constant 0 : i32
    return %arg1, %c0_i32, %c0_i32_0 : i32, i32, i32
  }
  func.func @transform_13(%arg0: i32, %arg1: i32) -> (i32, i32, i32) {
    %c0_i32 = arith.constant 0 : i32
    %c0_i32_0 = arith.constant 0 : i32
    %c0_i32_1 = arith.constant 0 : i32
    return %arg1, %c0_i32, %c0_i32_0 : i32, i32, i32
  }
  func.func @transform_14(%arg0: i32, %arg1: i32) -> (i32, i32, i32) {
    %c0_i32 = arith.constant 0 : i32
    %c0_i32_0 = arith.constant 0 : i32
    %c0_i32_1 = arith.constant 0 : i32
    return %arg0, %c0_i32, %c0_i32_0 : i32, i32, i32
  }
}

</mosaic_0001>

<llo_original>
// kernel: _lambda_.1
$region0: #{_lambda_.1}
  #allocation0 [shape = 'u32[]', space=smem, size = 0x4, offset = 0x4, fixed_abs, tag = 'smem constant byte address 0x4 - core index']
  #allocation1 [shape = 'u32[72,128]{1,0:T(1,128)}', space=vmem, size = 0x9000, scoped, tag = 'internal scratch']
  #allocation2 [shape = 'f32[2,8,32]{2,1,0:T(8,128)}', space=vmem, size = 0x2000, scoped, tag = 'scratch operand']
  #allocation3 [shape = 'f32[2,8,32]{2,1,0:T(8,128)}', space=vmem, size = 0x2000, scoped, tag = 'scratch operand']
  %s0 = inlined_call_operand.hbm [shape: f32[2,8,32], index: 0, kind: input, shape index: {}]
  %s1 = inlined_call_operand.hbm [shape: f32[2,8,32], index: 1, kind: input, shape index: {}]
  %s2 = inlined_call_operand.hbm [shape: f32[1,8,32], index: 2, kind: input, shape index: {}]
  %s3 = inlined_call_operand.vmem [shape: f32[2,14,32], index: 3, kind: input, shape index: {}]
  %s4 = inlined_call_operand.vmem [shape: f32[2,2,64], index: 4, kind: input, shape index: {}]
  %s5 = inlined_call_operand.vmem [shape: bf16[2,32,96], index: 5, kind: input, shape index: {}]
  %s6 = inlined_call_operand.vmem [shape: bf16[2,32,32], index: 6, kind: input, shape index: {}]
  %s7 = inlined_call_operand.vmem [shape: bf16[2,32,64], index: 7, kind: input, shape index: {}]
  %s8 = inlined_call_operand.vmem [shape: bf16[2,64,32], index: 8, kind: input, shape index: {}]
  %s9 = inlined_call_operand.vmem [shape: bf16[2,32,32], index: 9, kind: input, shape index: {}]
  %s10 = inlined_call_operand.vmem [shape: bf16[2,32,64], index: 10, kind: input, shape index: {}]
  %s11 = inlined_call_operand.hbm [shape: bf16[2,32,32], index: 11, kind: input, shape index: {}]
  %s12 = inlined_call_operand.vmem [shape: bf16[2,32,64], index: 12, kind: input, shape index: {}]
  %s13 = inlined_call_operand.vmem [shape: bf16[2,64,32], index: 13, kind: input, shape index: {}]
  %s14 = inlined_call_operand.hbm [shape: f32[2,8,32], index: 14, kind: output, shape index: {}]
  %s15 = sld [smem:[#allocation0]]
  $region113: #{_lambda_.1} parent=0
    _
  %s17 = ssub.s32 1, %s15
  %s18 = scalar_select 0, %s17, %s15
  $region1: #{_lambda_.1} parent=0
    #allocation4 [shape = 'u8[8192]{0}', space=vmem, size = 0x2000, scoped, tag = 'input window, operand 0, single buffered']
    #allocation5 [shape = 's32[2]{0}', space=sflag, size = 0x8, scoped, tag = 'scoped memory for _lambda_.1']
    #allocation6 [shape = 's32[2]{0}', space=sflag, size = 0x8, scoped, tag = 'scoped memory for _lambda_.1']
    #allocation7 [shape = 'u8[8192]{0}', space=vmem, size = 0x2000, scoped, tag = 'input window, operand 1, single buffered']
    #allocation8 [shape = 's32[1]{0}', space=sflag, size = 0x4, scoped, tag = 'scoped memory for _lambda_.1']
    #allocation9 [shape = 'u8[4096]{0}', space=vmem, size = 0x1000, scoped, tag = 'input window, operand 2, single buffered']
    #allocation10 [shape = 'u8[16384]{0}', space=vmem, size = 0x4000, scoped, tag = 'input window, operand 11']
    #allocation11 [shape = 's32[2]{0}', space=sflag, size = 0x8, scoped, tag = 'scoped memory for _lambda_.1']
    #allocation12 [shape = 'u8[8192]{0}', space=vmem, size = 0x2000, scoped, tag = 'output window, operand 0, single buffered']
    %19 = vsyncpa [#allocation5], 0
    %20 = vsyncpa [#allocation8], 0
    %21 = vsyncpa [#allocation11], 0
    %s22 = scalar_lea.sflag [#allocation11], 1
    %23 = vsyncpa %s22, 0
    %24 = vsyncpa [#allocation6], 0
    loop: start=0, step=1, limit=4
    $region2: #{_lambda_.1} parent=1 // loop_pre_header
      _
    $region3: #{_lambda_.1} parent=1 // loop_header
      %s26 = sphi 0, %s30
      %p27 = scmp.ge.s32.totalorder %s26, 4
      %s33 = sphi 0, %s45
      %s34 = sphi 0, %s41
      %s35 = sphi 0, %s33
      %s36 = sphi 0, %s34
      %s37 = sphi 0, %s35
      %s38 = sphi 0, %s36
      %s48 = sphi 0, %s50
      %s51 = sphi 0, %s48
      %s52 = sphi 0, %s51
      %s68 = sphi 0, %s52
      %s74 = sphi 0, %s76
      %s77 = sphi 0, %s74
      %s78 = sphi 0, %s77
      %s94 = sphi 0, %s78
      %s98 = sphi 0, %s98
      %s100 = sphi 0, %s98
      %s101 = sphi 0, %s100
      %s115 = sphi 0, %s101
      %s121 = sphi 0, %s123
      %s124 = sphi 0, %s121
      %s125 = sphi 0, %s124
      %s141 = sphi 0, %s125
      %s147 = sphi 0, %s149
      %s150 = sphi 0, %s147
      %s151 = sphi 0, %s150
      %s167 = sphi 0, %s151
      %s173 = sphi 0, %s175
      %s176 = sphi 0, %s173
      %s177 = sphi 0, %s176
      %s193 = sphi 0, %s177
      %s199 = sphi 0, %s201
      %s202 = sphi 0, %s199
      %s203 = sphi 0, %s202
      %s219 = sphi 0, %s203
      %s225 = sphi 0, %s227
      %s228 = sphi 0, %s225
      %s229 = sphi 0, %s228
      %s245 = sphi 0, %s229
      %s251 = sphi 0, %s253
      %s254 = sphi 0, %s251
      %s255 = sphi 0, %s254
      %s271 = sphi 0, %s255
      %s277 = sphi 0, %s279
      %s280 = sphi 0, %s277
      %s281 = sphi 0, %s280
      %s297 = sphi 0, %s281
      %s303 = sphi 0, %s305
      %s306 = sphi 0, %s303
      %s307 = sphi 0, %s306
      %s323 = sphi 0, %s307
      %s329 = sphi 0, %s331
      %s332 = sphi 0, %s329
      %s333 = sphi 0, %s332
      %s349 = sphi 0, %s333
      %s355 = sphi 0, %s357
      %s358 = sphi 0, %s355
      %s359 = sphi 0, %s358
      %s375 = sphi 0, %s359
      %s381 = sphi 0, %s383
      %s384 = sphi 0, %s381
      %s385 = sphi 0, %s384
      %s401 = sphi 0, %s385
      %s407 = sphi 0, %s409
      %s410 = sphi 0, %s407
      %s411 = sphi 0, %s410
      %s427 = sphi 0, %s411
    $region4: #{_lambda_.1} parent=1 // loop_header_branch
      %29 = sbr.rel (%p27) target = $region8
    $region5: #{_lambda_.1} parent=1 // loop_body
      %s31 = ssub.s32 %s26, 1
      %s32 = ssub.s32 %s26, 2
      %s39 = sadd.s32 1, %s34
      %p40 = scmp.ge.s32.totalorder %s39, 2
      %s41 = scalar_select %p40, 0, %s39
      %s42 = sadd.s32 1, %s33
      %s43 = scalar_select %p40, %s42, %s33
      %p44 = scmp.ge.s32.totalorder %s43, 1
      %s45 = scalar_select %p44, 0, %s43
      %s46 = ssub.s32 %s33, %s45
      %p47 = scmp.eq.s32.totalorder %s46, 0
      %s49 = sadd.s32 %s48, 1
      %s50 = scalar_select %p47, %s48, %s49
      %p53 = pneg %p47
      %p54 = scmp.eq.s32.totalorder %s26, 1
      %p55 = por %p53, %p54
      %p56 = scmp.ne.s32.totalorder %s48, %s51
      %p57 = scmp.eq.s32.totalorder %s26, 0
      %p58 = por %p56, %p57
      %p59 = scmp.ne.s32.totalorder %s48, %s51
      %p60 = scmp.eq.s32.totalorder %s31, 1
      %p61 = por %p59, %p60
      %p62 = scmp.ne.s32.totalorder %s51, %s52
      %p63 = scmp.eq.s32.totalorder %s31, 0
      %p64 = por %p62, %p63
      %p65 = scmp.ne.s32.totalorder %s51, %s52
      %p66 = scmp.eq.s32.totalorder %s32, 1
      %p67 = por %p65, %p66
      %p69 = scmp.ne.s32.totalorder %s52, %s68
      %p70 = scmp.eq.s32.totalorder %s32, 0
      %p71 = por %p69, %p70
      %s72 = ssub.s32 %s33, %s45
      %p73 = scmp.eq.s32.totalorder %s72, 0
      %s75 = sadd.s32 %s74, 1
      %s76 = scalar_select %p73, %s74, %s75
      %p79 = pneg %p73
      %p80 = scmp.eq.s32.totalorder %s26, 1
      %p81 = por %p79, %p80
      %p82 = scmp.ne.s32.totalorder %s74, %s77
      %p83 = scmp.eq.s32.totalorder %s26, 0
      %p84 = por %p82, %p83
      %p85 = scmp.ne.s32.totalorder %s74, %s77
      %p86 = scmp.eq.s32.totalorder %s31, 1
      %p87 = por %p85, %p86
      %p88 = scmp.ne.s32.totalorder %s77, %s78
      %p89 = scmp.eq.s32.totalorder %s31, 0
      %p90 = por %p88, %p89
      %p91 = scmp.ne.s32.totalorder %s77, %s78
      %p92 = scmp.eq.s32.totalorder %s32, 1
      %p93 = por %p91, %p92
      %p95 = scmp.ne.s32.totalorder %s78, %s94
      %p96 = scmp.eq.s32.totalorder %s32, 0
      %p97 = por %p95, %p96
      %s99 = sadd.s32 %s98, 1
      %p102 = scmp.eq.s32.totalorder %s26, 1
      %p103 = scmp.ne.s32.totalorder %s98, %s100
      %p104 = scmp.eq.s32.totalorder %s26, 0
      %p105 = por %p103, %p104
      %p106 = scmp.ne.s32.totalorder %s98, %s100
      %p107 = scmp.eq.s32.totalorder %s31, 1
      %p108 = por %p106, %p107
      %p109 = scmp.ne.s32.totalorder %s100, %s101
      %p110 = scmp.eq.s32.totalorder %s31, 0
      %p111 = por %p109, %p110
      %p112 = scmp.ne.s32.totalorder %s100, %s101
      %p113 = scmp.eq.s32.totalorder %s32, 1
      %p114 = por %p112, %p113
      %p116 = scmp.ne.s32.totalorder %s101, %s115
      %p117 = scmp.eq.s32.totalorder %s32, 0
      %p118 = por %p116, %p117
      %s119 = ssub.s32 %s34, %s41
      %p120 = scmp.eq.s32.totalorder %s119, 0
      %s122 = sadd.s32 %s121, 1
      %s123 = scalar_select %p120, %s121, %s122
      %p126 = pneg %p120
      %p127 = scmp.eq.s32.totalorder %s26, 1
      %p128 = por %p126, %p127
      %p129 = scmp.ne.s32.totalorder %s121, %s124
      %p130 = scmp.eq.s32.totalorder %s26, 0
      %p131 = por %p129, %p130
      %p132 = scmp.ne.s32.totalorder %s121, %s124
      %p133 = scmp.eq.s32.totalorder %s31, 1
      %p134 = por %p132, %p133
      %p135 = scmp.ne.s32.totalorder %s124, %s125
      %p136 = scmp.eq.s32.totalorder %s31, 0
      %p137 = por %p135, %p136
      %p138 = scmp.ne.s32.totalorder %s124, %s125
      %p139 = scmp.eq.s32.totalorder %s32, 1
      %p140 = por %p138, %p139
      %p142 = scmp.ne.s32.totalorder %s125, %s141
      %p143 = scmp.eq.s32.totalorder %s32, 0
      %p144 = por %p142, %p143
      %s145 = ssub.s32 %s34, %s41
      %p146 = scmp.eq.s32.totalorder %s145, 0
      %s148 = sadd.s32 %s147, 1
      %s149 = scalar_select %p146, %s147, %s148
      %p152 = pneg %p146
      %p153 = scmp.eq.s32.totalorder %s26, 1
      %p154 = por %p152, %p153
      %p155 = scmp.ne.s32.totalorder %s147, %s150
      %p156 = scmp.eq.s32.totalorder %s26, 0
      %p157 = por %p155, %p156
      %p158 = scmp.ne.s32.totalorder %s147, %s150
      %p159 = scmp.eq.s32.totalorder %s31, 1
      %p160 = por %p158, %p159
      %p161 = scmp.ne.s32.totalorder %s150, %s151
      %p162 = scmp.eq.s32.totalorder %s31, 0
      %p163 = por %p161, %p162
      %p164 = scmp.ne.s32.totalorder %s150, %s151
      %p165 = scmp.eq.s32.totalorder %s32, 1
      %p166 = por %p164, %p165
      %p168 = scmp.ne.s32.totalorder %s151, %s167
      %p169 = scmp.eq.s32.totalorder %s32, 0
      %p170 = por %p168, %p169
      %s171 = ssub.s32 %s34, %s41
      %p172 = scmp.eq.s32.totalorder %s171, 0
      %s174 = sadd.s32 %s173, 1
      %s175 = scalar_select %p172, %s173, %s174
      %p178 = pneg %p172
      %p179 = scmp.eq.s32.totalorder %s26, 1
      %p180 = por %p178, %p179
      %p181 = scmp.ne.s32.totalorder %s173, %s176
      %p182 = scmp.eq.s32.totalorder %s26, 0
      %p183 = por %p181, %p182
      %p184 = scmp.ne.s32.totalorder %s173, %s176
      %p185 = scmp.eq.s32.totalorder %s31, 1
      %p186 = por %p184, %p185
      %p187 = scmp.ne.s32.totalorder %s176, %s177
      %p188 = scmp.eq.s32.totalorder %s31, 0
      %p189 = por %p187, %p188
      %p190 = scmp.ne.s32.totalorder %s176, %s177
      %p191 = scmp.eq.s32.totalorder %s32, 1
      %p192 = por %p190, %p191
      %p194 = scmp.ne.s32.totalorder %s177, %s193
      %p195 = scmp.eq.s32.totalorder %s32, 0
      %p196 = por %p194, %p195
      %s197 = ssub.s32 %s34, %s41
      %p198 = scmp.eq.s32.totalorder %s197, 0
      %s200 = sadd.s32 %s199, 1
      %s201 = scalar_select %p198, %s199, %s200
      %p204 = pneg %p198
      %p205 = scmp.eq.s32.totalorder %s26, 1
      %p206 = por %p204, %p205
      %p207 = scmp.ne.s32.totalorder %s199, %s202
      %p208 = scmp.eq.s32.totalorder %s26, 0
      %p209 = por %p207, %p208
      %p210 = scmp.ne.s32.totalorder %s199, %s202
      %p211 = scmp.eq.s32.totalorder %s31, 1
      %p212 = por %p210, %p211
      %p213 = scmp.ne.s32.totalorder %s202, %s203
      %p214 = scmp.eq.s32.totalorder %s31, 0
      %p215 = por %p213, %p214
      %p216 = scmp.ne.s32.totalorder %s202, %s203
      %p217 = scmp.eq.s32.totalorder %s32, 1
      %p218 = por %p216, %p217
      %p220 = scmp.ne.s32.totalorder %s203, %s219
      %p221 = scmp.eq.s32.totalorder %s32, 0
      %p222 = por %p220, %p221
      %s223 = ssub.s32 %s34, %s41
      %p224 = scmp.eq.s32.totalorder %s223, 0
      %s226 = sadd.s32 %s225, 1
      %s227 = scalar_select %p224, %s225, %s226
      %p230 = pneg %p224
      %p231 = scmp.eq.s32.totalorder %s26, 1
      %p232 = por %p230, %p231
      %p233 = scmp.ne.s32.totalorder %s225, %s228
      %p234 = scmp.eq.s32.totalorder %s26, 0
      %p235 = por %p233, %p234
      %p236 = scmp.ne.s32.totalorder %s225, %s228
      %p237 = scmp.eq.s32.totalorder %s31, 1
      %p238 = por %p236, %p237
      %p239 = scmp.ne.s32.totalorder %s228, %s229
      %p240 = scmp.eq.s32.totalorder %s31, 0
      %p241 = por %p239, %p240
      %p242 = scmp.ne.s32.totalorder %s228, %s229
      %p243 = scmp.eq.s32.totalorder %s32, 1
      %p244 = por %p242, %p243
      %p246 = scmp.ne.s32.totalorder %s229, %s245
      %p247 = scmp.eq.s32.totalorder %s32, 0
      %p248 = por %p246, %p247
      %s249 = ssub.s32 %s34, %s41
      %p250 = scmp.eq.s32.totalorder %s249, 0
      %s252 = sadd.s32 %s251, 1
      %s253 = scalar_select %p250, %s251, %s252
      %p256 = pneg %p250
      %p257 = scmp.eq.s32.totalorder %s26, 1
      %p258 = por %p256, %p257
      %p259 = scmp.ne.s32.totalorder %s251, %s254
      %p260 = scmp.eq.s32.totalorder %s26, 0
      %p261 = por %p259, %p260
      %p262 = scmp.ne.s32.totalorder %s251, %s254
      %p263 = scmp.eq.s32.totalorder %s31, 1
      %p264 = por %p262, %p263
      %p265 = scmp.ne.s32.totalorder %s254, %s255
      %p266 = scmp.eq.s32.totalorder %s31, 0
      %p267 = por %p265, %p266
      %p268 = scmp.ne.s32.totalorder %s254, %s255
      %p269 = scmp.eq.s32.totalorder %s32, 1
      %p270 = por %p268, %p269
      %p272 = scmp.ne.s32.totalorder %s255, %s271
      %p273 = scmp.eq.s32.totalorder %s32, 0
      %p274 = por %p272, %p273
      %s275 = ssub.s32 %s34, %s41
      %p276 = scmp.eq.s32.totalorder %s275, 0
      %s278 = sadd.s32 %s277, 1
      %s279 = scalar_select %p276, %s277, %s278
      %p282 = pneg %p276
      %p283 = scmp.eq.s32.totalorder %s26, 1
      %p284 = por %p282, %p283
      %p285 = scmp.ne.s32.totalorder %s277, %s280
      %p286 = scmp.eq.s32.totalorder %s26, 0
      %p287 = por %p285, %p286
      %p288 = scmp.ne.s32.totalorder %s277, %s280
      %p289 = scmp.eq.s32.totalorder %s31, 1
      %p290 = por %p288, %p289
      %p291 = scmp.ne.s32.totalorder %s280, %s281
      %p292 = scmp.eq.s32.totalorder %s31, 0
      %p293 = por %p291, %p292
      %p294 = scmp.ne.s32.totalorder %s280, %s281
      %p295 = scmp.eq.s32.totalorder %s32, 1
      %p296 = por %p294, %p295
      %p298 = scmp.ne.s32.totalorder %s281, %s297
      %p299 = scmp.eq.s32.totalorder %s32, 0
      %p300 = por %p298, %p299
      %s301 = ssub.s32 %s34, %s41
      %p302 = scmp.eq.s32.totalorder %s301, 0
      %s304 = sadd.s32 %s303, 1
      %s305 = scalar_select %p302, %s303, %s304
      %p308 = pneg %p302
      %p309 = scmp.eq.s32.totalorder %s26, 1
      %p310 = por %p308, %p309
      %p311 = scmp.ne.s32.totalorder %s303, %s306
      %p312 = scmp.eq.s32.totalorder %s26, 0
      %p313 = por %p311, %p312
      %p314 = scmp.ne.s32.totalorder %s303, %s306
      %p315 = scmp.eq.s32.totalorder %s31, 1
      %p316 = por %p314, %p315
      %p317 = scmp.ne.s32.totalorder %s306, %s307
      %p318 = scmp.eq.s32.totalorder %s31, 0
      %p319 = por %p317, %p318
      %p320 = scmp.ne.s32.totalorder %s306, %s307
      %p321 = scmp.eq.s32.totalorder %s32, 1
      %p322 = por %p320, %p321
      %p324 = scmp.ne.s32.totalorder %s307, %s323
      %p325 = scmp.eq.s32.totalorder %s32, 0
      %p326 = por %p324, %p325
      %s327 = ssub.s32 %s34, %s41
      %p328 = scmp.eq.s32.totalorder %s327, 0
      %s330 = sadd.s32 %s329, 1
      %s331 = scalar_select %p328, %s329, %s330
      %p334 = pneg %p328
      %p335 = scmp.eq.s32.totalorder %s26, 1
      %p336 = por %p334, %p335
      %p337 = scmp.ne.s32.totalorder %s329, %s332
      %p338 = scmp.eq.s32.totalorder %s26, 0
      %p339 = por %p337, %p338
      %p340 = scmp.ne.s32.totalorder %s329, %s332
      %p341 = scmp.eq.s32.totalorder %s31, 1
      %p342 = por %p340, %p341
      %p343 = scmp.ne.s32.totalorder %s332, %s333
      %p344 = scmp.eq.s32.totalorder %s31, 0
      %p345 = por %p343, %p344
      %p346 = scmp.ne.s32.totalorder %s332, %s333
      %p347 = scmp.eq.s32.totalorder %s32, 1
      %p348 = por %p346, %p347
      %p350 = scmp.ne.s32.totalorder %s333, %s349
      %p351 = scmp.eq.s32.totalorder %s32, 0
      %p352 = por %p350, %p351
      %s353 = ssub.s32 %s34, %s41
      %p354 = scmp.eq.s32.totalorder %s353, 0
      %s356 = sadd.s32 %s355, 1
      %s357 = scalar_select %p354, %s355, %s356
      %p360 = pneg %p354
      %p361 = scmp.eq.s32.totalorder %s26, 1
      %p362 = por %p360, %p361
      %p363 = scmp.ne.s32.totalorder %s355, %s358
      %p364 = scmp.eq.s32.totalorder %s26, 0
      %p365 = por %p363, %p364
      %p366 = scmp.ne.s32.totalorder %s355, %s358
      %p367 = scmp.eq.s32.totalorder %s31, 1
      %p368 = por %p366, %p367
      %p369 = scmp.ne.s32.totalorder %s358, %s359
      %p370 = scmp.eq.s32.totalorder %s31, 0
      %p371 = por %p369, %p370
      %p372 = scmp.ne.s32.totalorder %s358, %s359
      %p373 = scmp.eq.s32.totalorder %s32, 1
      %p374 = por %p372, %p373
      %p376 = scmp.ne.s32.totalorder %s359, %s375
      %p377 = scmp.eq.s32.totalorder %s32, 0
      %p378 = por %p376, %p377
      %s379 = ssub.s32 %s34, %s41
      %p380 = scmp.eq.s32.totalorder %s379, 0
      %s382 = sadd.s32 %s381, 1
      %s383 = scalar_select %p380, %s381, %s382
      %p386 = pneg %p380
      %p387 = scmp.eq.s32.totalorder %s26, 1
      %p388 = por %p386, %p387
      %p389 = scmp.ne.s32.totalorder %s381, %s384
      %p390 = scmp.eq.s32.totalorder %s26, 0
      %p391 = por %p389, %p390
      %p392 = scmp.ne.s32.totalorder %s381, %s384
      %p393 = scmp.eq.s32.totalorder %s31, 1
      %p394 = por %p392, %p393
      %p395 = scmp.ne.s32.totalorder %s384, %s385
      %p396 = scmp.eq.s32.totalorder %s31, 0
      %p397 = por %p395, %p396
      %p398 = scmp.ne.s32.totalorder %s384, %s385
      %p399 = scmp.eq.s32.totalorder %s32, 1
      %p400 = por %p398, %p399
      %p402 = scmp.ne.s32.totalorder %s385, %s401
      %p403 = scmp.eq.s32.totalorder %s32, 0
      %p404 = por %p402, %p403
      %s405 = ssub.s32 %s33, %s45
      %p406 = scmp.eq.s32.totalorder %s405, 0
      %s408 = sadd.s32 %s407, 1
      %s409 = scalar_select %p406, %s407, %s408
      %p412 = pneg %p406
      %p413 = scmp.eq.s32.totalorder %s26, 1
      %p414 = por %p412, %p413
      %p415 = scmp.ne.s32.totalorder %s407, %s410
      %p416 = scmp.eq.s32.totalorder %s26, 0
      %p417 = por %p415, %p416
      %p418 = scmp.ne.s32.totalorder %s407, %s410
      %p419 = scmp.eq.s32.totalorder %s31, 1
      %p420 = por %p418, %p419
      %p421 = scmp.ne.s32.totalorder %s410, %s411
      %p422 = scmp.eq.s32.totalorder %s31, 0
      %p423 = por %p421, %p422
      %p424 = scmp.ne.s32.totalorder %s410, %s411
      %p425 = scmp.eq.s32.totalorder %s32, 1
      %p426 = por %p424, %p425
      %p428 = scmp.ne.s32.totalorder %s411, %s427
      %p429 = scmp.eq.s32.totalorder %s32, 0
      %p430 = por %p428, %p429
      %p431 = scmp.le.s32.totalorder 1, %s26
      %p432 = scmp.lt.s32.totalorder %s26, 3
      %p433 = pnand %p431, %p432
      %p434 = pneg %p433
      // Predicated region
      $region9: #{_lambda_.1} parent=5 // pred_check
        _
      $region10: #{_lambda_.1} parent=5 // pred_check_branch
        %436 = sbr.rel (%p433) target = $region12
      $region11: #{_lambda_.1} parent=5 // pred_region
        %s437 = ssub.s32 %s26, 1
        // Predicated region
        $region13: #{_lambda_.1} parent=11 // pred_check
          %p438 = pneg %p64
        $region14: #{_lambda_.1} parent=11 // pred_check_branch
          %440 = sbr.rel (%p438) target = $region16
        $region15: #{_lambda_.1} parent=11 // pred_region
          %s441 = smul.u32 2, %s35
          %443 = vsyncadd [#allocation5], 0
          %s444 = smul.addr %s441, 8
          %s445 = scalar_lea.hbm %s0, %s444
          %s446 = sshll.u32 %s445, 4
          %s447 = int_to_ptr.hbm [resolvable:$true] %s446
          %s448 = sshll.u32 [#allocation4], 4
          %s449 = int_to_ptr.vmem [resolvable:$true] %s448
          %454 = dma.hbm_to_vmem [thread:$0]  %s447, 256, %s449, [#allocation5], 128, 128, 8
        $region16: #{_lambda_.1} parent=11 // pred_fallthru
          _
        // Predicated region
        $region17: #{_lambda_.1} parent=11 // pred_check
          %p455 = pneg %p90
        $region18: #{_lambda_.1} parent=11 // pred_check_branch
          %457 = sbr.rel (%p455) target = $region20
        $region19: #{_lambda_.1} parent=11 // pred_region
          %s458 = smul.u32 2, %s35
          %460 = vsyncadd [#allocation8], 0
          %s461 = smul.addr %s458, 8
          %s462 = scalar_lea.hbm %s1, %s461
          %s463 = sshll.u32 %s462, 4
          %s464 = int_to_ptr.hbm [resolvable:$true] %s463
          %s465 = sshll.u32 [#allocation7], 4
          %s466 = int_to_ptr.vmem [resolvable:$true] %s465
          %471 = dma.hbm_to_vmem [thread:$0]  %s464, 256, %s466, [#allocation8], 128, 128, 8
        $region20: #{_lambda_.1} parent=11 // pred_fallthru
          _
        // Predicated region
        $region21: #{_lambda_.1} parent=11 // pred_check
          %p472 = pneg %p111
        $region22: #{_lambda_.1} parent=11 // pred_check_branch
          %474 = sbr.rel (%p472) target = $region24
        $region23: #{_lambda_.1} parent=11 // pred_region
          %476 = vsyncadd [#allocation8], 0
          %s478 = sshll.u32 %s2, 4
          %s479 = int_to_ptr.hbm [resolvable:$true] %s478
          %s480 = sshll.u32 [#allocation9], 4
          %s481 = int_to_ptr.vmem [resolvable:$true] %s480
          %483 = dma.hbm_to_vmem [thread:$0]  %s479, 128, %s481, [#allocation8]
        $region24: #{_lambda_.1} parent=11 // pred_fallthru
          _
      $region12: #{_lambda_.1} parent=5 // pred_fallthru
        _
      %p484 = scmp.lt.s32.totalorder %s26, 2
      // Predicated region
      $region25: #{_lambda_.1} parent=5 // pred_check
        %p485 = pneg %p484
      $region26: #{_lambda_.1} parent=5 // pred_check_branch
        %487 = sbr.rel (%p485) target = $region28
      $region27: #{_lambda_.1} parent=5 // pred_region
        // Predicated region
        $region29: #{_lambda_.1} parent=27 // pred_check
          %p488 = pneg %p131
        $region30: #{_lambda_.1} parent=27 // pred_check_branch
          %490 = sbr.rel (%p488) target = $region32
        $region31: #{_lambda_.1} parent=27 // pred_region
          %p491 = scmp.lt.s32.totalorder %s34, 1
          %s492 = scalar_select %p491, %s34, 1
          %s493 = smul.addr %s492, 2
          %s494 = smul.addr %s493, 8
          %s495 = scalar_lea.vmem %s3, %s494
        $region32: #{_lambda_.1} parent=27 // pred_fallthru
          _
        // Predicated region
        $region33: #{_lambda_.1} parent=27 // pred_check
          %p496 = pneg %p157
        $region34: #{_lambda_.1} parent=27 // pred_check_branch
          %498 = sbr.rel (%p496) target = $region36
        $region35: #{_lambda_.1} parent=27 // pred_region
          %p499 = scmp.lt.s32.totalorder %s34, 1
          %s500 = scalar_select %p499, %s34, 1
          %s501 = smul.addr %s500, 2
          %s502 = scalar_lea.vmem %s4, %s501
        $region36: #{_lambda_.1} parent=27 // pred_fallthru
          _
        // Predicated region
        $region37: #{_lambda_.1} parent=27 // pred_check
          %p503 = pneg %p183
        $region38: #{_lambda_.1} parent=27 // pred_check_branch
          %505 = sbr.rel (%p503) target = $region40
        $region39: #{_lambda_.1} parent=27 // pred_region
          %p506 = scmp.lt.s32.totalorder %s34, 1
          %s507 = scalar_select %p506, %s34, 1
          %s508 = smul.addr %s507, 4
          %s509 = smul.addr %s508, 4
          %s510 = scalar_lea.vmem %s5, %s509
        $region40: #{_lambda_.1} parent=27 // pred_fallthru
          _
        // Predicated region
        $region41: #{_lambda_.1} parent=27 // pred_check
          %p511 = pneg %p209
        $region42: #{_lambda_.1} parent=27 // pred_check_branch
          %513 = sbr.rel (%p511) target = $region44
        $region43: #{_lambda_.1} parent=27 // pred_region
          %p514 = scmp.lt.s32.totalorder %s34, 1
          %s515 = scalar_select %p514, %s34, 1
          %s516 = smul.addr %s515, 4
          %s517 = smul.addr %s516, 4
          %s518 = scalar_lea.vmem %s6, %s517
        $region44: #{_lambda_.1} parent=27 // pred_fallthru
          _
        // Predicated region
        $region45: #{_lambda_.1} parent=27 // pred_check
          %p519 = pneg %p235
        $region46: #{_lambda_.1} parent=27 // pred_check_branch
          %521 = sbr.rel (%p519) target = $region48
        $region47: #{_lambda_.1} parent=27 // pred_region
          %p522 = scmp.lt.s32.totalorder %s34, 1
          %s523 = scalar_select %p522, %s34, 1
          %s524 = smul.addr %s523, 4
          %s525 = smul.addr %s524, 4
          %s526 = scalar_lea.vmem %s7, %s525
        $region48: #{_lambda_.1} parent=27 // pred_fallthru
          _
        // Predicated region
        $region49: #{_lambda_.1} parent=27 // pred_check
          %p527 = pneg %p261
        $region50: #{_lambda_.1} parent=27 // pred_check_branch
          %529 = sbr.rel (%p527) target = $region52
        $region51: #{_lambda_.1} parent=27 // pred_region
          %p530 = scmp.lt.s32.totalorder %s34, 1
          %s531 = scalar_select %p530, %s34, 1
          %s532 = smul.addr %s531, 8
          %s533 = smul.addr %s532, 4
          %s534 = scalar_lea.vmem %s8, %s533
        $region52: #{_lambda_.1} parent=27 // pred_fallthru
          _
        // Predicated region
        $region53: #{_lambda_.1} parent=27 // pred_check
          %p535 = pneg %p287
        $region54: #{_lambda_.1} parent=27 // pred_check_branch
          %537 = sbr.rel (%p535) target = $region56
        $region55: #{_lambda_.1} parent=27 // pred_region
          %p538 = scmp.lt.s32.totalorder %s34, 1
          %s539 = scalar_select %p538, %s34, 1
          %s540 = smul.addr %s539, 4
          %s541 = smul.addr %s540, 4
          %s542 = scalar_lea.vmem %s9, %s541
        $region56: #{_lambda_.1} parent=27 // pred_fallthru
          _
        // Predicated region
        $region57: #{_lambda_.1} parent=27 // pred_check
          %p543 = pneg %p313
        $region58: #{_lambda_.1} parent=27 // pred_check_branch
          %545 = sbr.rel (%p543) target = $region60
        $region59: #{_lambda_.1} parent=27 // pred_region
          %p546 = scmp.lt.s32.totalorder %s34, 1
          %s547 = scalar_select %p546, %s34, 1
          %s548 = smul.addr %s547, 4
          %s549 = smul.addr %s548, 4
          %s550 = scalar_lea.vmem %s10, %s549
        $region60: #{_lambda_.1} parent=27 // pred_fallthru
          _
        // Predicated region
        $region61: #{_lambda_.1} parent=27 // pred_check
          %p551 = pneg %p339
        $region62: #{_lambda_.1} parent=27 // pred_check_branch
          %553 = sbr.rel (%p551) target = $region64
        $region63: #{_lambda_.1} parent=27 // pred_region
          %s554 = sand.u32 %s329, 1
          %s555 = scalar_lea.sflag [#allocation11], %s554
          %s556 = sand.u32 %s329, 1
          %s557 = smul.addr %s556, 16
          %s558 = scalar_lea.vmem [#allocation10], %s557
          %560 = vsyncadd %s555, 0
          %s561 = smul.addr %s34, 4
          %s562 = smul.addr %s561, 4
          %s563 = scalar_lea.hbm %s11, %s562
          %s564 = sshll.u32 %s563, 4
          %s565 = int_to_ptr.hbm [resolvable:$true] %s564
          %s566 = sshll.u32 %s558, 4
          %s567 = int_to_ptr.vmem [resolvable:$true] %s566
          %572 = dma.hbm_to_vmem [thread:$0]  %s565, 256, %s567, %s555, 64, 64, 4
        $region64: #{_lambda_.1} parent=27 // pred_fallthru
          _
        // Predicated region
        $region65: #{_lambda_.1} parent=27 // pred_check
          %p573 = pneg %p365
        $region66: #{_lambda_.1} parent=27 // pred_check_branch
          %575 = sbr.rel (%p573) target = $region68
        $region67: #{_lambda_.1} parent=27 // pred_region
          %p576 = scmp.lt.s32.totalorder %s34, 1
          %s577 = scalar_select %p576, %s34, 1
          %s578 = smul.addr %s577, 4
          %s579 = smul.addr %s578, 4
          %s580 = scalar_lea.vmem %s12, %s579
        $region68: #{_lambda_.1} parent=27 // pred_fallthru
          _
        // Predicated region
        $region69: #{_lambda_.1} parent=27 // pred_check
          %p581 = pneg %p391
        $region70: #{_lambda_.1} parent=27 // pred_check_branch
          %583 = sbr.rel (%p581) target = $region72
        $region71: #{_lambda_.1} parent=27 // pred_region
          %p584 = scmp.lt.s32.totalorder %s34, 1
          %s585 = scalar_select %p584, %s34, 1
          %s586 = smul.addr %s585, 8
          %s587 = smul.addr %s586, 4
          %s588 = scalar_lea.vmem %s13, %s587
        $region72: #{_lambda_.1} parent=27 // pred_fallthru
          _
      $region28: #{_lambda_.1} parent=5 // pred_fallthru
        _
      %p589 = scmp.le.s32.totalorder 1, %s26
      %p590 = scmp.lt.s32.totalorder %s26, 3
      %p591 = pnand %p589, %p590
      %p592 = pneg %p591
      // Predicated region
      $region73: #{_lambda_.1} parent=5 // pred_check
        _
      $region74: #{_lambda_.1} parent=5 // pred_check_branch
        %594 = sbr.rel (%p591) target = $region76
      $region75: #{_lambda_.1} parent=5 // pred_region
        %s595 = ssub.s32 %s26, 1
        // Predicated region
        $region77: #{_lambda_.1} parent=75 // pred_check
          %p596 = pneg %p64
        $region78: #{_lambda_.1} parent=75 // pred_check_branch
          %598 = sbr.rel (%p596) target = $region80
        $region79: #{_lambda_.1} parent=75 // pred_region
          %600 = dma.done [#allocation5], 256
        $region80: #{_lambda_.1} parent=75 // pred_fallthru
          _
        // Predicated region
        $region81: #{_lambda_.1} parent=75 // pred_check
          %p601 = pneg %p90
        $region82: #{_lambda_.1} parent=75 // pred_check_branch
          %603 = sbr.rel (%p601) target = $region84
        $region83: #{_lambda_.1} parent=75 // pred_region
          %605 = dma.done [#allocation8], 256
        $region84: #{_lambda_.1} parent=75 // pred_fallthru
          _
        // Predicated region
        $region85: #{_lambda_.1} parent=75 // pred_check
          %p606 = pneg %p111
        $region86: #{_lambda_.1} parent=75 // pred_check_branch
          %608 = sbr.rel (%p606) target = $region88
        $region87: #{_lambda_.1} parent=75 // pred_region
          %610 = dma.done [#allocation8], 128
        $region88: #{_lambda_.1} parent=75 // pred_fallthru
          _
        %s611 = sand.u32 %s332, 1
        %s612 = scalar_lea.sflag [#allocation11], %s611
        %s613 = sand.u32 %s332, 1
        %s614 = smul.addr %s613, 16
        %s615 = scalar_lea.vmem [#allocation10], %s614
        // Predicated region
        $region89: #{_lambda_.1} parent=75 // pred_check
          %p616 = pneg %p345
        $region90: #{_lambda_.1} parent=75 // pred_check_branch
          %618 = sbr.rel (%p616) target = $region92
        $region91: #{_lambda_.1} parent=75 // pred_region
          %620 = dma.done %s612, 256
        $region92: #{_lambda_.1} parent=75 // pred_fallthru
          _
        %p621 = pneg %p64
        %p622 = pneg %p61
        %p623 = pneg %p90
        %p624 = pneg %p87
        %p625 = pneg %p111
        %p626 = pneg %p108
        %p627 = scmp.lt.s32.totalorder %s36, 1
        %s628 = scalar_select %p627, %s36, 1
        %s629 = smul.addr %s628, 2
        %s630 = smul.addr %s629, 8
        %s631 = scalar_lea.vmem %s3, %s630
        %p632 = pneg %p137
        %p633 = pneg %p134
        %p634 = scmp.lt.s32.totalorder %s36, 1
        %s635 = scalar_select %p634, %s36, 1
        %s636 = smul.addr %s635, 2
        %s637 = scalar_lea.vmem %s4, %s636
        %p638 = pneg %p163
        %p639 = pneg %p160
        %p640 = scmp.lt.s32.totalorder %s36, 1
        %s641 = scalar_select %p640, %s36, 1
        %s642 = smul.addr %s641, 4
        %s643 = smul.addr %s642, 4
        %s644 = scalar_lea.vmem %s5, %s643
        %p645 = pneg %p189
        %p646 = pneg %p186
        %p647 = scmp.lt.s32.totalorder %s36, 1
        %s648 = scalar_select %p647, %s36, 1
        %s649 = smul.addr %s648, 4
        %s650 = smul.addr %s649, 4
        %s651 = scalar_lea.vmem %s6, %s650
        %p652 = pneg %p215
        %p653 = pneg %p212
        %p654 = scmp.lt.s32.totalorder %s36, 1
        %s655 = scalar_select %p654, %s36, 1
        %s656 = smul.addr %s655, 4
        %s657 = smul.addr %s656, 4
        %s658 = scalar_lea.vmem %s7, %s657
        %p659 = pneg %p241
        %p660 = pneg %p238
        %p661 = scmp.lt.s32.totalorder %s36, 1
        %s662 = scalar_select %p661, %s36, 1
        %s663 = smul.addr %s662, 8
        %s664 = smul.addr %s663, 4
        %s665 = scalar_lea.vmem %s8, %s664
        %p666 = pneg %p267
        %p667 = pneg %p264
        %p668 = scmp.lt.s32.totalorder %s36, 1
        %s669 = scalar_select %p668, %s36, 1
        %s670 = smul.addr %s669, 4
        %s671 = smul.addr %s670, 4
        %s672 = scalar_lea.vmem %s9, %s671
        %p673 = pneg %p293
        %p674 = pneg %p290
        %p675 = scmp.lt.s32.totalorder %s36, 1
        %s676 = scalar_select %p675, %s36, 1
        %s677 = smul.addr %s676, 4
        %s678 = smul.addr %s677, 4
        %s679 = scalar_lea.vmem %s10, %s678
        %p680 = pneg %p319
        %p681 = pneg %p316
        %s682 = sand.u32 %s332, 1
        %s683 = scalar_lea.sflag [#allocation11], %s682
        %s684 = sand.u32 %s332, 1
        %s685 = smul.addr %s684, 16
        %s686 = scalar_lea.vmem [#allocation10], %s685
        %p687 = pneg %p345
        %p688 = pneg %p342
        %p689 = scmp.lt.s32.totalorder %s36, 1
        %s690 = scalar_select %p689, %s36, 1
        %s691 = smul.addr %s690, 4
        %s692 = smul.addr %s691, 4
        %s693 = scalar_lea.vmem %s12, %s692
        %p694 = pneg %p371
        %p695 = pneg %p368
        %p696 = scmp.lt.s32.totalorder %s36, 1
        %s697 = scalar_select %p696, %s36, 1
        %s698 = smul.addr %s697, 8
        %s699 = smul.addr %s698, 4
        %s700 = scalar_lea.vmem %s13, %s699
        %p701 = pneg %p397
        %p702 = pneg %p394
        %p703 = pneg %p423
        %p704 = pneg %p420
        %s705 = smul.u32 2, %s35
        %s706 = smul.u32 2, %s35
        %p707 = scmp.lt.s32.totalorder %s36, 1
        %s708 = scalar_select %p707, %s36, 1
        %s709 = smul.addr %s708, 2
        %s710 = smul.addr %s709, 8
        %s711 = scalar_lea.vmem %s3, %s710
        %p712 = scmp.lt.s32.totalorder %s36, 1
        %s713 = scalar_select %p712, %s36, 1
        %s714 = smul.addr %s713, 2
        %s715 = scalar_lea.vmem %s4, %s714
        %p716 = scmp.lt.s32.totalorder %s36, 1
        %s717 = scalar_select %p716, %s36, 1
        %s718 = smul.addr %s717, 4
        %s719 = smul.addr %s718, 4
        %s720 = scalar_lea.vmem %s5, %s719
        %p721 = scmp.lt.s32.totalorder %s36, 1
        %s722 = scalar_select %p721, %s36, 1
        %s723 = smul.addr %s722, 4
        %s724 = smul.addr %s723, 4
        %s725 = scalar_lea.vmem %s6, %s724
        %p726 = scmp.lt.s32.totalorder %s36, 1
        %s727 = scalar_select %p726, %s36, 1
        %s728 = smul.addr %s727, 4
        %s729 = smul.addr %s728, 4
        %s730 = scalar_lea.vmem %s7, %s729
        %p731 = scmp.lt.s32.totalorder %s36, 1
        %s732 = scalar_select %p731, %s36, 1
        %s733 = smul.addr %s732, 8
        %s734 = smul.addr %s733, 4
        %s735 = scalar_lea.vmem %s8, %s734
        %p736 = scmp.lt.s32.totalorder %s36, 1
        %s737 = scalar_select %p736, %s36, 1
        %s738 = smul.addr %s737, 4
        %s739 = smul.addr %s738, 4
        %s740 = scalar_lea.vmem %s9, %s739
        %p741 = scmp.lt.s32.totalorder %s36, 1
        %s742 = scalar_select %p741, %s36, 1
        %s743 = smul.addr %s742, 4
        %s744 = smul.addr %s743, 4
        %s745 = scalar_lea.vmem %s10, %s744
        %p746 = scmp.lt.s32.totalorder %s36, 1
        %s747 = scalar_select %p746, %s36, 1
        %s748 = smul.addr %s747, 4
        %s749 = smul.addr %s748, 4
        %s750 = scalar_lea.vmem %s12, %s749
        %p751 = scmp.lt.s32.totalorder %s36, 1
        %s752 = scalar_select %p751, %s36, 1
        %s753 = smul.addr %s752, 8
        %s754 = smul.addr %s753, 4
        %s755 = scalar_lea.vmem %s13, %s754
        %s756 = smul.u32 2, %s35
        %p758 = scmp.eq.s32.totalorder %s36, 0
        // Predicated region
        $region93: #{_lambda_.1} parent=75 // pred_check
          %p759 = pneg %p758
        $region94: #{_lambda_.1} parent=75 // pred_check_branch
          %761 = sbr.rel (%p759) target = $region96
        $region95: #{_lambda_.1} parent=75 // pred_region
          %v762 = vld [vmem:[#allocation4] sm:$0xff]
          %v763 = vld [vmem:[#allocation4 + $0x8] sm:$0xff]
          %vm764 = vcmask 261120
          %765 = vst.msk [vmem:[#allocation2] sm:$0xff] %vm764, %v762
          %766 = vst.msk [vmem:[#allocation2 + $0x8] sm:$0xff] %vm764, %v763
          %v767 = vld [vmem:[#allocation7] sm:$0xff]
          %v768 = vld [vmem:[#allocation7 + $0x8] sm:$0xff]
          %v769 = vld [vmem:[#allocation9] sm:$0xff]
          %v770 = vadd.f32 %v767, %v769
          %v771 = vadd.f32 %v768, %v769
          %772 = vst.msk [vmem:[#allocation3] sm:$0xff] %vm764, %v770
          %773 = vst.msk [vmem:[#allocation3 + $0x8] sm:$0xff] %vm764, %v771
        $region96: #{_lambda_.1} parent=75 // pred_fallthru
          _
        %v774 = vld [vmem:[%s711] sm:$0xff]
        %v775 = vld [vmem:[%s711 + $0x8] sm:$0x3f]
        %v776 = vld [vmem:[%s715] sm:$0x3]
        %v777 = vld [vmem:[#allocation2] sm:$0xff]
        %v778 = vld [vmem:[#allocation2 + $0x8] sm:$0xff]
        %v779 = vld [vmem:[#allocation3] sm:$0xff]
        %v780 = vld [vmem:[#allocation3 + $0x8] sm:$0xff]
        %vm781 = vcmask 261120
        %v782 = vsel %vm781, %v779, 0.0
        %783 = vadd.xlane.f32.xlu0 %v782
        %v784 = vpop.xlane.xlu0 %783
        %v785 = vsel %vm781, %v780, 0.0
        %786 = vadd.xlane.f32.xlu0 %v785
        %v787 = vpop.xlane.xlu0 %786
        %v788 = vrcp.pop 32.0
        %v789 = vmul.f32 32.0, %v788
        %v790 = vsub.f32 1.0, %v789
        %v791 = vmul.f32 %v788, %v790
        %v792 = vadd.f32 %v788, %v791
        %vm793 = vweird.f32 %v788
        %v794 = vsel %vm793, %v788, %v792
        %v795 = vmul.f32 %v784, %v794
        %v796 = vmul.f32 %v787, %v794
        %v797 = vsub.f32 %v779, %v795
        %v798 = vsub.f32 %v780, %v796
        %v799 = vmul.f32 %v797, %v797
        %v800 = vmul.f32 %v798, %v798
        %v801 = vsel %vm781, %v799, 0.0
        %802 = vadd.xlane.f32.xlu0 %v801
        %v803 = vpop.xlane.xlu0 %802
        %v804 = vsel %vm781, %v800, 0.0
        %805 = vadd.xlane.f32.xlu0 %v804
        %v806 = vpop.xlane.xlu0 %805
        %v807 = vmul.f32 %v803, %v794
        %v808 = vmul.f32 %v806, %v794
        %v809 = vadd.f32 %v807, 1e-05
        %v810 = vadd.f32 %v808, 1e-05
        %v811 = vrsqrt.pop %v809
        %v812 = vmul.f32 %v811, %v809
        %v813 = vmul.f32 %v812, %v811
        %v814 = vmul.f32 0.5, %v813
        %v815 = vsub.f32 1.5, %v814
        %v816 = vmul.f32 %v811, %v815
        %vm817 = vweird.f32 %v809
        %vm818 = vweird.f32 %v811
        %vm819 = vmor %vm817, %vm818
        %v820 = vsel %vm819, %v811, %v816
        %v821 = vrsqrt.pop %v810
        %v822 = vmul.f32 %v821, %v810
        %v823 = vmul.f32 %v822, %v821
        %v824 = vmul.f32 0.5, %v823
        %v825 = vsub.f32 1.5, %v824
        %v826 = vmul.f32 %v821, %v825
        %vm827 = vweird.f32 %v810
        %vm828 = vweird.f32 %v821
        %vm829 = vmor %vm827, %vm828
        %v830 = vsel %vm829, %v821, %v826
        %v831 = vmul.f32 %v797, %v820
        %v832 = vmul.f32 %v798, %v830
        %v833 = vperm.slane %v774, 0
        %v834 = vmul.f32 %v831, %v833
        %v835 = vmul.f32 %v832, %v833
        %v836 = vperm.slane %v774, 1
        %v837 = vadd.f32 %v834, %v836
        %v838 = vadd.f32 %v835, %v836
        %v839 = vpack.c.bf16 %v838, %v837
        %v840 = vld [vmem:[%s720] sm:$0xf]
        %v841 = vld [vmem:[%s720 + $0x4] sm:$0xf]
        %v842 = vld [vmem:[%s720 + $0x8] sm:$0xf]
        %v843 = vld [vmem:[%s720 + $0xc] sm:$0xf]
        %v848 = vunpack.c.l.b16 %v840
        %v849 = vunpack.c.l.b16 %v841
        %v850 = vunpack.c.l.b16 %v842
        %v851 = vunpack.c.l.b16 %v843
        %v852 = vpack.c.b16 %v849, %v848
        %v853 = vpack.c.b16 %v851, %v850
        %v857 = vsel %vm781, %v839, 0
        %859 = vmatpush.bf16.msra.mxu0 0
        %860 = vmatpush.bf16.msra.mxu0 0
        %861 = vmatpush.bf16.msra.mxu0 0
        %862 = vmatpush.bf16.msra.mxu0 0
        %863 = vmatpush.bf16.msra.mxu0 0
        %864 = vmatpush.bf16.msra.mxu0 0
        %865 = vmatpush.bf16.msra.mxu0 %v853
        %866 = vmatpush.bf16.msra.mxu0 %v852
        %867 = vmatmul.bf16.gmra.mxu0 %v857
        %v868 = vpop.f32.mrf.mxu0
        %v869 = vadd.f32 0.0, %v868
        %v870 = vpop.f32.mrf.mxu0
        %v871 = vadd.f32 0.0, %v870
        %872 = vdwg.mxu0
        %v873 = vld [vmem:[%s725] sm:$0xf]
        %v874 = vld [vmem:[%s725 + $0x4] sm:$0xf]
        %v875 = vld [vmem:[%s725 + $0x8] sm:$0xf]
        %v876 = vld [vmem:[%s725 + $0xc] sm:$0xf]
        %v877 = vpack.c.bf16 %v869, %v869
        %v878 = vpack.c.bf16 %v871, %v871
        %v880 = vunpack.c.l.b16 %v877
        %v881 = vpack.c.b16 %v880, %v880
        %882 = vrot.lane.b32.xlu0 %v881, 96
        %v883 = vpop.permute.xlu0 %882
        %vm884 = vcmask 64512
        %v886 = vsel %vm884, %v877, 0
        %v889 = vsel %vm884, %v883, 0
        %891 = vmatpush.bf16.xpose.msra.mxu0 0
        %892 = vmatpush.bf16.xpose.msra.mxu0 0
        %893 = vmatpush.bf16.xpose.msra.mxu0 0
        %894 = vmatpush.bf16.xpose.msra.mxu0 0
        %895 = vmatpush.bf16.xpose.msra.mxu0 0
        %896 = vmatpush.bf16.xpose.msra.mxu0 0
        %897 = vmatpush.bf16.xpose.msra.mxu0 0
        %898 = vmatpush.bf16.xpose.msra.mxu0 %v889
        %899 = vmatmul.bf16.gmra.mxu0 %v886
        %v900 = vpop.f32.mrf.mxu0
        %v901 = vadd.f32 0.0, %v900
        %v902 = vpop.f32.mrf.mxu0
        %903 = vdwg.mxu0
        %v905 = vunpack.c.l.b16 %v878
        %v906 = vpack.c.b16 %v905, %v905
        %907 = vrot.lane.b32.xlu0 %v906, 96
        %v908 = vpop.permute.xlu0 %907
        %v910 = vsel %vm884, %v878, 0
        %v913 = vsel %vm884, %v908, 0
        %915 = vmatpush.bf16.xpose.msra.mxu0 0
        %916 = vmatpush.bf16.xpose.msra.mxu0 0
        %917 = vmatpush.bf16.xpose.msra.mxu0 0
        %918 = vmatpush.bf16.xpose.msra.mxu0 0
        %919 = vmatpush.bf16.xpose.msra.mxu0 0
        %920 = vmatpush.bf16.xpose.msra.mxu0 0
        %921 = vmatpush.bf16.xpose.msra.mxu0 0
        %922 = vmatpush.bf16.xpose.msra.mxu0 %v913
        %923 = vmatmul.bf16.gmra.mxu0 %v910
        %v924 = vpop.f32.mrf.mxu0
        %v925 = vadd.f32 0.0, %v924
        %v926 = vpop.f32.mrf.mxu0
        %927 = vdwg.mxu0
        %v928 = vsel %vm884, %v901, -inf
        %929 = vmax.xlane.f32.xlu0 %v928
        %v930 = vpop.xlane.xlu0 %929
        %v931 = vsel %vm884, %v925, -inf
        %932 = vmax.xlane.f32.xlu0 %v931
        %v933 = vpop.xlane.xlu0 %932
        %v934 = vsub.f32 %v901, %v930
        %v935 = vsub.f32 %v925, %v933
        %v936 = vmul.f32 %v934, 1.442695
        %v937 = vpow.pop %v936
        %v938 = vmul.f32 %v935, 1.442695
        %v939 = vpow.pop %v938
        %v940 = vsel %vm884, %v937, 0.0
        %941 = vadd.xlane.f32.xlu0 %v940
        %v942 = vpop.xlane.xlu0 %941
        %v943 = vsel %vm884, %v939, 0.0
        %944 = vadd.xlane.f32.xlu0 %v943
        %v945 = vpop.xlane.xlu0 %944
        %v946 = vrcp.pop %v942
        %v947 = vrcp.pop %v945
        %v948 = vmul.f32 %v937, %v946
        %v949 = vmul.f32 %v939, %v947
        %v950 = vpack.c.bf16 %v948, %v948
        %v951 = vpack.c.bf16 %v949, %v949
        %952 = vrot.lane.b32.xlu0 %v881, 64
        %v953 = vpop.permute.xlu0 %952
        %v955 = vsel %vm884, %v950, 0
        %vm957 = vcmask 1043456
        %v959 = vsel %vm957, %v953, 0
        %961 = vmatpush.bf16.msra.mxu0 0
        %962 = vmatpush.bf16.msra.mxu0 0
        %963 = vmatpush.bf16.msra.mxu0 0
        %964 = vmatpush.bf16.msra.mxu0 0
        %965 = vmatpush.bf16.msra.mxu0 0
        %966 = vmatpush.bf16.msra.mxu0 0
        %967 = vmatpush.bf16.msra.mxu0 0
        %968 = vmatpush.bf16.msra.mxu0 %v959
        %969 = vmatmul.bf16.gmra.mxu0 %v955
        %v970 = vpop.f32.mrf.mxu0
        %v971 = vadd.f32 0.0, %v970
        %v972 = vpop.f32.mrf.mxu0
        %973 = vdwg.mxu0
        %974 = vrot.lane.b32.xlu0 %v906, 64
        %v975 = vpop.permute.xlu0 %974
        %v977 = vsel %vm884, %v951, 0
        %v980 = vsel %vm957, %v975, 0
        %982 = vmatpush.bf16.msra.mxu0 0
        %983 = vmatpush.bf16.msra.mxu0 0
        %984 = vmatpush.bf16.msra.mxu0 0
        %985 = vmatpush.bf16.msra.mxu0 0
        %986 = vmatpush.bf16.msra.mxu0 0
        %987 = vmatpush.bf16.msra.mxu0 0
        %988 = vmatpush.bf16.msra.mxu0 0
        %989 = vmatpush.bf16.msra.mxu0 %v980
        %990 = vmatmul.bf16.gmra.mxu0 %v977
        %v991 = vpop.f32.mrf.mxu0
        %v992 = vadd.f32 0.0, %v991
        %v993 = vpop.f32.mrf.mxu0
        %994 = vdwg.mxu0
        %995 = vrot.lane.b32.xlu0 %v881, 120
        %v996 = vpop.permute.xlu0 %995
        %997 = vrot.lane.b32.xlu0 %v881, 88
        %v998 = vpop.permute.xlu0 %997
        %v1000 = vsel %vm884, %v996, 0
        %v1003 = vsel %vm884, %v998, 0
        %1005 = vmatpush.bf16.xpose.msra.mxu0 0
        %1006 = vmatpush.bf16.xpose.msra.mxu0 0
        %1007 = vmatpush.bf16.xpose.msra.mxu0 0
        %1008 = vmatpush.bf16.xpose.msra.mxu0 0
        %1009 = vmatpush.bf16.xpose.msra.mxu0 0
        %1010 = vmatpush.bf16.xpose.msra.mxu0 0
        %1011 = vmatpush.bf16.xpose.msra.mxu0 0
        %1012 = vmatpush.bf16.xpose.msra.mxu0 %v1003
        %1013 = vmatmul.bf16.gmra.mxu0 %v1000
        %v1014 = vpop.f32.mrf.mxu0
        %v1015 = vadd.f32 0.0, %v1014
        %v1016 = vpop.f32.mrf.mxu0
        %1017 = vdwg.mxu0
        %1018 = vrot.lane.b32.xlu0 %v906, 120
        %v1019 = vpop.permute.xlu0 %1018
        %1020 = vrot.lane.b32.xlu0 %v906, 88
        %v1021 = vpop.permute.xlu0 %1020
        %v1023 = vsel %vm884, %v1019, 0
        %v1026 = vsel %vm884, %v1021, 0
        %1028 = vmatpush.bf16.xpose.msra.mxu0 0
        %1029 = vmatpush.bf16.xpose.msra.mxu0 0
        %1030 = vmatpush.bf16.xpose.msra.mxu0 0
        %1031 = vmatpush.bf16.xpose.msra.mxu0 0
        %1032 = vmatpush.bf16.xpose.msra.mxu0 0
        %1033 = vmatpush.bf16.xpose.msra.mxu0 0
        %1034 = vmatpush.bf16.xpose.msra.mxu0 0
        %1035 = vmatpush.bf16.xpose.msra.mxu0 %v1026
        %1036 = vmatmul.bf16.gmra.mxu0 %v1023
        %v1037 = vpop.f32.mrf.mxu0
        %v1038 = vadd.f32 0.0, %v1037
        %v1039 = vpop.f32.mrf.mxu0
        %1040 = vdwg.mxu0
        %v1041 = vsel %vm884, %v1015, -inf
        %1042 = vmax.xlane.f32.xlu0 %v1041
        %v1043 = vpop.xlane.xlu0 %1042
        %v1044 = vsel %vm884, %v1038, -inf
        %1045 = vmax.xlane.f32.xlu0 %v1044
        %v1046 = vpop.xlane.xlu0 %1045
        %v1047 = vsub.f32 %v1015, %v1043
        %v1048 = vsub.f32 %v1038, %v1046
        %v1049 = vmul.f32 %v1047, 1.442695
        %v1050 = vpow.pop %v1049
        %v1051 = vmul.f32 %v1048, 1.442695
        %v1052 = vpow.pop %v1051
        %v1053 = vsel %vm884, %v1050, 0.0
        %1054 = vadd.xlane.f32.xlu0 %v1053
        %v1055 = vpop.xlane.xlu0 %1054
        %v1056 = vsel %vm884, %v1052, 0.0
        %1057 = vadd.xlane.f32.xlu0 %v1056
        %v1058 = vpop.xlane.xlu0 %1057
        %v1059 = vrcp.pop %v1055
        %v1060 = vrcp.pop %v1058
        %v1061 = vmul.f32 %v1050, %v1059
        %v1062 = vmul.f32 %v1052, %v1060
        %v1063 = vpack.c.bf16 %v1061, %v1061
        %v1064 = vpack.c.bf16 %v1062, %v1062
        %1065 = vrot.lane.b32.xlu0 %v881, 56
        %v1066 = vpop.permute.xlu0 %1065
        %v1068 = vsel %vm884, %v1063, 0
        %v1071 = vsel %vm957, %v1066, 0
        %1073 = vmatpush.bf16.msra.mxu0 0
        %1074 = vmatpush.bf16.msra.mxu0 0
        %1075 = vmatpush.bf16.msra.mxu0 0
        %1076 = vmatpush.bf16.msra.mxu0 0
        %1077 = vmatpush.bf16.msra.mxu0 0
        %1078 = vmatpush.bf16.msra.mxu0 0
        %1079 = vmatpush.bf16.msra.mxu0 0
        %1080 = vmatpush.bf16.msra.mxu0 %v1071
        %1081 = vmatmul.bf16.gmra.mxu0 %v1068
        %v1082 = vpop.f32.mrf.mxu0
        %v1083 = vadd.f32 0.0, %v1082
        %v1084 = vpop.f32.mrf.mxu0
        %1085 = vdwg.mxu0
        %1086 = vrot.lane.b32.xlu0 %v906, 56
        %v1087 = vpop.permute.xlu0 %1086
        %v1089 = vsel %vm884, %v1064, 0
        %v1092 = vsel %vm957, %v1087, 0
        %1094 = vmatpush.bf16.msra.mxu0 0
        %1095 = vmatpush.bf16.msra.mxu0 0
        %1096 = vmatpush.bf16.msra.mxu0 0
        %1097 = vmatpush.bf16.msra.mxu0 0
        %1098 = vmatpush.bf16.msra.mxu0 0
        %1099 = vmatpush.bf16.msra.mxu0 0
        %1100 = vmatpush.bf16.msra.mxu0 0
        %1101 = vmatpush.bf16.msra.mxu0 %v1092
        %1102 = vmatmul.bf16.gmra.mxu0 %v1089
        %v1103 = vpop.f32.mrf.mxu0
        %v1104 = vadd.f32 0.0, %v1103
        %v1105 = vpop.f32.mrf.mxu0
        %1106 = vdwg.mxu0
        %1107 = vrot.lane.b32.xlu0 %v881, 112
        %v1108 = vpop.permute.xlu0 %1107
        %1109 = vrot.lane.b32.xlu0 %v881, 80
        %v1110 = vpop.permute.xlu0 %1109
        %v1112 = vsel %vm884, %v1108, 0
        %v1115 = vsel %vm884, %v1110, 0
        %1117 = vmatpush.bf16.xpose.msra.mxu0 0
        %1118 = vmatpush.bf16.xpose.msra.mxu0 0
        %1119 = vmatpush.bf16.xpose.msra.mxu0 0
        %1120 = vmatpush.bf16.xpose.msra.mxu0 0
        %1121 = vmatpush.bf16.xpose.msra.mxu0 0
        %1122 = vmatpush.bf16.xpose.msra.mxu0 0
        %1123 = vmatpush.bf16.xpose.msra.mxu0 0
        %1124 = vmatpush.bf16.xpose.msra.mxu0 %v1115
        %1125 = vmatmul.bf16.gmra.mxu0 %v1112
        %v1126 = vpop.f32.mrf.mxu0
        %v1127 = vadd.f32 0.0, %v1126
        %v1128 = vpop.f32.mrf.mxu0
        %1129 = vdwg.mxu0
        %1130 = vrot.lane.b32.xlu0 %v906, 112
        %v1131 = vpop.permute.xlu0 %1130
        %1132 = vrot.lane.b32.xlu0 %v906, 80
        %v1133 = vpop.permute.xlu0 %1132
        %v1135 = vsel %vm884, %v1131, 0
        %v1138 = vsel %vm884, %v1133, 0
        %1140 = vmatpush.bf16.xpose.msra.mxu0 0
        %1141 = vmatpush.bf16.xpose.msra.mxu0 0
        %1142 = vmatpush.bf16.xpose.msra.mxu0 0
        %1143 = vmatpush.bf16.xpose.msra.mxu0 0
        %1144 = vmatpush.bf16.xpose.msra.mxu0 0
        %1145 = vmatpush.bf16.xpose.msra.mxu0 0
        %1146 = vmatpush.bf16.xpose.msra.mxu0 0
        %1147 = vmatpush.bf16.xpose.msra.mxu0 %v1138
        %1148 = vmatmul.bf16.gmra.mxu0 %v1135
        %v1149 = vpop.f32.mrf.mxu0
        %v1150 = vadd.f32 0.0, %v1149
        %v1151 = vpop.f32.mrf.mxu0
        %1152 = vdwg.mxu0
        %v1153 = vsel %vm884, %v1127, -inf
        %1154 = vmax.xlane.f32.xlu0 %v1153
        %v1155 = vpop.xlane.xlu0 %1154
        %v1156 = vsel %vm884, %v1150, -inf
        %1157 = vmax.xlane.f32.xlu0 %v1156
        %v1158 = vpop.xlane.xlu0 %1157
        %v1159 = vsub.f32 %v1127, %v1155
        %v1160 = vsub.f32 %v1150, %v1158
        %v1161 = vmul.f32 %v1159, 1.442695
        %v1162 = vpow.pop %v1161
        %v1163 = vmul.f32 %v1160, 1.442695
        %v1164 = vpow.pop %v1163
        %v1165 = vsel %vm884, %v1162, 0.0
        %1166 = vadd.xlane.f32.xlu0 %v1165
        %v1167 = vpop.xlane.xlu0 %1166
        %v1168 = vsel %vm884, %v1164, 0.0
        %1169 = vadd.xlane.f32.xlu0 %v1168
        %v1170 = vpop.xlane.xlu0 %1169
        %v1171 = vrcp.pop %v1167
        %v1172 = vrcp.pop %v1170
        %v1173 = vmul.f32 %v1162, %v1171
        %v1174 = vmul.f32 %v1164, %v1172
        %v1175 = vpack.c.bf16 %v1173, %v1173
        %v1176 = vpack.c.bf16 %v1174, %v1174
        %1177 = vrot.lane.b32.xlu0 %v881, 48
        %v1178 = vpop.permute.xlu0 %1177
        %v1180 = vsel %vm884, %v1175, 0
        %v1183 = vsel %vm957, %v1178, 0
        %1185 = vmatpush.bf16.msra.mxu0 0
        %1186 = vmatpush.bf16.msra.mxu0 0
        %1187 = vmatpush.bf16.msra.mxu0 0
        %1188 = vmatpush.bf16.msra.mxu0 0
        %1189 = vmatpush.bf16.msra.mxu0 0
        %1190 = vmatpush.bf16.msra.mxu0 0
        %1191 = vmatpush.bf16.msra.mxu0 0
        %1192 = vmatpush.bf16.msra.mxu0 %v1183
        %1193 = vmatmul.bf16.gmra.mxu0 %v1180
        %v1194 = vpop.f32.mrf.mxu0
        %v1195 = vadd.f32 0.0, %v1194
        %v1196 = vpop.f32.mrf.mxu0
        %1197 = vdwg.mxu0
        %1198 = vrot.lane.b32.xlu0 %v906, 48
        %v1199 = vpop.permute.xlu0 %1198
        %v1201 = vsel %vm884, %v1176, 0
        %v1204 = vsel %vm957, %v1199, 0
        %1206 = vmatpush.bf16.msra.mxu0 0
        %1207 = vmatpush.bf16.msra.mxu0 0
        %1208 = vmatpush.bf16.msra.mxu0 0
        %1209 = vmatpush.bf16.msra.mxu0 0
        %1210 = vmatpush.bf16.msra.mxu0 0
        %1211 = vmatpush.bf16.msra.mxu0 0
        %1212 = vmatpush.bf16.msra.mxu0 0
        %1213 = vmatpush.bf16.msra.mxu0 %v1204
        %1214 = vmatmul.bf16.gmra.mxu0 %v1201
        %v1215 = vpop.f32.mrf.mxu0
        %v1216 = vadd.f32 0.0, %v1215
        %v1217 = vpop.f32.mrf.mxu0
        %1218 = vdwg.mxu0
        %1219 = vrot.lane.b32.xlu0 %v881, 104
        %v1220 = vpop.permute.xlu0 %1219
        %1221 = vrot.lane.b32.xlu0 %v881, 72
        %v1222 = vpop.permute.xlu0 %1221
        %v1224 = vsel %vm884, %v1220, 0
        %v1227 = vsel %vm884, %v1222, 0
        %1229 = vmatpush.bf16.xpose.msra.mxu0 0
        %1230 = vmatpush.bf16.xpose.msra.mxu0 0
        %1231 = vmatpush.bf16.xpose.msra.mxu0 0
        %1232 = vmatpush.bf16.xpose.msra.mxu0 0
        %1233 = vmatpush.bf16.xpose.msra.mxu0 0
        %1234 = vmatpush.bf16.xpose.msra.mxu0 0
        %1235 = vmatpush.bf16.xpose.msra.mxu0 0
        %1236 = vmatpush.bf16.xpose.msra.mxu0 %v1227
        %1237 = vmatmul.bf16.gmra.mxu0 %v1224
        %v1238 = vpop.f32.mrf.mxu0
        %v1239 = vadd.f32 0.0, %v1238
        %v1240 = vpop.f32.mrf.mxu0
        %1241 = vdwg.mxu0
        %1242 = vrot.lane.b32.xlu0 %v906, 104
        %v1243 = vpop.permute.xlu0 %1242
        %1244 = vrot.lane.b32.xlu0 %v906, 72
        %v1245 = vpop.permute.xlu0 %1244
        %v1247 = vsel %vm884, %v1243, 0
        %v1250 = vsel %vm884, %v1245, 0
        %1252 = vmatpush.bf16.xpose.msra.mxu0 0
        %1253 = vmatpush.bf16.xpose.msra.mxu0 0
        %1254 = vmatpush.bf16.xpose.msra.mxu0 0
        %1255 = vmatpush.bf16.xpose.msra.mxu0 0
        %1256 = vmatpush.bf16.xpose.msra.mxu0 0
        %1257 = vmatpush.bf16.xpose.msra.mxu0 0
        %1258 = vmatpush.bf16.xpose.msra.mxu0 0
        %1259 = vmatpush.bf16.xpose.msra.mxu0 %v1250
        %1260 = vmatmul.bf16.gmra.mxu0 %v1247
        %v1261 = vpop.f32.mrf.mxu0
        %v1262 = vadd.f32 0.0, %v1261
        %v1263 = vpop.f32.mrf.mxu0
        %1264 = vdwg.mxu0
        %v1265 = vsel %vm884, %v1239, -inf
        %1266 = vmax.xlane.f32.xlu0 %v1265
        %v1267 = vpop.xlane.xlu0 %1266
        %v1268 = vsel %vm884, %v1262, -inf
        %1269 = vmax.xlane.f32.xlu0 %v1268
        %v1270 = vpop.xlane.xlu0 %1269
        %v1271 = vsub.f32 %v1239, %v1267
        %v1272 = vsub.f32 %v1262, %v1270
        %v1273 = vmul.f32 %v1271, 1.442695
        %v1274 = vpow.pop %v1273
        %v1275 = vmul.f32 %v1272, 1.442695
        %v1276 = vpow.pop %v1275
        %v1277 = vsel %vm884, %v1274, 0.0
        %1278 = vadd.xlane.f32.xlu0 %v1277
        %v1279 = vpop.xlane.xlu0 %1278
        %v1280 = vsel %vm884, %v1276, 0.0
        %1281 = vadd.xlane.f32.xlu0 %v1280
        %v1282 = vpop.xlane.xlu0 %1281
        %v1283 = vrcp.pop %v1279
        %v1284 = vrcp.pop %v1282
        %v1285 = vmul.f32 %v1274, %v1283
        %v1286 = vmul.f32 %v1276, %v1284
        %v1287 = vpack.c.bf16 %v1285, %v1285
        %v1288 = vpack.c.bf16 %v1286, %v1286
        %1289 = vrot.lane.b32.xlu0 %v881, 40
        %v1290 = vpop.permute.xlu0 %1289
        %v1292 = vsel %vm884, %v1287, 0
        %v1295 = vsel %vm957, %v1290, 0
        %1297 = vmatpush.bf16.msra.mxu0 0
        %1298 = vmatpush.bf16.msra.mxu0 0
        %1299 = vmatpush.bf16.msra.mxu0 0
        %1300 = vmatpush.bf16.msra.mxu0 0
        %1301 = vmatpush.bf16.msra.mxu0 0
        %1302 = vmatpush.bf16.msra.mxu0 0
        %1303 = vmatpush.bf16.msra.mxu0 0
        %1304 = vmatpush.bf16.msra.mxu0 %v1295
        %1305 = vmatmul.bf16.gmra.mxu0 %v1292
        %v1306 = vpop.f32.mrf.mxu0
        %v1307 = vadd.f32 0.0, %v1306
        %v1308 = vpop.f32.mrf.mxu0
        %1309 = vdwg.mxu0
        %1310 = vrot.lane.b32.xlu0 %v906, 40
        %v1311 = vpop.permute.xlu0 %1310
        %v1313 = vsel %vm884, %v1288, 0
        %v1316 = vsel %vm957, %v1311, 0
        %1318 = vmatpush.bf16.msra.mxu0 0
        %1319 = vmatpush.bf16.msra.mxu0 0
        %1320 = vmatpush.bf16.msra.mxu0 0
        %1321 = vmatpush.bf16.msra.mxu0 0
        %1322 = vmatpush.bf16.msra.mxu0 0
        %1323 = vmatpush.bf16.msra.mxu0 0
        %1324 = vmatpush.bf16.msra.mxu0 0
        %1325 = vmatpush.bf16.msra.mxu0 %v1316
        %1326 = vmatmul.bf16.gmra.mxu0 %v1313
        %v1327 = vpop.f32.mrf.mxu0
        %v1328 = vadd.f32 0.0, %v1327
        %v1329 = vpop.f32.mrf.mxu0
        %1330 = vdwg.mxu0
        %1333 = vrot.lane.b32.xlu0 %v1083, 8
        %v1334 = vpop.permute.xlu0 %1333
        %1335 = vrot.lane.b32.xlu0 %v1104, 8
        %v1336 = vpop.permute.xlu0 %1335
        %1341 = vrot.lane.b32.xlu0 %v1195, 16
        %v1342 = vpop.permute.xlu0 %1341
        %1343 = vrot.lane.b32.xlu0 %v1216, 16
        %v1344 = vpop.permute.xlu0 %1343
        %1349 = vrot.lane.b32.xlu0 %v1307, 24
        %v1350 = vpop.permute.xlu0 %1349
        %1351 = vrot.lane.b32.xlu0 %v1328, 24
        %v1352 = vpop.permute.xlu0 %1351
        %v1355 = vsel %vm884, %v971, %v1334
        %v1356 = vsel %vm884, %v992, %v1336
        %vm1357 = vcmask 130048
        %v1358 = vsel %vm1357, %v1355, %v1342
        %v1359 = vsel %vm1357, %v1356, %v1344
        %vm1360 = vcmask 195584
        %v1361 = vsel %vm1360, %v1358, %v1350
        %v1362 = vsel %vm1360, %v1359, %v1352
        %v1363 = vpack.c.bf16 %v1362, %v1361
        %v1364 = vperm.slane %v774, 2
        %v1369 = vunpack.c.l.b16 %v873
        %v1370 = vunpack.c.l.b16 %v874
        %v1371 = vunpack.c.l.b16 %v875
        %v1372 = vunpack.c.l.b16 %v876
        %v1373 = vpack.c.b16 %v1370, %v1369
        %v1374 = vpack.c.b16 %v1372, %v1371
        %v1378 = vsel %vm781, %v1363, 0
        %1380 = vmatpush.bf16.msra.mxu0 0
        %1381 = vmatpush.bf16.msra.mxu0 0
        %1382 = vmatpush.bf16.msra.mxu0 0
        %1383 = vmatpush.bf16.msra.mxu0 0
        %1384 = vmatpush.bf16.msra.mxu0 0
        %1385 = vmatpush.bf16.msra.mxu0 0
        %1386 = vmatpush.bf16.msra.mxu0 %v1374
        %1387 = vmatpush.bf16.msra.mxu0 %v1373
        %1388 = vmatmul.bf16.gmra.mxu0 %v1378
        %v1389 = vpop.f32.mrf.mxu0
        %v1390 = vadd.f32 %v1364, %v1389
        %v1391 = vpop.f32.mrf.mxu0
        %v1392 = vadd.f32 %v1364, %v1391
        %1393 = vdwg.mxu0
        %v1394 = vadd.f32 %v779, %v1390
        %v1395 = vadd.f32 %v780, %v1392
        %v1396 = vld [vmem:[%s730] sm:$0xf]
        %v1397 = vld [vmem:[%s730 + $0x4] sm:$0xf]
        %v1398 = vld [vmem:[%s730 + $0x8] sm:$0xf]
        %v1399 = vld [vmem:[%s730 + $0xc] sm:$0xf]
        %v1400 = vld [vmem:[%s735] sm:$0xf]
        %v1401 = vld [vmem:[%s735 + $0x4] sm:$0xf]
        %v1402 = vld [vmem:[%s735 + $0x8] sm:$0xf]
        %v1403 = vld [vmem:[%s735 + $0xc] sm:$0xf]
        %v1404 = vld [vmem:[%s735 + $0x10] sm:$0xf]
        %v1405 = vld [vmem:[%s735 + $0x14] sm:$0xf]
        %v1406 = vld [vmem:[%s735 + $0x18] sm:$0xf]
        %v1407 = vld [vmem:[%s735 + $0x1c] sm:$0xf]
        %v1408 = vsel %vm781, %v1394, 0.0
        %1409 = vadd.xlane.f32.xlu0 %v1408
        %v1410 = vpop.xlane.xlu0 %1409
        %v1411 = vsel %vm781, %v1395, 0.0
        %1412 = vadd.xlane.f32.xlu0 %v1411
        %v1413 = vpop.xlane.xlu0 %1412
        %v1414 = vmul.f32 %v1410, %v794
        %v1415 = vmul.f32 %v1413, %v794
        %v1416 = vsub.f32 %v1394, %v1414
        %v1417 = vsub.f32 %v1395, %v1415
        %v1418 = vmul.f32 %v1416, %v1416
        %v1419 = vmul.f32 %v1417, %v1417
        %v1420 = vsel %vm781, %v1418, 0.0
        %1421 = vadd.xlane.f32.xlu0 %v1420
        %v1422 = vpop.xlane.xlu0 %1421
        %v1423 = vsel %vm781, %v1419, 0.0
        %1424 = vadd.xlane.f32.xlu0 %v1423
        %v1425 = vpop.xlane.xlu0 %1424
        %v1426 = vmul.f32 %v1422, %v794
        %v1427 = vmul.f32 %v1425, %v794
        %v1428 = vadd.f32 %v1426, 1e-05
        %v1429 = vadd.f32 %v1427, 1e-05
        %v1430 = vrsqrt.pop %v1428
        %v1431 = vmul.f32 %v1430, %v1428
        %v1432 = vmul.f32 %v1431, %v1430
        %v1433 = vmul.f32 0.5, %v1432
        %v1434 = vsub.f32 1.5, %v1433
        %v1435 = vmul.f32 %v1430, %v1434
        %vm1436 = vweird.f32 %v1428
        %vm1437 = vweird.f32 %v1430
        %vm1438 = vmor %vm1436, %vm1437
        %v1439 = vsel %vm1438, %v1430, %v1435
        %v1440 = vrsqrt.pop %v1429
        %v1441 = vmul.f32 %v1440, %v1429
        %v1442 = vmul.f32 %v1441, %v1440
        %v1443 = vmul.f32 0.5, %v1442
        %v1444 = vsub.f32 1.5, %v1443
        %v1445 = vmul.f32 %v1440, %v1444
        %vm1446 = vweird.f32 %v1429
        %vm1447 = vweird.f32 %v1440
        %vm1448 = vmor %vm1446, %vm1447
        %v1449 = vsel %vm1448, %v1440, %v1445
        %v1450 = vmul.f32 %v1416, %v1439
        %v1451 = vmul.f32 %v1417, %v1449
        %v1452 = vperm.slane %v774, 3
        %v1453 = vmul.f32 %v1450, %v1452
        %v1454 = vmul.f32 %v1451, %v1452
        %v1455 = vperm.slane %v774, 4
        %v1456 = vadd.f32 %v1453, %v1455
        %v1457 = vadd.f32 %v1454, %v1455
        %v1458 = vpack.c.bf16 %v1457, %v1456
        %v1459 = vperm.slane %v776, 0
        %v1464 = vunpack.c.l.b16 %v1396
        %v1465 = vunpack.c.l.b16 %v1397
        %v1466 = vunpack.c.l.b16 %v1398
        %v1467 = vunpack.c.l.b16 %v1399
        %v1468 = vpack.c.b16 %v1465, %v1464
        %v1469 = vpack.c.b16 %v1467, %v1466
        %v1473 = vsel %vm781, %v1458, 0
        %1475 = vmatpush.bf16.msra.mxu0 0
        %1476 = vmatpush.bf16.msra.mxu0 0
        %1477 = vmatpush.bf16.msra.mxu0 0
        %1478 = vmatpush.bf16.msra.mxu0 0
        %1479 = vmatpush.bf16.msra.mxu0 0
        %1480 = vmatpush.bf16.msra.mxu0 0
        %1481 = vmatpush.bf16.msra.mxu0 %v1469
        %1482 = vmatpush.bf16.msra.mxu0 %v1468
        %1483 = vmatmul.bf16.gmra.mxu0 %v1473
        %v1484 = vpop.f32.mrf.mxu0
        %v1485 = vadd.f32 %v1459, %v1484
        %v1486 = vpop.f32.mrf.mxu0
        %v1487 = vadd.f32 %v1459, %v1486
        %1488 = vdwg.mxu0
        %v1489 = vmul.f32 %v1485, 0.5
        %v1490 = vmul.f32 %v1487, 0.5
        %v1491 = vmul.f32 %v1485, 0.70710677
        %v1492 = vmul.f32 %v1487, 0.70710677
        %v1493 = vand.u32 2147483647, %v1491
        %v1494 = vand.u32 2147483647, %v1492
        %v1495 = vmul.f32 %v1493, 0.3275911
        %v1496 = vmul.f32 %v1494, 0.3275911
        %v1497 = vadd.f32 %v1495, 1.0
        %v1498 = vadd.f32 %v1496, 1.0
        %v1499 = vrcp.pop %v1497
        %v1500 = vmul.f32 %v1497, %v1499
        %v1501 = vsub.f32 1.0, %v1500
        %v1502 = vmul.f32 %v1499, %v1501
        %v1503 = vadd.f32 %v1499, %v1502
        %vm1504 = vweird.f32 %v1497
        %vm1505 = vweird.f32 %v1499
        %vm1506 = vmor %vm1504, %vm1505
        %v1507 = vsel %vm1506, %v1499, %v1503
        %v1508 = vand.u32 2147483647, %v1497
        %vm1509 = vcmp.eq.f32.partialorder %v1508, 8.507059e+37
        %v1510 = vand.u32 %v1497, 2147483648
        %v1511 = vor.u32 1.1754944e-38, %v1510
        %v1512 = vsel %vm1509, %v1511, %v1507
        %v1513 = vmul.f32 1.0, %v1512
        %v1514 = vrcp.pop %v1498
        %v1515 = vmul.f32 %v1498, %v1514
        %v1516 = vsub.f32 1.0, %v1515
        %v1517 = vmul.f32 %v1514, %v1516
        %v1518 = vadd.f32 %v1514, %v1517
        %vm1519 = vweird.f32 %v1498
        %vm1520 = vweird.f32 %v1514
        %vm1521 = vmor %vm1519, %vm1520
        %v1522 = vsel %vm1521, %v1514, %v1518
        %v1523 = vand.u32 2147483647, %v1498
        %vm1524 = vcmp.eq.f32.partialorder %v1523, 8.507059e+37
        %v1525 = vand.u32 %v1498, 2147483648
        %v1526 = vor.u32 1.1754944e-38, %v1525
        %v1527 = vsel %vm1524, %v1526, %v1522
        %v1528 = vmul.f32 1.0, %v1527
        %v1529 = vmul.f32 %v1513, 1.0614054
        %v1530 = vmul.f32 %v1528, 1.0614054
        %v1531 = vadd.f32 %v1529, -1.4531521
        %v1532 = vadd.f32 %v1530, -1.4531521
        %v1533 = vmul.f32 %v1513, %v1531
        %v1534 = vmul.f32 %v1528, %v1532
        %v1535 = vadd.f32 %v1533, 1.4214138
        %v1536 = vadd.f32 %v1534, 1.4214138
        %v1537 = vmul.f32 %v1513, %v1535
        %v1538 = vmul.f32 %v1528, %v1536
        %v1539 = vadd.f32 %v1537, -0.28449672
        %v1540 = vadd.f32 %v1538, -0.28449672
        %v1541 = vmul.f32 %v1513, %v1539
        %v1542 = vmul.f32 %v1528, %v1540
        %v1543 = vadd.f32 %v1541, 0.2548296
        %v1544 = vadd.f32 %v1542, 0.2548296
        %v1545 = vmul.f32 %v1513, %v1543
        %v1546 = vmul.f32 %v1528, %v1544
        %v1547 = vmul.f32 %v1493, %v1493
        %v1548 = vmul.f32 %v1494, %v1494
        %v1549 = vsub.f32 0.0, %v1547
        %v1550 = vsub.f32 0.0, %v1548
        %v1551 = vmul.f32 %v1549, 1.442695
        %v1552 = vpow.pop %v1551
        %v1553 = vmul.f32 %v1550, 1.442695
        %v1554 = vpow.pop %v1553
        %v1555 = vmul.f32 %v1545, %v1552
        %v1556 = vmul.f32 %v1546, %v1554
        %v1557 = vsub.f32 1.0, %v1555
        %v1558 = vsub.f32 1.0, %v1556
        %vm1559 = vcmp.lt.f32.partialorder %v1491, 0.0
        %vm1560 = vcmp.lt.f32.partialorder %v1492, 0.0
        %v1561 = vsub.f32 0.0, %v1557
        %v1562 = vsub.f32 0.0, %v1558
        %v1563 = vsel %vm1559, %v1561, %v1557
        %v1564 = vsel %vm1560, %v1562, %v1558
        %v1565 = vadd.f32 %v1563, 1.0
        %v1566 = vadd.f32 %v1564, 1.0
        %v1567 = vmul.f32 %v1489, %v1565
        %v1568 = vmul.f32 %v1490, %v1566
        %v1569 = vpack.c.bf16 %v1568, %v1567
        %v1570 = vperm.slane %v774, 5
        %v1579 = vunpack.c.l.b16 %v1400
        %v1580 = vunpack.c.l.b16 %v1401
        %v1581 = vunpack.c.l.b16 %v1402
        %v1582 = vunpack.c.l.b16 %v1403
        %v1583 = vunpack.c.l.b16 %v1404
        %v1584 = vunpack.c.l.b16 %v1405
        %v1585 = vunpack.c.l.b16 %v1406
        %v1586 = vunpack.c.l.b16 %v1407
        %v1587 = vpack.c.b16 %v1580, %v1579
        %v1588 = vpack.c.b16 %v1582, %v1581
        %v1589 = vpack.c.b16 %v1584, %v1583
        %v1590 = vpack.c.b16 %v1586, %v1585
        %vm1595 = vcmask 523264
        %v1597 = vsel %vm1595, %v1569, 0
        %1599 = vmatpush.bf16.msra.mxu0 0
        %1600 = vmatpush.bf16.msra.mxu0 0
        %1601 = vmatpush.bf16.msra.mxu0 0
        %1602 = vmatpush.bf16.msra.mxu0 0
        %1603 = vmatpush.bf16.msra.mxu0 %v1590
        %1604 = vmatpush.bf16.msra.mxu0 %v1589
        %1605 = vmatpush.bf16.msra.mxu0 %v1588
        %1606 = vmatpush.bf16.msra.mxu0 %v1587
        %1607 = vmatmul.bf16.gmra.mxu0 %v1597
        %v1608 = vpop.f32.mrf.mxu0
        %v1609 = vadd.f32 %v1570, %v1608
        %v1610 = vpop.f32.mrf.mxu0
        %v1611 = vadd.f32 %v1570, %v1610
        %1612 = vdwg.mxu0
        %v1613 = vadd.f32 %v1394, %v1609
        %v1614 = vadd.f32 %v1395, %v1611
        %v1615 = vsel %vm781, %v777, 0.0
        %1616 = vadd.xlane.f32.xlu0 %v1615
        %v1617 = vpop.xlane.xlu0 %1616
        %v1618 = vsel %vm781, %v778, 0.0
        %1619 = vadd.xlane.f32.xlu0 %v1618
        %v1620 = vpop.xlane.xlu0 %1619
        %v1621 = vmul.f32 %v1617, %v794
        %v1622 = vmul.f32 %v1620, %v794
        %v1623 = vsub.f32 %v777, %v1621
        %v1624 = vsub.f32 %v778, %v1622
        %v1625 = vmul.f32 %v1623, %v1623
        %v1626 = vmul.f32 %v1624, %v1624
        %v1627 = vsel %vm781, %v1625, 0.0
        %1628 = vadd.xlane.f32.xlu0 %v1627
        %v1629 = vpop.xlane.xlu0 %1628
        %v1630 = vsel %vm781, %v1626, 0.0
        %1631 = vadd.xlane.f32.xlu0 %v1630
        %v1632 = vpop.xlane.xlu0 %1631
        %v1633 = vmul.f32 %v1629, %v794
        %v1634 = vmul.f32 %v1632, %v794
        %v1635 = vadd.f32 %v1633, 1e-05
        %v1636 = vadd.f32 %v1634, 1e-05
        %v1637 = vrsqrt.pop %v1635
        %v1638 = vmul.f32 %v1637, %v1635
        %v1639 = vmul.f32 %v1638, %v1637
        %v1640 = vmul.f32 0.5, %v1639
        %v1641 = vsub.f32 1.5, %v1640
        %v1642 = vmul.f32 %v1637, %v1641
        %vm1643 = vweird.f32 %v1635
        %vm1644 = vweird.f32 %v1637
        %vm1645 = vmor %vm1643, %vm1644
        %v1646 = vsel %vm1645, %v1637, %v1642
        %v1647 = vrsqrt.pop %v1636
        %v1648 = vmul.f32 %v1647, %v1636
        %v1649 = vmul.f32 %v1648, %v1647
        %v1650 = vmul.f32 0.5, %v1649
        %v1651 = vsub.f32 1.5, %v1650
        %v1652 = vmul.f32 %v1647, %v1651
        %vm1653 = vweird.f32 %v1636
        %vm1654 = vweird.f32 %v1647
        %vm1655 = vmor %vm1653, %vm1654
        %v1656 = vsel %vm1655, %v1647, %v1652
        %v1657 = vmul.f32 %v1623, %v1646
        %v1658 = vmul.f32 %v1624, %v1656
        %v1659 = vperm.slane %v774, 6
        %v1660 = vmul.f32 %v1657, %v1659
        %v1661 = vmul.f32 %v1658, %v1659
        %v1662 = vperm.slane %v774, 7
        %v1663 = vadd.f32 %v1660, %v1662
        %v1664 = vadd.f32 %v1661, %v1662
        %v1665 = vpack.c.bf16 %v1664, %v1663
        %v1666 = vsel %vm781, %v1613, 0.0
        %1667 = vadd.xlane.f32.xlu0 %v1666
        %v1668 = vpop.xlane.xlu0 %1667
        %v1669 = vsel %vm781, %v1614, 0.0
        %1670 = vadd.xlane.f32.xlu0 %v1669
        %v1671 = vpop.xlane.xlu0 %1670
        %v1672 = vmul.f32 %v1668, %v794
        %v1673 = vmul.f32 %v1671, %v794
        %v1674 = vsub.f32 %v1613, %v1672
        %v1675 = vsub.f32 %v1614, %v1673
        %v1676 = vmul.f32 %v1674, %v1674
        %v1677 = vmul.f32 %v1675, %v1675
        %v1678 = vsel %vm781, %v1676, 0.0
        %1679 = vadd.xlane.f32.xlu0 %v1678
        %v1680 = vpop.xlane.xlu0 %1679
        %v1681 = vsel %vm781, %v1677, 0.0
        %1682 = vadd.xlane.f32.xlu0 %v1681
        %v1683 = vpop.xlane.xlu0 %1682
        %v1684 = vmul.f32 %v1680, %v794
        %v1685 = vmul.f32 %v1683, %v794
        %v1686 = vadd.f32 %v1684, 1e-05
        %v1687 = vadd.f32 %v1685, 1e-05
        %v1688 = vrsqrt.pop %v1686
        %v1689 = vmul.f32 %v1688, %v1686
        %v1690 = vmul.f32 %v1689, %v1688
        %v1691 = vmul.f32 0.5, %v1690
        %v1692 = vsub.f32 1.5, %v1691
        %v1693 = vmul.f32 %v1688, %v1692
        %vm1694 = vweird.f32 %v1686
        %vm1695 = vweird.f32 %v1688
        %vm1696 = vmor %vm1694, %vm1695
        %v1697 = vsel %vm1696, %v1688, %v1693
        %v1698 = vrsqrt.pop %v1687
        %v1699 = vmul.f32 %v1698, %v1687
        %v1700 = vmul.f32 %v1699, %v1698
        %v1701 = vmul.f32 0.5, %v1700
        %v1702 = vsub.f32 1.5, %v1701
        %v1703 = vmul.f32 %v1698, %v1702
        %vm1704 = vweird.f32 %v1687
        %vm1705 = vweird.f32 %v1698
        %vm1706 = vmor %vm1704, %vm1705
        %v1707 = vsel %vm1706, %v1698, %v1703
        %v1708 = vmul.f32 %v1674, %v1697
        %v1709 = vmul.f32 %v1675, %v1707
        %v1710 = vperm.slane %v775, 0
        %v1711 = vmul.f32 %v1708, %v1710
        %v1712 = vmul.f32 %v1709, %v1710
        %v1713 = vperm.slane %v775, 1
        %v1714 = vadd.f32 %v1711, %v1713
        %v1715 = vadd.f32 %v1712, %v1713
        %v1716 = vpack.c.bf16 %v1715, %v1714
        %v1717 = vld [vmem:[%s740] sm:$0xf]
        %v1718 = vld [vmem:[%s740 + $0x4] sm:$0xf]
        %v1719 = vld [vmem:[%s740 + $0x8] sm:$0xf]
        %v1720 = vld [vmem:[%s740 + $0xc] sm:$0xf]
        %v1725 = vunpack.c.l.b16 %v1717
        %v1726 = vunpack.c.l.b16 %v1718
        %v1727 = vunpack.c.l.b16 %v1719
        %v1728 = vunpack.c.l.b16 %v1720
        %v1729 = vpack.c.b16 %v1726, %v1725
        %v1730 = vpack.c.b16 %v1728, %v1727
        %v1734 = vsel %vm781, %v1665, 0
        %1736 = vmatpush.bf16.msra.mxu0 0
        %1737 = vmatpush.bf16.msra.mxu0 0
        %1738 = vmatpush.bf16.msra.mxu0 0
        %1739 = vmatpush.bf16.msra.mxu0 0
        %1740 = vmatpush.bf16.msra.mxu0 0
        %1741 = vmatpush.bf16.msra.mxu0 0
        %1742 = vmatpush.bf16.msra.mxu0 %v1730
        %1743 = vmatpush.bf16.msra.mxu0 %v1729
        %1744 = vmatmul.bf16.gmra.mxu0 %v1734
        %v1745 = vpop.f32.mrf.mxu0
        %v1746 = vadd.f32 0.0, %v1745
        %v1747 = vpop.f32.mrf.mxu0
        %v1748 = vadd.f32 0.0, %v1747
        %1749 = vdwg.mxu0
        %v1750 = vld [vmem:[%s745] sm:$0xf]
        %v1751 = vld [vmem:[%s745 + $0x4] sm:$0xf]
        %v1752 = vld [vmem:[%s745 + $0x8] sm:$0xf]
        %v1753 = vld [vmem:[%s745 + $0xc] sm:$0xf]
        %v1758 = vunpack.c.l.b16 %v1750
        %v1759 = vunpack.c.l.b16 %v1751
        %v1760 = vunpack.c.l.b16 %v1752
        %v1761 = vunpack.c.l.b16 %v1753
        %v1762 = vpack.c.b16 %v1759, %v1758
        %v1763 = vpack.c.b16 %v1761, %v1760
        %v1767 = vsel %vm781, %v1716, 0
        %1769 = vmatpush.bf16.msra.mxu0 0
        %1770 = vmatpush.bf16.msra.mxu0 0
        %1771 = vmatpush.bf16.msra.mxu0 0
        %1772 = vmatpush.bf16.msra.mxu0 0
        %1773 = vmatpush.bf16.msra.mxu0 0
        %1774 = vmatpush.bf16.msra.mxu0 0
        %1775 = vmatpush.bf16.msra.mxu0 %v1763
        %1776 = vmatpush.bf16.msra.mxu0 %v1762
        %1777 = vmatmul.bf16.gmra.mxu0 %v1767
        %v1778 = vpop.f32.mrf.mxu0
        %v1779 = vadd.f32 0.0, %v1778
        %v1780 = vpop.f32.mrf.mxu0
        %v1781 = vadd.f32 0.0, %v1780
        %1782 = vdwg.mxu0
        %v1783 = vld [vmem:[%s615] sm:$0xf]
        %v1784 = vld [vmem:[%s615 + $0x4] sm:$0xf]
        %v1785 = vld [vmem:[%s615 + $0x8] sm:$0xf]
        %v1786 = vld [vmem:[%s615 + $0xc] sm:$0xf]
        %v1787 = vpack.c.bf16 %v1746, %v1746
        %v1788 = vpack.c.bf16 %v1748, %v1748
        %v1789 = vpack.c.bf16 %v1779, %v1779
        %v1790 = vpack.c.bf16 %v1781, %v1781
        %v1792 = vsel %vm884, %v1787, 0
        %v1795 = vsel %vm884, %v1789, 0
        %1797 = vmatpush.bf16.xpose.msra.mxu0 0
        %1798 = vmatpush.bf16.xpose.msra.mxu0 0
        %1799 = vmatpush.bf16.xpose.msra.mxu0 0
        %1800 = vmatpush.bf16.xpose.msra.mxu0 0
        %1801 = vmatpush.bf16.xpose.msra.mxu0 0
        %1802 = vmatpush.bf16.xpose.msra.mxu0 0
        %1803 = vmatpush.bf16.xpose.msra.mxu0 0
        %1804 = vmatpush.bf16.xpose.msra.mxu0 %v1795
        %1805 = vmatmul.bf16.gmra.mxu0 %v1792
        %v1806 = vpop.f32.mrf.mxu0
        %v1807 = vadd.f32 0.0, %v1806
        %v1808 = vpop.f32.mrf.mxu0
        %1809 = vdwg.mxu0
        %v1811 = vsel %vm884, %v1788, 0
        %v1814 = vsel %vm884, %v1790, 0
        %1816 = vmatpush.bf16.xpose.msra.mxu0 0
        %1817 = vmatpush.bf16.xpose.msra.mxu0 0
        %1818 = vmatpush.bf16.xpose.msra.mxu0 0
        %1819 = vmatpush.bf16.xpose.msra.mxu0 0
        %1820 = vmatpush.bf16.xpose.msra.mxu0 0
        %1821 = vmatpush.bf16.xpose.msra.mxu0 0
        %1822 = vmatpush.bf16.xpose.msra.mxu0 0
        %1823 = vmatpush.bf16.xpose.msra.mxu0 %v1814
        %1824 = vmatmul.bf16.gmra.mxu0 %v1811
        %v1825 = vpop.f32.mrf.mxu0
        %v1826 = vadd.f32 0.0, %v1825
        %v1827 = vpop.f32.mrf.mxu0
        %1828 = vdwg.mxu0
        %v1829 = vsel %vm884, %v1807, -inf
        %1830 = vmax.xlane.f32.xlu0 %v1829
        %v1831 = vpop.xlane.xlu0 %1830
        %v1832 = vsel %vm884, %v1826, -inf
        %1833 = vmax.xlane.f32.xlu0 %v1832
        %v1834 = vpop.xlane.xlu0 %1833
        %v1835 = vsub.f32 %v1807, %v1831
        %v1836 = vsub.f32 %v1826, %v1834
        %v1837 = vmul.f32 %v1835, 1.442695
        %v1838 = vpow.pop %v1837
        %v1839 = vmul.f32 %v1836, 1.442695
        %v1840 = vpow.pop %v1839
        %v1841 = vsel %vm884, %v1838, 0.0
        %1842 = vadd.xlane.f32.xlu0 %v1841
        %v1843 = vpop.xlane.xlu0 %1842
        %v1844 = vsel %vm884, %v1840, 0.0
        %1845 = vadd.xlane.f32.xlu0 %v1844
        %v1846 = vpop.xlane.xlu0 %1845
        %v1847 = vrcp.pop %v1843
        %v1848 = vrcp.pop %v1846
        %v1849 = vmul.f32 %v1838, %v1847
        %v1850 = vmul.f32 %v1840, %v1848
        %v1851 = vpack.c.bf16 %v1849, %v1849
        %v1852 = vpack.c.bf16 %v1850, %v1850
        %v1854 = vunpack.c.l.b16 %v1789
        %v1855 = vpack.c.b16 %v1854, %v1854
        %1856 = vrot.lane.b32.xlu0 %v1855, 96
        %v1857 = vpop.permute.xlu0 %1856
        %v1859 = vsel %vm884, %v1851, 0
        %v1862 = vsel %vm957, %v1857, 0
        %1864 = vmatpush.bf16.msra.mxu0 0
        %1865 = vmatpush.bf16.msra.mxu0 0
        %1866 = vmatpush.bf16.msra.mxu0 0
        %1867 = vmatpush.bf16.msra.mxu0 0
        %1868 = vmatpush.bf16.msra.mxu0 0
        %1869 = vmatpush.bf16.msra.mxu0 0
        %1870 = vmatpush.bf16.msra.mxu0 0
        %1871 = vmatpush.bf16.msra.mxu0 %v1862
        %1872 = vmatmul.bf16.gmra.mxu0 %v1859
        %v1873 = vpop.f32.mrf.mxu0
        %v1874 = vadd.f32 0.0, %v1873
        %v1875 = vpop.f32.mrf.mxu0
        %1876 = vdwg.mxu0
        %v1878 = vunpack.c.l.b16 %v1790
        %v1879 = vpack.c.b16 %v1878, %v1878
        %1880 = vrot.lane.b32.xlu0 %v1879, 96
        %v1881 = vpop.permute.xlu0 %1880
        %v1883 = vsel %vm884, %v1852, 0
        %v1886 = vsel %vm957, %v1881, 0
        %1888 = vmatpush.bf16.msra.mxu0 0
        %1889 = vmatpush.bf16.msra.mxu0 0
        %1890 = vmatpush.bf16.msra.mxu0 0
        %1891 = vmatpush.bf16.msra.mxu0 0
        %1892 = vmatpush.bf16.msra.mxu0 0
        %1893 = vmatpush.bf16.msra.mxu0 0
        %1894 = vmatpush.bf16.msra.mxu0 0
        %1895 = vmatpush.bf16.msra.mxu0 %v1886
        %1896 = vmatmul.bf16.gmra.mxu0 %v1883
        %v1897 = vpop.f32.mrf.mxu0
        %v1898 = vadd.f32 0.0, %v1897
        %v1899 = vpop.f32.mrf.mxu0
        %1900 = vdwg.mxu0
        %v1902 = vunpack.c.l.b16 %v1787
        %v1903 = vpack.c.b16 %v1902, %v1902
        %1904 = vrot.lane.b32.xlu0 %v1903, 120
        %v1905 = vpop.permute.xlu0 %1904
        %1906 = vrot.lane.b32.xlu0 %v1855, 120
        %v1907 = vpop.permute.xlu0 %1906
        %v1909 = vsel %vm884, %v1905, 0
        %v1912 = vsel %vm884, %v1907, 0
        %1914 = vmatpush.bf16.xpose.msra.mxu0 0
        %1915 = vmatpush.bf16.xpose.msra.mxu0 0
        %1916 = vmatpush.bf16.xpose.msra.mxu0 0
        %1917 = vmatpush.bf16.xpose.msra.mxu0 0
        %1918 = vmatpush.bf16.xpose.msra.mxu0 0
        %1919 = vmatpush.bf16.xpose.msra.mxu0 0
        %1920 = vmatpush.bf16.xpose.msra.mxu0 0
        %1921 = vmatpush.bf16.xpose.msra.mxu0 %v1912
        %1922 = vmatmul.bf16.gmra.mxu0 %v1909
        %v1923 = vpop.f32.mrf.mxu0
        %v1924 = vadd.f32 0.0, %v1923
        %v1925 = vpop.f32.mrf.mxu0
        %1926 = vdwg.mxu0
        %v1928 = vunpack.c.l.b16 %v1788
        %v1929 = vpack.c.b16 %v1928, %v1928
        %1930 = vrot.lane.b32.xlu0 %v1929, 120
        %v1931 = vpop.permute.xlu0 %1930
        %1932 = vrot.lane.b32.xlu0 %v1879, 120
        %v1933 = vpop.permute.xlu0 %1932
        %v1935 = vsel %vm884, %v1931, 0
        %v1938 = vsel %vm884, %v1933, 0
        %1940 = vmatpush.bf16.xpose.msra.mxu0 0
        %1941 = vmatpush.bf16.xpose.msra.mxu0 0
        %1942 = vmatpush.bf16.xpose.msra.mxu0 0
        %1943 = vmatpush.bf16.xpose.msra.mxu0 0
        %1944 = vmatpush.bf16.xpose.msra.mxu0 0
        %1945 = vmatpush.bf16.xpose.msra.mxu0 0
        %1946 = vmatpush.bf16.xpose.msra.mxu0 0
        %1947 = vmatpush.bf16.xpose.msra.mxu0 %v1938
        %1948 = vmatmul.bf16.gmra.mxu0 %v1935
        %v1949 = vpop.f32.mrf.mxu0
        %v1950 = vadd.f32 0.0, %v1949
        %v1951 = vpop.f32.mrf.mxu0
        %1952 = vdwg.mxu0
        %v1953 = vsel %vm884, %v1924, -inf
        %1954 = vmax.xlane.f32.xlu0 %v1953
        %v1955 = vpop.xlane.xlu0 %1954
        %v1956 = vsel %vm884, %v1950, -inf
        %1957 = vmax.xlane.f32.xlu0 %v1956
        %v1958 = vpop.xlane.xlu0 %1957
        %v1959 = vsub.f32 %v1924, %v1955
        %v1960 = vsub.f32 %v1950, %v1958
        %v1961 = vmul.f32 %v1959, 1.442695
        %v1962 = vpow.pop %v1961
        %v1963 = vmul.f32 %v1960, 1.442695
        %v1964 = vpow.pop %v1963
        %v1965 = vsel %vm884, %v1962, 0.0
        %1966 = vadd.xlane.f32.xlu0 %v1965
        %v1967 = vpop.xlane.xlu0 %1966
        %v1968 = vsel %vm884, %v1964, 0.0
        %1969 = vadd.xlane.f32.xlu0 %v1968
        %v1970 = vpop.xlane.xlu0 %1969
        %v1971 = vrcp.pop %v1967
        %v1972 = vrcp.pop %v1970
        %v1973 = vmul.f32 %v1962, %v1971
        %v1974 = vmul.f32 %v1964, %v1972
        %v1975 = vpack.c.bf16 %v1973, %v1973
        %v1976 = vpack.c.bf16 %v1974, %v1974
        %1977 = vrot.lane.b32.xlu0 %v1855, 88
        %v1978 = vpop.permute.xlu0 %1977
        %v1980 = vsel %vm884, %v1975, 0
        %v1983 = vsel %vm957, %v1978, 0
        %1985 = vmatpush.bf16.msra.mxu0 0
        %1986 = vmatpush.bf16.msra.mxu0 0
        %1987 = vmatpush.bf16.msra.mxu0 0
        %1988 = vmatpush.bf16.msra.mxu0 0
        %1989 = vmatpush.bf16.msra.mxu0 0
        %1990 = vmatpush.bf16.msra.mxu0 0
        %1991 = vmatpush.bf16.msra.mxu0 0
        %1992 = vmatpush.bf16.msra.mxu0 %v1983
        %1993 = vmatmul.bf16.gmra.mxu0 %v1980
        %v1994 = vpop.f32.mrf.mxu0
        %v1995 = vadd.f32 0.0, %v1994
        %v1996 = vpop.f32.mrf.mxu0
        %1997 = vdwg.mxu0
        %1998 = vrot.lane.b32.xlu0 %v1879, 88
        %v1999 = vpop.permute.xlu0 %1998
        %v2001 = vsel %vm884, %v1976, 0
        %v2004 = vsel %vm957, %v1999, 0
        %2006 = vmatpush.bf16.msra.mxu0 0
        %2007 = vmatpush.bf16.msra.mxu0 0
        %2008 = vmatpush.bf16.msra.mxu0 0
        %2009 = vmatpush.bf16.msra.mxu0 0
        %2010 = vmatpush.bf16.msra.mxu0 0
        %2011 = vmatpush.bf16.msra.mxu0 0
        %2012 = vmatpush.bf16.msra.mxu0 0
        %2013 = vmatpush.bf16.msra.mxu0 %v2004
        %2014 = vmatmul.bf16.gmra.mxu0 %v2001
        %v2015 = vpop.f32.mrf.mxu0
        %v2016 = vadd.f32 0.0, %v2015
        %v2017 = vpop.f32.mrf.mxu0
        %2018 = vdwg.mxu0
        %2019 = vrot.lane.b32.xlu0 %v1903, 112
        %v2020 = vpop.permute.xlu0 %2019
        %2021 = vrot.lane.b32.xlu0 %v1855, 112
        %v2022 = vpop.permute.xlu0 %2021
        %v2024 = vsel %vm884, %v2020, 0
        %v2027 = vsel %vm884, %v2022, 0
        %2029 = vmatpush.bf16.xpose.msra.mxu0 0
        %2030 = vmatpush.bf16.xpose.msra.mxu0 0
        %2031 = vmatpush.bf16.xpose.msra.mxu0 0
        %2032 = vmatpush.bf16.xpose.msra.mxu0 0
        %2033 = vmatpush.bf16.xpose.msra.mxu0 0
        %2034 = vmatpush.bf16.xpose.msra.mxu0 0
        %2035 = vmatpush.bf16.xpose.msra.mxu0 0
        %2036 = vmatpush.bf16.xpose.msra.mxu0 %v2027
        %2037 = vmatmul.bf16.gmra.mxu0 %v2024
        %v2038 = vpop.f32.mrf.mxu0
        %v2039 = vadd.f32 0.0, %v2038
        %v2040 = vpop.f32.mrf.mxu0
        %2041 = vdwg.mxu0
        %2042 = vrot.lane.b32.xlu0 %v1929, 112
        %v2043 = vpop.permute.xlu0 %2042
        %2044 = vrot.lane.b32.xlu0 %v1879, 112
        %v2045 = vpop.permute.xlu0 %2044
        %v2047 = vsel %vm884, %v2043, 0
        %v2050 = vsel %vm884, %v2045, 0
        %2052 = vmatpush.bf16.xpose.msra.mxu0 0
        %2053 = vmatpush.bf16.xpose.msra.mxu0 0
        %2054 = vmatpush.bf16.xpose.msra.mxu0 0
        %2055 = vmatpush.bf16.xpose.msra.mxu0 0
        %2056 = vmatpush.bf16.xpose.msra.mxu0 0
        %2057 = vmatpush.bf16.xpose.msra.mxu0 0
        %2058 = vmatpush.bf16.xpose.msra.mxu0 0
        %2059 = vmatpush.bf16.xpose.msra.mxu0 %v2050
        %2060 = vmatmul.bf16.gmra.mxu0 %v2047
        %v2061 = vpop.f32.mrf.mxu0
        %v2062 = vadd.f32 0.0, %v2061
        %v2063 = vpop.f32.mrf.mxu0
        %2064 = vdwg.mxu0
        %v2065 = vsel %vm884, %v2039, -inf
        %2066 = vmax.xlane.f32.xlu0 %v2065
        %v2067 = vpop.xlane.xlu0 %2066
        %v2068 = vsel %vm884, %v2062, -inf
        %2069 = vmax.xlane.f32.xlu0 %v2068
        %v2070 = vpop.xlane.xlu0 %2069
        %v2071 = vsub.f32 %v2039, %v2067
        %v2072 = vsub.f32 %v2062, %v2070
        %v2073 = vmul.f32 %v2071, 1.442695
        %v2074 = vpow.pop %v2073
        %v2075 = vmul.f32 %v2072, 1.442695
        %v2076 = vpow.pop %v2075
        %v2077 = vsel %vm884, %v2074, 0.0
        %2078 = vadd.xlane.f32.xlu0 %v2077
        %v2079 = vpop.xlane.xlu0 %2078
        %v2080 = vsel %vm884, %v2076, 0.0
        %2081 = vadd.xlane.f32.xlu0 %v2080
        %v2082 = vpop.xlane.xlu0 %2081
        %v2083 = vrcp.pop %v2079
        %v2084 = vrcp.pop %v2082
        %v2085 = vmul.f32 %v2074, %v2083
        %v2086 = vmul.f32 %v2076, %v2084
        %v2087 = vpack.c.bf16 %v2085, %v2085
        %v2088 = vpack.c.bf16 %v2086, %v2086
        %2089 = vrot.lane.b32.xlu0 %v1855, 80
        %v2090 = vpop.permute.xlu0 %2089
        %v2092 = vsel %vm884, %v2087, 0
        %v2095 = vsel %vm957, %v2090, 0
        %2097 = vmatpush.bf16.msra.mxu0 0
        %2098 = vmatpush.bf16.msra.mxu0 0
        %2099 = vmatpush.bf16.msra.mxu0 0
        %2100 = vmatpush.bf16.msra.mxu0 0
        %2101 = vmatpush.bf16.msra.mxu0 0
        %2102 = vmatpush.bf16.msra.mxu0 0
        %2103 = vmatpush.bf16.msra.mxu0 0
        %2104 = vmatpush.bf16.msra.mxu0 %v2095
        %2105 = vmatmul.bf16.gmra.mxu0 %v2092
        %v2106 = vpop.f32.mrf.mxu0
        %v2107 = vadd.f32 0.0, %v2106
        %v2108 = vpop.f32.mrf.mxu0
        %2109 = vdwg.mxu0
        %2110 = vrot.lane.b32.xlu0 %v1879, 80
        %v2111 = vpop.permute.xlu0 %2110
        %v2113 = vsel %vm884, %v2088, 0
        %v2116 = vsel %vm957, %v2111, 0
        %2118 = vmatpush.bf16.msra.mxu0 0
        %2119 = vmatpush.bf16.msra.mxu0 0
        %2120 = vmatpush.bf16.msra.mxu0 0
        %2121 = vmatpush.bf16.msra.mxu0 0
        %2122 = vmatpush.bf16.msra.mxu0 0
        %2123 = vmatpush.bf16.msra.mxu0 0
        %2124 = vmatpush.bf16.msra.mxu0 0
        %2125 = vmatpush.bf16.msra.mxu0 %v2116
        %2126 = vmatmul.bf16.gmra.mxu0 %v2113
        %v2127 = vpop.f32.mrf.mxu0
        %v2128 = vadd.f32 0.0, %v2127
        %v2129 = vpop.f32.mrf.mxu0
        %2130 = vdwg.mxu0
        %2131 = vrot.lane.b32.xlu0 %v1903, 104
        %v2132 = vpop.permute.xlu0 %2131
        %2133 = vrot.lane.b32.xlu0 %v1855, 104
        %v2134 = vpop.permute.xlu0 %2133
        %v2136 = vsel %vm884, %v2132, 0
        %v2139 = vsel %vm884, %v2134, 0
        %2141 = vmatpush.bf16.xpose.msra.mxu0 0
        %2142 = vmatpush.bf16.xpose.msra.mxu0 0
        %2143 = vmatpush.bf16.xpose.msra.mxu0 0
        %2144 = vmatpush.bf16.xpose.msra.mxu0 0
        %2145 = vmatpush.bf16.xpose.msra.mxu0 0
        %2146 = vmatpush.bf16.xpose.msra.mxu0 0
        %2147 = vmatpush.bf16.xpose.msra.mxu0 0
        %2148 = vmatpush.bf16.xpose.msra.mxu0 %v2139
        %2149 = vmatmul.bf16.gmra.mxu0 %v2136
        %v2150 = vpop.f32.mrf.mxu0
        %v2151 = vadd.f32 0.0, %v2150
        %v2152 = vpop.f32.mrf.mxu0
        %2153 = vdwg.mxu0
        %2154 = vrot.lane.b32.xlu0 %v1929, 104
        %v2155 = vpop.permute.xlu0 %2154
        %2156 = vrot.lane.b32.xlu0 %v1879, 104
        %v2157 = vpop.permute.xlu0 %2156
        %v2159 = vsel %vm884, %v2155, 0
        %v2162 = vsel %vm884, %v2157, 0
        %2164 = vmatpush.bf16.xpose.msra.mxu0 0
        %2165 = vmatpush.bf16.xpose.msra.mxu0 0
        %2166 = vmatpush.bf16.xpose.msra.mxu0 0
        %2167 = vmatpush.bf16.xpose.msra.mxu0 0
        %2168 = vmatpush.bf16.xpose.msra.mxu0 0
        %2169 = vmatpush.bf16.xpose.msra.mxu0 0
        %2170 = vmatpush.bf16.xpose.msra.mxu0 0
        %2171 = vmatpush.bf16.xpose.msra.mxu0 %v2162
        %2172 = vmatmul.bf16.gmra.mxu0 %v2159
        %v2173 = vpop.f32.mrf.mxu0
        %v2174 = vadd.f32 0.0, %v2173
        %v2175 = vpop.f32.mrf.mxu0
        %2176 = vdwg.mxu0
        %v2177 = vsel %vm884, %v2151, -inf
        %2178 = vmax.xlane.f32.xlu0 %v2177
        %v2179 = vpop.xlane.xlu0 %2178
        %v2180 = vsel %vm884, %v2174, -inf
        %2181 = vmax.xlane.f32.xlu0 %v2180
        %v2182 = vpop.xlane.xlu0 %2181
        %v2183 = vsub.f32 %v2151, %v2179
        %v2184 = vsub.f32 %v2174, %v2182
        %v2185 = vmul.f32 %v2183, 1.442695
        %v2186 = vpow.pop %v2185
        %v2187 = vmul.f32 %v2184, 1.442695
        %v2188 = vpow.pop %v2187
        %v2189 = vsel %vm884, %v2186, 0.0
        %2190 = vadd.xlane.f32.xlu0 %v2189
        %v2191 = vpop.xlane.xlu0 %2190
        %v2192 = vsel %vm884, %v2188, 0.0
        %2193 = vadd.xlane.f32.xlu0 %v2192
        %v2194 = vpop.xlane.xlu0 %2193
        %v2195 = vrcp.pop %v2191
        %v2196 = vrcp.pop %v2194
        %v2197 = vmul.f32 %v2186, %v2195
        %v2198 = vmul.f32 %v2188, %v2196
        %v2199 = vpack.c.bf16 %v2197, %v2197
        %v2200 = vpack.c.bf16 %v2198, %v2198
        %2201 = vrot.lane.b32.xlu0 %v1855, 72
        %v2202 = vpop.permute.xlu0 %2201
        %v2204 = vsel %vm884, %v2199, 0
        %v2207 = vsel %vm957, %v2202, 0
        %2209 = vmatpush.bf16.msra.mxu0 0
        %2210 = vmatpush.bf16.msra.mxu0 0
        %2211 = vmatpush.bf16.msra.mxu0 0
        %2212 = vmatpush.bf16.msra.mxu0 0
        %2213 = vmatpush.bf16.msra.mxu0 0
        %2214 = vmatpush.bf16.msra.mxu0 0
        %2215 = vmatpush.bf16.msra.mxu0 0
        %2216 = vmatpush.bf16.msra.mxu0 %v2207
        %2217 = vmatmul.bf16.gmra.mxu0 %v2204
        %v2218 = vpop.f32.mrf.mxu0
        %v2219 = vadd.f32 0.0, %v2218
        %v2220 = vpop.f32.mrf.mxu0
        %2221 = vdwg.mxu0
        %2222 = vrot.lane.b32.xlu0 %v1879, 72
        %v2223 = vpop.permute.xlu0 %2222
        %v2225 = vsel %vm884, %v2200, 0
        %v2228 = vsel %vm957, %v2223, 0
        %2230 = vmatpush.bf16.msra.mxu0 0
        %2231 = vmatpush.bf16.msra.mxu0 0
        %2232 = vmatpush.bf16.msra.mxu0 0
        %2233 = vmatpush.bf16.msra.mxu0 0
        %2234 = vmatpush.bf16.msra.mxu0 0
        %2235 = vmatpush.bf16.msra.mxu0 0
        %2236 = vmatpush.bf16.msra.mxu0 0
        %2237 = vmatpush.bf16.msra.mxu0 %v2228
        %2238 = vmatmul.bf16.gmra.mxu0 %v2225
        %v2239 = vpop.f32.mrf.mxu0
        %v2240 = vadd.f32 0.0, %v2239
        %v2241 = vpop.f32.mrf.mxu0
        %2242 = vdwg.mxu0
        %2245 = vrot.lane.b32.xlu0 %v1995, 8
        %v2246 = vpop.permute.xlu0 %2245
        %2247 = vrot.lane.b32.xlu0 %v2016, 8
        %v2248 = vpop.permute.xlu0 %2247
        %2253 = vrot.lane.b32.xlu0 %v2107, 16
        %v2254 = vpop.permute.xlu0 %2253
        %2255 = vrot.lane.b32.xlu0 %v2128, 16
        %v2256 = vpop.permute.xlu0 %2255
        %2261 = vrot.lane.b32.xlu0 %v2219, 24
        %v2262 = vpop.permute.xlu0 %2261
        %2263 = vrot.lane.b32.xlu0 %v2240, 24
        %v2264 = vpop.permute.xlu0 %2263
        %v2267 = vsel %vm884, %v1874, %v2246
        %v2268 = vsel %vm884, %v1898, %v2248
        %v2269 = vsel %vm1357, %v2267, %v2254
        %v2270 = vsel %vm1357, %v2268, %v2256
        %v2271 = vsel %vm1360, %v2269, %v2262
        %v2272 = vsel %vm1360, %v2270, %v2264
        %v2273 = vpack.c.bf16 %v2272, %v2271
        %v2274 = vperm.slane %v775, 2
        %v2279 = vunpack.c.l.b16 %v1783
        %v2280 = vunpack.c.l.b16 %v1784
        %v2281 = vunpack.c.l.b16 %v1785
        %v2282 = vunpack.c.l.b16 %v1786
        %v2283 = vpack.c.b16 %v2280, %v2279
        %v2284 = vpack.c.b16 %v2282, %v2281
        %v2288 = vsel %vm781, %v2273, 0
        %2290 = vmatpush.bf16.msra.mxu0 0
        %2291 = vmatpush.bf16.msra.mxu0 0
        %2292 = vmatpush.bf16.msra.mxu0 0
        %2293 = vmatpush.bf16.msra.mxu0 0
        %2294 = vmatpush.bf16.msra.mxu0 0
        %2295 = vmatpush.bf16.msra.mxu0 0
        %2296 = vmatpush.bf16.msra.mxu0 %v2284
        %2297 = vmatpush.bf16.msra.mxu0 %v2283
        %2298 = vmatmul.bf16.gmra.mxu0 %v2288
        %v2299 = vpop.f32.mrf.mxu0
        %v2300 = vadd.f32 %v2274, %v2299
        %v2301 = vpop.f32.mrf.mxu0
        %v2302 = vadd.f32 %v2274, %v2301
        %2303 = vdwg.mxu0
        %v2304 = vadd.f32 %v777, %v2300
        %v2305 = vadd.f32 %v778, %v2302
        %v2306 = vld [vmem:[%s750] sm:$0xf]
        %v2307 = vld [vmem:[%s750 + $0x4] sm:$0xf]
        %v2308 = vld [vmem:[%s750 + $0x8] sm:$0xf]
        %v2309 = vld [vmem:[%s750 + $0xc] sm:$0xf]
        %v2310 = vld [vmem:[%s755] sm:$0xf]
        %v2311 = vld [vmem:[%s755 + $0x4] sm:$0xf]
        %v2312 = vld [vmem:[%s755 + $0x8] sm:$0xf]
        %v2313 = vld [vmem:[%s755 + $0xc] sm:$0xf]
        %v2314 = vld [vmem:[%s755 + $0x10] sm:$0xf]
        %v2315 = vld [vmem:[%s755 + $0x14] sm:$0xf]
        %v2316 = vld [vmem:[%s755 + $0x18] sm:$0xf]
        %v2317 = vld [vmem:[%s755 + $0x1c] sm:$0xf]
        %v2318 = vsel %vm781, %v2304, 0.0
        %2319 = vadd.xlane.f32.xlu0 %v2318
        %v2320 = vpop.xlane.xlu0 %2319
        %v2321 = vsel %vm781, %v2305, 0.0
        %2322 = vadd.xlane.f32.xlu0 %v2321
        %v2323 = vpop.xlane.xlu0 %2322
        %v2324 = vmul.f32 %v2320, %v794
        %v2325 = vmul.f32 %v2323, %v794
        %v2326 = vsub.f32 %v2304, %v2324
        %v2327 = vsub.f32 %v2305, %v2325
        %v2328 = vmul.f32 %v2326, %v2326
        %v2329 = vmul.f32 %v2327, %v2327
        %v2330 = vsel %vm781, %v2328, 0.0
        %2331 = vadd.xlane.f32.xlu0 %v2330
        %v2332 = vpop.xlane.xlu0 %2331
        %v2333 = vsel %vm781, %v2329, 0.0
        %2334 = vadd.xlane.f32.xlu0 %v2333
        %v2335 = vpop.xlane.xlu0 %2334
        %v2336 = vmul.f32 %v2332, %v794
        %v2337 = vmul.f32 %v2335, %v794
        %v2338 = vadd.f32 %v2336, 1e-05
        %v2339 = vadd.f32 %v2337, 1e-05
        %v2340 = vrsqrt.pop %v2338
        %v2341 = vmul.f32 %v2340, %v2338
        %v2342 = vmul.f32 %v2341, %v2340
        %v2343 = vmul.f32 0.5, %v2342
        %v2344 = vsub.f32 1.5, %v2343
        %v2345 = vmul.f32 %v2340, %v2344
        %vm2346 = vweird.f32 %v2338
        %vm2347 = vweird.f32 %v2340
        %vm2348 = vmor %vm2346, %vm2347
        %v2349 = vsel %vm2348, %v2340, %v2345
        %v2350 = vrsqrt.pop %v2339
        %v2351 = vmul.f32 %v2350, %v2339
        %v2352 = vmul.f32 %v2351, %v2350
        %v2353 = vmul.f32 0.5, %v2352
        %v2354 = vsub.f32 1.5, %v2353
        %v2355 = vmul.f32 %v2350, %v2354
        %vm2356 = vweird.f32 %v2339
        %vm2357 = vweird.f32 %v2350
        %vm2358 = vmor %vm2356, %vm2357
        %v2359 = vsel %vm2358, %v2350, %v2355
        %v2360 = vmul.f32 %v2326, %v2349
        %v2361 = vmul.f32 %v2327, %v2359
        %v2362 = vperm.slane %v775, 3
        %v2363 = vmul.f32 %v2360, %v2362
        %v2364 = vmul.f32 %v2361, %v2362
        %v2365 = vperm.slane %v775, 4
        %v2366 = vadd.f32 %v2363, %v2365
        %v2367 = vadd.f32 %v2364, %v2365
        %v2368 = vpack.c.bf16 %v2367, %v2366
        %v2369 = vperm.slane %v776, 1
        %v2374 = vunpack.c.l.b16 %v2306
        %v2375 = vunpack.c.l.b16 %v2307
        %v2376 = vunpack.c.l.b16 %v2308
        %v2377 = vunpack.c.l.b16 %v2309
        %v2378 = vpack.c.b16 %v2375, %v2374
        %v2379 = vpack.c.b16 %v2377, %v2376
        %v2383 = vsel %vm781, %v2368, 0
        %2385 = vmatpush.bf16.msra.mxu0 0
        %2386 = vmatpush.bf16.msra.mxu0 0
        %2387 = vmatpush.bf16.msra.mxu0 0
        %2388 = vmatpush.bf16.msra.mxu0 0
        %2389 = vmatpush.bf16.msra.mxu0 0
        %2390 = vmatpush.bf16.msra.mxu0 0
        %2391 = vmatpush.bf16.msra.mxu0 %v2379
        %2392 = vmatpush.bf16.msra.mxu0 %v2378
        %2393 = vmatmul.bf16.gmra.mxu0 %v2383
        %v2394 = vpop.f32.mrf.mxu0
        %v2395 = vadd.f32 %v2369, %v2394
        %v2396 = vpop.f32.mrf.mxu0
        %v2397 = vadd.f32 %v2369, %v2396
        %2398 = vdwg.mxu0
        %v2399 = vmul.f32 %v2395, 0.5
        %v2400 = vmul.f32 %v2397, 0.5
        %v2401 = vmul.f32 %v2395, 0.70710677
        %v2402 = vmul.f32 %v2397, 0.70710677
        %v2403 = vand.u32 2147483647, %v2401
        %v2404 = vand.u32 2147483647, %v2402
        %v2405 = vmul.f32 %v2403, 0.3275911
        %v2406 = vmul.f32 %v2404, 0.3275911
        %v2407 = vadd.f32 %v2405, 1.0
        %v2408 = vadd.f32 %v2406, 1.0
        %v2409 = vrcp.pop %v2407
        %v2410 = vmul.f32 %v2407, %v2409
        %v2411 = vsub.f32 1.0, %v2410
        %v2412 = vmul.f32 %v2409, %v2411
        %v2413 = vadd.f32 %v2409, %v2412
        %vm2414 = vweird.f32 %v2407
        %vm2415 = vweird.f32 %v2409
        %vm2416 = vmor %vm2414, %vm2415
        %v2417 = vsel %vm2416, %v2409, %v2413
        %v2418 = vand.u32 2147483647, %v2407
        %vm2419 = vcmp.eq.f32.partialorder %v2418, 8.507059e+37
        %v2420 = vand.u32 %v2407, 2147483648
        %v2421 = vor.u32 1.1754944e-38, %v2420
        %v2422 = vsel %vm2419, %v2421, %v2417
        %v2423 = vmul.f32 1.0, %v2422
        %v2424 = vrcp.pop %v2408
        %v2425 = vmul.f32 %v2408, %v2424
        %v2426 = vsub.f32 1.0, %v2425
        %v2427 = vmul.f32 %v2424, %v2426
        %v2428 = vadd.f32 %v2424, %v2427
        %vm2429 = vweird.f32 %v2408
        %vm2430 = vweird.f32 %v2424
        %vm2431 = vmor %vm2429, %vm2430
        %v2432 = vsel %vm2431, %v2424, %v2428
        %v2433 = vand.u32 2147483647, %v2408
        %vm2434 = vcmp.eq.f32.partialorder %v2433, 8.507059e+37
        %v2435 = vand.u32 %v2408, 2147483648
        %v2436 = vor.u32 1.1754944e-38, %v2435
        %v2437 = vsel %vm2434, %v2436, %v2432
        %v2438 = vmul.f32 1.0, %v2437
        %v2439 = vmul.f32 %v2423, 1.0614054
        %v2440 = vmul.f32 %v2438, 1.0614054
        %v2441 = vadd.f32 %v2439, -1.4531521
        %v2442 = vadd.f32 %v2440, -1.4531521
        %v2443 = vmul.f32 %v2423, %v2441
        %v2444 = vmul.f32 %v2438, %v2442
        %v2445 = vadd.f32 %v2443, 1.4214138
        %v2446 = vadd.f32 %v2444, 1.4214138
        %v2447 = vmul.f32 %v2423, %v2445
        %v2448 = vmul.f32 %v2438, %v2446
        %v2449 = vadd.f32 %v2447, -0.28449672
        %v2450 = vadd.f32 %v2448, -0.28449672
        %v2451 = vmul.f32 %v2423, %v2449
        %v2452 = vmul.f32 %v2438, %v2450
        %v2453 = vadd.f32 %v2451, 0.2548296
        %v2454 = vadd.f32 %v2452, 0.2548296
        %v2455 = vmul.f32 %v2423, %v2453
        %v2456 = vmul.f32 %v2438, %v2454
        %v2457 = vmul.f32 %v2403, %v2403
        %v2458 = vmul.f32 %v2404, %v2404
        %v2459 = vsub.f32 0.0, %v2457
        %v2460 = vsub.f32 0.0, %v2458
        %v2461 = vmul.f32 %v2459, 1.442695
        %v2462 = vpow.pop %v2461
        %v2463 = vmul.f32 %v2460, 1.442695
        %v2464 = vpow.pop %v2463
        %v2465 = vmul.f32 %v2455, %v2462
        %v2466 = vmul.f32 %v2456, %v2464
        %v2467 = vsub.f32 1.0, %v2465
        %v2468 = vsub.f32 1.0, %v2466
        %vm2469 = vcmp.lt.f32.partialorder %v2401, 0.0
        %vm2470 = vcmp.lt.f32.partialorder %v2402, 0.0
        %v2471 = vsub.f32 0.0, %v2467
        %v2472 = vsub.f32 0.0, %v2468
        %v2473 = vsel %vm2469, %v2471, %v2467
        %v2474 = vsel %vm2470, %v2472, %v2468
        %v2475 = vadd.f32 %v2473, 1.0
        %v2476 = vadd.f32 %v2474, 1.0
        %v2477 = vmul.f32 %v2399, %v2475
        %v2478 = vmul.f32 %v2400, %v2476
        %v2479 = vpack.c.bf16 %v2478, %v2477
        %v2480 = vperm.slane %v775, 5
        %v2489 = vunpack.c.l.b16 %v2310
        %v2490 = vunpack.c.l.b16 %v2311
        %v2491 = vunpack.c.l.b16 %v2312
        %v2492 = vunpack.c.l.b16 %v2313
        %v2493 = vunpack.c.l.b16 %v2314
        %v2494 = vunpack.c.l.b16 %v2315
        %v2495 = vunpack.c.l.b16 %v2316
        %v2496 = vunpack.c.l.b16 %v2317
        %v2497 = vpack.c.b16 %v2490, %v2489
        %v2498 = vpack.c.b16 %v2492, %v2491
        %v2499 = vpack.c.b16 %v2494, %v2493
        %v2500 = vpack.c.b16 %v2496, %v2495
        %v2506 = vsel %vm1595, %v2479, 0
        %2508 = vmatpush.bf16.msra.mxu0 0
        %2509 = vmatpush.bf16.msra.mxu0 0
        %2510 = vmatpush.bf16.msra.mxu0 0
        %2511 = vmatpush.bf16.msra.mxu0 0
        %2512 = vmatpush.bf16.msra.mxu0 %v2500
        %2513 = vmatpush.bf16.msra.mxu0 %v2499
        %2514 = vmatpush.bf16.msra.mxu0 %v2498
        %2515 = vmatpush.bf16.msra.mxu0 %v2497
        %2516 = vmatmul.bf16.gmra.mxu0 %v2506
        %v2517 = vpop.f32.mrf.mxu0
        %v2518 = vadd.f32 %v2480, %v2517
        %v2519 = vpop.f32.mrf.mxu0
        %v2520 = vadd.f32 %v2480, %v2519
        %2521 = vdwg.mxu0
        %v2522 = vadd.f32 %v2304, %v2518
        %v2523 = vadd.f32 %v2305, %v2520
        %2524 = vst.msk [vmem:[#allocation2] sm:$0xff] %vm781, %v2522
        %2525 = vst.msk [vmem:[#allocation2 + $0x8] sm:$0xff] %vm781, %v2523
        %2526 = vst.msk [vmem:[#allocation3] sm:$0xff] %vm781, %v1613
        %2527 = vst.msk [vmem:[#allocation3 + $0x8] sm:$0xff] %vm781, %v1614
        %p2528 = scmp.eq.s32.totalorder %s36, 1
        // Predicated region
        $region97: #{_lambda_.1} parent=75 // pred_check
          %p2529 = pneg %p2528
        $region98: #{_lambda_.1} parent=75 // pred_check_branch
          %2531 = sbr.rel (%p2529) target = $region100
        $region99: #{_lambda_.1} parent=75 // pred_region
          %2532 = vst.msk [vmem:[#allocation12] sm:$0xff] %vm781, %v2522
          %2533 = vst.msk [vmem:[#allocation12 + $0x8] sm:$0xff] %vm781, %v2523
        $region100: #{_lambda_.1} parent=75 // pred_fallthru
          _
        // Predicated region
        $region101: #{_lambda_.1} parent=75 // pred_check
          %p2534 = pneg %p420
        $region102: #{_lambda_.1} parent=75 // pred_check_branch
          %2536 = sbr.rel (%p2534) target = $region104
        $region103: #{_lambda_.1} parent=75 // pred_region
          %s2537 = smul.u32 2, %s35
          %2539 = vsyncadd [#allocation6], 0
          %s2540 = smul.addr %s2537, 8
          %s2541 = scalar_lea.hbm %s14, %s2540
          %s2542 = sshll.u32 [#allocation12], 4
          %s2543 = int_to_ptr.vmem [resolvable:$true] %s2542
          %s2544 = sshll.u32 %s2541, 4
          %s2545 = int_to_ptr.hbm [resolvable:$true] %s2544
          %2550 = dma.vmem_to_hbm [thread:$0]  %s2543, 256, %s2545, [#allocation6], 128, 128, 8
        $region104: #{_lambda_.1} parent=75 // pred_fallthru
          _
        // Predicated region
        $region105: #{_lambda_.1} parent=75 // pred_check
          %p2551 = pneg %p420
        $region106: #{_lambda_.1} parent=75 // pred_check_branch
          %2553 = sbr.rel (%p2551) target = $region108
        $region107: #{_lambda_.1} parent=75 // pred_region
          %2555 = dma.done [#allocation6], 256
        $region108: #{_lambda_.1} parent=75 // pred_fallthru
          _
      $region76: #{_lambda_.1} parent=5 // pred_fallthru
        _
      %p2556 = scmp.le.s32.totalorder 2, %s26
      // Predicated region
      $region109: #{_lambda_.1} parent=5 // pred_check
        %p2557 = pneg %p2556
      $region110: #{_lambda_.1} parent=5 // pred_check_branch
        %2559 = sbr.rel (%p2557) target = $region112
      $region111: #{_lambda_.1} parent=5 // pred_region
        %s2560 = ssub.s32 %s26, 2
      $region112: #{_lambda_.1} parent=5 // pred_fallthru
        _
    $region6: #{_lambda_.1} parent=1 // loop_footer
      %s30 = sadd.s32 1, %s26
    $region7: #{_lambda_.1} parent=1 // loop_footer_branch
      %25 = sbr.rel target = $region3
    $region8: #{_lambda_.1} parent=1 // loop_exit
      _
    %2561 = vsyncpa [#allocation5], 1
    %s2562 = scalar_lea.sflag [#allocation5], 1
    %2563 = vsyncpa %s2562, 1
    %2564 = vsyncpa [#allocation8], 1
    %2565 = vsyncpa [#allocation11], 1
    %s2566 = scalar_lea.sflag [#allocation11], 1
    %2567 = vsyncpa %s2566, 1
    %2568 = vsyncpa [#allocation6], 1
    %s2569 = scalar_lea.sflag [#allocation6], 1
    %2570 = vsyncpa %s2569, 1

</llo_original>
